<compile_context>
chip_gen: v5e
topology: v5e:2x2
jax: 0.10.0
libtpu: 0.0.40
codegen_flags: <defaults>
</compile_context>

<pallas_src>
import functools
import math

import jax
import jax.numpy as jnp
from jax.experimental import pallas as pl
from jax.experimental.pallas import tpu as pltpu


def _layer_norm(x, gamma, beta, eps=1e-5):
    mean = jnp.mean(x, axis=-1, keepdims=True)
    var = jnp.mean(jnp.square(x - mean), axis=-1, keepdims=True)
    return (x - mean) * jax.lax.rsqrt(var + eps) * gamma + beta


def transformer_kernel(*refs, heads, head_dim, seq_len, depth, norm_enable, use_bf16):
    if norm_enable:
        (x_ref, wqkv_ref, bqkv_ref, wo_ref, bo_ref, w1_ref, b1_ref,
         w2_ref, b2_ref, ln_ref, lnf_ref, o_ref) = refs
    else:
        (x_ref, wqkv_ref, bqkv_ref, wo_ref, bo_ref, w1_ref, b1_ref,
         w2_ref, b2_ref, o_ref) = refs
        ln_ref = lnf_ref = None

    dim = heads * head_dim
    rows = x_ref.shape[0]                    # tb * seq_len
    tb = rows // seq_len
    mm_dtype = jnp.bfloat16 if use_bf16 else jnp.float32

    def mm(a, w):
        return jnp.dot(a.astype(mm_dtype), w.astype(mm_dtype),
                       preferred_element_type=jnp.float32)

    x = x_ref[...].astype(jnp.float32)       # (rows, dim); residual stream stays f32

    # Depth collapsed into the kernel (static unroll, depth is 1-2 in MobileViT);
    # all stacked weights are resident in VMEM (constant-index full blocks).
    for l in range(depth):
        wqkv_l, bqkv_l = wqkv_ref[l], bqkv_ref[l]
        wo_l, bo_l = wo_ref[l], bo_ref[l]
        w1_l, b1_l = w1_ref[l], b1_ref[l]
        w2_l, b2_l = w2_ref[l], b2_ref[l]

        # ---------------- Attention: x = attn(ln?(x)) + x ----------------
        if norm_enable:
            ln = ln_ref[l]                                   # (4, dim)
            attn_in = _layer_norm(x, ln[0:1, :], ln[1:2, :])
        else:
            attn_in = x

        # Attention scale is pre-folded into the q columns of wqkv/bqkv.
        qkv = mm(attn_in, wqkv_l) + bqkv_l                   # (rows, 3*dim), f32
        q3 = qkv[:, :dim].reshape(tb, seq_len, dim)
        k3 = qkv[:, dim:2 * dim].reshape(tb, seq_len, dim)
        v3 = qkv[:, 2 * dim:].reshape(tb, seq_len, dim)

        # Per-head TB-batched attention; output projection folded into the head loop
        # (sum of per-head (rows, hd) @ wo_rows) so no lane-axis concat materialises.
        acc = None
        for h in range(heads):
            sl = slice(h * head_dim, (h + 1) * head_dim)
            qh = q3[..., sl].astype(mm_dtype)
            kh = k3[..., sl].astype(mm_dtype)
            vh = v3[..., sl].astype(mm_dtype)
            s = jnp.einsum('bqd,bkd->bqk', qh, kh,
                           preferred_element_type=jnp.float32)    # (tb, n, n)
            s = s - jnp.max(s, axis=-1, keepdims=True)
            e = jnp.exp(s)
            # approx reciprocal -> EUP slot; inference-grade accuracy (see tolerance).
            p = e * pl.reciprocal(jnp.sum(e, axis=-1, keepdims=True), approx=True)
            oh = jnp.einsum('bqk,bkd->bqd', p.astype(mm_dtype), vh,
                            preferred_element_type=jnp.float32)   # (tb, n, hd)
            proj = mm(oh.reshape(rows, head_dim), wo_l[sl, :])    # (rows, dim)
            acc = proj if acc is None else acc + proj
        x = x + acc + bo_l

        # ---------------- FeedForward: x = ff(ln?(x)) + x ----------------
        if norm_enable:
            ff_in = _layer_norm(x, ln[2:3, :], ln[3:4, :])
        else:
            ff_in = x
        h1 = mm(ff_in, w1_l) + b1_l
        h1 = h1 * jax.nn.sigmoid(h1)                         # SiLU
        x = x + (mm(h1, w2_l) + b2_l)

    if norm_enable:
        lnf = lnf_ref[0]                                     # (2, dim)
        x = _layer_norm(x, lnf[0:1, :], lnf[1:2, :])
    o_ref[...] = x.astype(o_ref.dtype)


def run_transformer(x_flat, params, *, heads, norm_enable=False, use_bf16=True,
                    tile_b=512, out_dtype=jnp.float32):
    """x_flat: (B, n, dim) float32.  params: stacked per-layer f32 weights."""
    B, n, dim = x_flat.shape
    assert dim % heads == 0
    head_dim = dim // heads
    depth = params["wqkv"].shape[0]
    scale = float(head_dim) ** -0.5

    # One-time parameter prep: fold attention scale into the q-third of the qkv
    # projection; pre-cast weight matrices to bf16 for the MXU (f32 accumulation).
    w_dtype = jnp.bfloat16 if use_bf16 else jnp.float32
    wqkv = params["wqkv"].at[:, :, :dim].multiply(scale).astype(w_dtype)
    bqkv = params["bqkv"].at[:, :, :dim].multiply(scale)     # biases stay f32
    wo = params["wo"].astype(w_dtype)
    w1 = params["w1"].astype(w_dtype)
    w2 = params["w2"].astype(w_dtype)

    # Batch tile: TB sequences -> TB*n matmul rows.  Prefer >=2 tiles so the
    # "parallel" axis can shard across megacore / v7x's two TensorCores, and keep
    # tb*n a multiple of 8 (sublane) for the 2-D block shape.
    tb = max(1, min(tile_b, B))
    if B > 1 and pl.cdiv(B, tb) < 2:
        tb = pl.cdiv(B, 2)
    sub = 8 // math.gcd(n, 8)
    tb = pl.cdiv(tb, sub) * sub
    num_tiles = pl.cdiv(B, tb)
    b_pad = num_tiles * tb

    # Zero-padded sequences hit LayerNorm with var=0 -> output = beta (finite) and
    # are sliced off below; do not "fix" this by removing the eps.
    if b_pad != B:
        x_flat = jnp.pad(x_flat, ((0, b_pad - B), (0, 0), (0, 0)))
    x2d = x_flat.reshape(b_pad * n, dim).astype(jnp.float32)
    rows_tile = tb * n

    def resident(arr):               # whole stacked tensor resident across all tiles
        nd = arr.ndim
        return pl.BlockSpec(tuple(arr.shape), lambda i, _nd=nd: (0,) * _nd)

    kernel = functools.partial(
        transformer_kernel, heads=heads, head_dim=head_dim, seq_len=n,
        depth=depth, norm_enable=norm_enable, use_bf16=use_bf16)

    args = [x2d, wqkv, bqkv, wo, params["bo"], w1, params["b1"], w2, params["b2"]]
    in_specs = [pl.BlockSpec((rows_tile, dim), lambda i: (i, 0))]
    in_specs += [resident(a) for a in args[1:]]
    if norm_enable:
        args += [params["ln"], params["ln_out"]]
        in_specs += [resident(params["ln"]), resident(params["ln_out"])]

    out = pl.pallas_call(
        kernel,
        out_shape=jax.ShapeDtypeStruct((b_pad * n, dim), out_dtype),
        grid_spec=pltpu.PrefetchScalarGridSpec(
            num_scalar_prefetch=0,
            grid=(num_tiles,),
            in_specs=in_specs,
            out_specs=pl.BlockSpec((rows_tile, dim), lambda i: (i, 0)),
        ),
        compiler_params=pltpu.CompilerParams(
            dimension_semantics=("parallel",),
            # 48 MiB: inside v7x's 64 MiB VMEM with headroom, far above actual need
            # (tb<=1024 tiles + <3 MiB resident weight stack) on v5e/v6e too.
            vmem_limit_bytes=48 * 1024 * 1024,
        ),
    )(*args)

    return out[:B * n].reshape(B, n, dim)


def transformer_forward(x, params, *, heads, norm_enable=False, use_bf16=True,
                        tile_b=512, out_dtype=jnp.float32):
    # x: (b, p, n, dim) — the layout the PyTorch Transformer.forward receives.
    b, p, n, dim = x.shape
    x_flat = x.reshape(b * p, n, dim).astype(jnp.float32)
    out = run_transformer(x_flat, params, heads=heads, norm_enable=norm_enable,
                          use_bf16=use_bf16, tile_b=tile_b, out_dtype=out_dtype)
    return out.reshape(b, p, n, dim)


def init_params(key, *, depth, dim, mlp_dim):
    """Stacked per-layer weights, pre-transposed to (in, out); init matches PyTorch."""
    wqkv, wo, w1, w2 = [], [], [], []
    for _ in range(depth):
        key, k1, k2, k3, k4 = jax.random.split(key, 5)
        wqkv.append(((2.0 / (4 * dim)) ** 0.5) *          # xavier_normal (dim+3dim)
                    jax.random.normal(k1, (dim, 3 * dim), jnp.float32))
        wo.append(((2.0 / (2 * dim)) ** 0.5) *            # xavier_normal
                  jax.random.normal(k2, (dim, dim), jnp.float32))
        w1.append(((2.0 / dim) ** 0.5) *                  # kaiming_normal fan_in relu
                  jax.random.normal(k3, (dim, mlp_dim), jnp.float32))
        w2.append(((2.0 / (dim + mlp_dim)) ** 0.5) *      # xavier_normal
                  jax.random.normal(k4, (mlp_dim, dim), jnp.float32))
    ln_layer = jnp.stack([jnp.ones(dim), jnp.zeros(dim), jnp.ones(dim), jnp.zeros(dim)])
    return {
        "wqkv": jnp.stack(wqkv), "bqkv": jnp.zeros((depth, 1, 3 * dim), jnp.float32),
        "wo": jnp.stack(wo),     "bo": jnp.zeros((depth, 1, dim), jnp.float32),
        "w1": jnp.stack(w1),     "b1": jnp.zeros((depth, 1, mlp_dim), jnp.float32),
        "w2": jnp.stack(w2),     "b2": jnp.zeros((depth, 1, dim), jnp.float32),
        # PreNorm LayerNorms per layer: rows = [g_attn, b_attn, g_ff, b_ff]
        "ln": jnp.tile(ln_layer[None], (depth, 1, 1)).astype(jnp.float32),
        # Final LayerNorm (norm_enable=True): rows = [gamma, beta]
        "ln_out": jnp.stack([jnp.ones(dim), jnp.zeros(dim)])[None].astype(jnp.float32),
    }


def transformer_reference(x, params, *, heads, norm_enable=False):
    """Pure-JAX reference mirroring the PyTorch Transformer.forward."""
    b, p, n, dim = x.shape
    head_dim = dim // heads
    scale = float(head_dim) ** -0.5
    depth = params["wqkv"].shape[0]
    hi = jax.lax.Precision.HIGHEST

    def ln_apply(t, gamma, beta):
        mean = jnp.mean(t, axis=-1, keepdims=True)
        var = jnp.mean(jnp.square(t - mean), axis=-1, keepdims=True)
        return (t - mean) * jax.lax.rsqrt(var + 1e-5) * gamma + beta

    h = x.reshape(b * p, n, dim).astype(jnp.float32)
    for l in range(depth):
        a_in = ln_apply(h, params["ln"][l, 0], params["ln"][l, 1]) if norm_enable else h
        qkv = jnp.matmul(a_in, params["wqkv"][l], precision=hi) + params["bqkv"][l]
        q, k, v = jnp.split(qkv, 3, axis=-1)

        def split_heads(t):
            return t.reshape(-1, n, heads, head_dim).transpose(0, 2, 1, 3)

        qh, kh, vh = split_heads(q), split_heads(k), split_heads(v)
        s = jnp.einsum('bhqd,bhkd->bhqk', qh, kh, precision=hi) * scale
        p_attn = jax.nn.softmax(s, axis=-1)
        o = jnp.einsum('bhqk,bhkd->bhqd', p_attn, vh, precision=hi)
        o = o.transpose(0, 2, 1, 3).reshape(-1, n, dim)
        o = jnp.matmul(o, params["wo"][l], precision=hi) + params["bo"][l]
        h = h + o
        f_in = ln_apply(h, params["ln"][l, 2], params["ln"][l, 3]) if norm_enable else h
        f = jnp.matmul(f_in, params["w1"][l], precision=hi) + params["b1"][l]
        f = f * jax.nn.sigmoid(f)
        f = jnp.matmul(f, params["w2"][l], precision=hi) + params["b2"][l]
        h = h + f
    if norm_enable:
        h = ln_apply(h, params["ln_out"][0, 0], params["ln_out"][0, 1])
    return h.reshape(b, p, n, dim)


if __name__ == "__main__":
    # Shapes consistent with MobileViTBlock's transformer: x is (b, p, n, dim),
    # heads=4, head_dim = dim // heads (Attention ignores its dim_head ctor arg).
    b, p, n = 2, 4, 8
    heads, dim, mlp_dim, depth = 4, 32, 64, 2

    key = jax.random.PRNGKey(0)
    kx, kp = jax.random.split(key)
    x = jax.random.normal(kx, (b, p, n, dim), jnp.float32)
    params = init_params(kp, depth=depth, dim=dim, mlp_dim=mlp_dim)

    # 1) norm_enable=False, f32 matmul path, default tiling (>=2 batch tiles).
    out0 = jax.block_until_ready(
        transformer_forward(x, params, heads=heads, norm_enable=False,
                            use_bf16=False))
    ref0 = transformer_reference(x, params, heads=heads, norm_enable=False)
    assert out0.shape == (b, p, n, dim)
    assert bool(jnp.all(jnp.isfinite(out0)))
    assert float(jnp.max(jnp.abs(out0 - ref0))) < 1e-1

    # 2) norm_enable=True (PreNorm + final LayerNorm, as MobileViTBlock uses),
    #    small explicit tile so multiple batch tiles + zero padding are exercised.
    out1 = jax.block_until_ready(
        transformer_forward(x, params, heads=heads, norm_enable=True,
                            use_bf16=False, tile_b=3))
    ref1 = transformer_reference(x, params, heads=heads, norm_enable=True)
    assert bool(jnp.all(jnp.isfinite(out1)))
    assert float(jnp.max(jnp.abs(out1 - ref1))) < 1e-1

    # 3) Default bf16-weight MXU path (v5e/v6e/v7x), f32 accumulation.
    out2 = jax.block_until_ready(
        transformer_forward(x, params, heads=heads, norm_enable=True))
    assert bool(jnp.all(jnp.isfinite(out2)))
    assert float(jnp.max(jnp.abs(out2 - ref1))) < 2e-1

    print("KERNEL_OK")
</pallas_src>

<mosaic_0001>
module attributes {stable_mosaic.version = 11 : i64} {
  func.func @transformer_kernel(%arg0: i32, %arg1: memref<32x32xf32, #tpu.memory_space<vmem>>, %arg2: memref<2x32x96xf32, #tpu.memory_space<vmem>>, %arg3: memref<2x1x96xf32, #tpu.memory_space<vmem>>, %arg4: memref<2x32x32xf32, #tpu.memory_space<vmem>>, %arg5: memref<2x1x32xf32, #tpu.memory_space<vmem>>, %arg6: memref<2x32x64xf32, #tpu.memory_space<vmem>>, %arg7: memref<2x1x64xf32, #tpu.memory_space<vmem>>, %arg8: memref<2x64x32xf32, #tpu.memory_space<vmem>>, %arg9: memref<2x1x32xf32, #tpu.memory_space<vmem>>, %arg10: memref<32x32xf32, #tpu.memory_space<vmem>>) attributes {dimension_semantics = [#tpu.dimension_semantics<parallel>], iteration_bounds = array<i64: 2>, scalar_prefetch = 0 : i64, scratch_operands = 0 : i64, tpu.core_type = #tpu.core_type<tc>, window_params = [{transform_indices = @transform_0, window_bounds = array<i64: 32, 32>}, {pipeline_mode = #tpu.pipeline_mode<synchronous>, transform_indices = @transform_1, window_bounds = array<i64: 2, 32, 96>}, {pipeline_mode = #tpu.pipeline_mode<synchronous>, transform_indices = @transform_2, window_bounds = array<i64: 2, 1, 96>}, {pipeline_mode = #tpu.pipeline_mode<synchronous>, transform_indices = @transform_3, window_bounds = array<i64: 2, 32, 32>}, {pipeline_mode = #tpu.pipeline_mode<synchronous>, transform_indices = @transform_4, window_bounds = array<i64: 2, 1, 32>}, {pipeline_mode = #tpu.pipeline_mode<synchronous>, transform_indices = @transform_5, window_bounds = array<i64: 2, 32, 64>}, {pipeline_mode = #tpu.pipeline_mode<synchronous>, transform_indices = @transform_6, window_bounds = array<i64: 2, 1, 64>}, {pipeline_mode = #tpu.pipeline_mode<synchronous>, transform_indices = @transform_7, window_bounds = array<i64: 2, 64, 32>}, {pipeline_mode = #tpu.pipeline_mode<synchronous>, transform_indices = @transform_8, window_bounds = array<i64: 2, 1, 32>}, {transform_indices = @transform_9, window_bounds = array<i64: 32, 32>}]} {
    %c0 = arith.constant 0 : index
    %c0_0 = arith.constant 0 : index
    %0 = vector.load %arg1[%c0, %c0_0] : memref<32x32xf32, #tpu.memory_space<vmem>>, vector<32x32xf32>
    %c0_1 = arith.constant 0 : index
    %c0_2 = arith.constant 0 : index
    %c0_3 = arith.constant 0 : index
    %1 = vector.load %arg2[%c0_1, %c0_2, %c0_3] : memref<2x32x96xf32, #tpu.memory_space<vmem>>, vector<1x32x96xf32>
    %2 = vector.shape_cast %1 : vector<1x32x96xf32> to vector<32x96xf32>
    %c0_4 = arith.constant 0 : index
    %c0_5 = arith.constant 0 : index
    %c0_6 = arith.constant 0 : index
    %3 = vector.load %arg3[%c0_4, %c0_5, %c0_6] : memref<2x1x96xf32, #tpu.memory_space<vmem>>, vector<1x1x96xf32>
    %4 = vector.shape_cast %3 : vector<1x1x96xf32> to vector<1x96xf32>
    %c0_7 = arith.constant 0 : index
    %c0_8 = arith.constant 0 : index
    %c0_9 = arith.constant 0 : index
    %5 = vector.load %arg4[%c0_7, %c0_8, %c0_9] : memref<2x32x32xf32, #tpu.memory_space<vmem>>, vector<1x32x32xf32>
    %6 = vector.shape_cast %5 : vector<1x32x32xf32> to vector<32x32xf32>
    %c0_10 = arith.constant 0 : index
    %c0_11 = arith.constant 0 : index
    %c0_12 = arith.constant 0 : index
    %7 = vector.load %arg5[%c0_10, %c0_11, %c0_12] : memref<2x1x32xf32, #tpu.memory_space<vmem>>, vector<1x1x32xf32>
    %8 = vector.shape_cast %7 : vector<1x1x32xf32> to vector<1x32xf32>
    %c0_13 = arith.constant 0 : index
    %c0_14 = arith.constant 0 : index
    %c0_15 = arith.constant 0 : index
    %9 = vector.load %arg6[%c0_13, %c0_14, %c0_15] : memref<2x32x64xf32, #tpu.memory_space<vmem>>, vector<1x32x64xf32>
    %10 = vector.shape_cast %9 : vector<1x32x64xf32> to vector<32x64xf32>
    %c0_16 = arith.constant 0 : index
    %c0_17 = arith.constant 0 : index
    %c0_18 = arith.constant 0 : index
    %11 = vector.load %arg7[%c0_16, %c0_17, %c0_18] : memref<2x1x64xf32, #tpu.memory_space<vmem>>, vector<1x1x64xf32>
    %12 = vector.shape_cast %11 : vector<1x1x64xf32> to vector<1x64xf32>
    %c0_19 = arith.constant 0 : index
    %c0_20 = arith.constant 0 : index
    %c0_21 = arith.constant 0 : index
    %13 = vector.load %arg8[%c0_19, %c0_20, %c0_21] : memref<2x64x32xf32, #tpu.memory_space<vmem>>, vector<1x64x32xf32>
    %14 = vector.shape_cast %13 : vector<1x64x32xf32> to vector<64x32xf32>
    %c0_22 = arith.constant 0 : index
    %c0_23 = arith.constant 0 : index
    %c0_24 = arith.constant 0 : index
    %15 = vector.load %arg9[%c0_22, %c0_23, %c0_24] : memref<2x1x32xf32, #tpu.memory_space<vmem>>, vector<1x1x32xf32>
    %16 = vector.shape_cast %15 : vector<1x1x32xf32> to vector<1x32xf32>
    %cst = arith.constant dense<0.000000e+00> : vector<32x96xf32>
    %17 = tpu.matmul %0, %2, %cst {dimension_numbers = #tpu.dot_dimension_numbers<[1], [0], [0], [1], [0, 0, 1, 1], [], []>} : vector<32x32xf32>, vector<32x96xf32>, vector<32x96xf32> -> vector<32x96xf32>
    %18 = vector.broadcast %4 : vector<1x96xf32> to vector<32x96xf32>
    %19 = arith.addf %17, %18 : vector<32x96xf32>
    %20 = vector.extract_strided_slice %19 {offsets = [0, 0], sizes = [32, 32], strides = [1, 1]} : vector<32x96xf32> to vector<32x32xf32>
    %21 = vector.shape_cast %20 : vector<32x32xf32> to vector<4x8x32xf32>
    %22 = vector.extract_strided_slice %19 {offsets = [0, 32], sizes = [32, 32], strides = [1, 1]} : vector<32x96xf32> to vector<32x32xf32>
    %23 = vector.shape_cast %22 : vector<32x32xf32> to vector<4x8x32xf32>
    %24 = vector.extract_strided_slice %19 {offsets = [0, 64], sizes = [32, 32], strides = [1, 1]} : vector<32x96xf32> to vector<32x32xf32>
    %25 = vector.shape_cast %24 : vector<32x32xf32> to vector<4x8x32xf32>
    %26 = vector.extract_strided_slice %21 {offsets = [0, 0, 0], sizes = [4, 8, 8], strides = [1, 1, 1]} : vector<4x8x32xf32> to vector<4x8x8xf32>
    %27 = vector.extract_strided_slice %23 {offsets = [0, 0, 0], sizes = [4, 8, 8], strides = [1, 1, 1]} : vector<4x8x32xf32> to vector<4x8x8xf32>
    %28 = vector.extract_strided_slice %25 {offsets = [0, 0, 0], sizes = [4, 8, 8], strides = [1, 1, 1]} : vector<4x8x32xf32> to vector<4x8x8xf32>
    "tpu.trace_start"() <{level = 10 : i32, message = "bqd,bkd->bqk"}> : () -> ()
    %cst_25 = arith.constant dense<0.000000e+00> : vector<4x8x8xf32>
    %29 = tpu.matmul %26, %27, %cst_25 {dimension_numbers = #tpu.dot_dimension_numbers<[2], [2], [1], [1], [0, 0, 0, 1, 1, 1], [0], [0]>} : vector<4x8x8xf32>, vector<4x8x8xf32>, vector<4x8x8xf32> -> vector<4x8x8xf32>
    "tpu.trace_stop"() : () -> ()
    %cst_26 = arith.constant dense<0xFF800000> : vector<4x8xf32>
    %30 = vector.multi_reduction <maximumf>, %29, %cst_26 [2] : vector<4x8x8xf32> to vector<4x8xf32>
    %31 = vector.shape_cast %30 : vector<4x8xf32> to vector<4x8x1xf32>
    %32 = vector.broadcast %31 : vector<4x8x1xf32> to vector<4x8x8xf32>
    %33 = arith.subf %29, %32 : vector<4x8x8xf32>
    %34 = math.exp %33 : vector<4x8x8xf32>
    %cst_27 = arith.constant dense<0.000000e+00> : vector<4x8xf32>
    %35 = vector.multi_reduction <add>, %34, %cst_27 [2] : vector<4x8x8xf32> to vector<4x8xf32>
    %36 = vector.shape_cast %35 : vector<4x8xf32> to vector<4x8x1xf32>
    %37 = tpu.reciprocal %36 {approx = true} : vector<4x8x1xf32> -> vector<4x8x1xf32>
    %38 = vector.broadcast %37 : vector<4x8x1xf32> to vector<4x8x8xf32>
    %39 = arith.mulf %34, %38 : vector<4x8x8xf32>
    "tpu.trace_start"() <{level = 10 : i32, message = "bqk,bkd->bqd"}> : () -> ()
    %cst_28 = arith.constant dense<0.000000e+00> : vector<4x8x8xf32>
    %40 = tpu.matmul %39, %28, %cst_28 {dimension_numbers = #tpu.dot_dimension_numbers<[2], [1], [1], [2], [0, 0, 0, 1, 1, 2], [0], [0]>} : vector<4x8x8xf32>, vector<4x8x8xf32>, vector<4x8x8xf32> -> vector<4x8x8xf32>
    "tpu.trace_stop"() : () -> ()
    %41 = vector.shape_cast %40 : vector<4x8x8xf32> to vector<32x8xf32>
    %42 = vector.extract_strided_slice %6 {offsets = [0, 0], sizes = [8, 32], strides = [1, 1]} : vector<32x32xf32> to vector<8x32xf32>
    %cst_29 = arith.constant dense<0.000000e+00> : vector<32x32xf32>
    %43 = tpu.matmul %41, %42, %cst_29 {dimension_numbers = #tpu.dot_dimension_numbers<[1], [0], [0], [1], [0, 0, 1, 1], [], []>} : vector<32x8xf32>, vector<8x32xf32>, vector<32x32xf32> -> vector<32x32xf32>
    %44 = vector.extract_strided_slice %21 {offsets = [0, 0, 8], sizes = [4, 8, 8], strides = [1, 1, 1]} : vector<4x8x32xf32> to vector<4x8x8xf32>
    %45 = vector.extract_strided_slice %23 {offsets = [0, 0, 8], sizes = [4, 8, 8], strides = [1, 1, 1]} : vector<4x8x32xf32> to vector<4x8x8xf32>
    %46 = vector.extract_strided_slice %25 {offsets = [0, 0, 8], sizes = [4, 8, 8], strides = [1, 1, 1]} : vector<4x8x32xf32> to vector<4x8x8xf32>
    "tpu.trace_start"() <{level = 10 : i32, message = "bqd,bkd->bqk"}> : () -> ()
    %cst_30 = arith.constant dense<0.000000e+00> : vector<4x8x8xf32>
    %47 = tpu.matmul %44, %45, %cst_30 {dimension_numbers = #tpu.dot_dimension_numbers<[2], [2], [1], [1], [0, 0, 0, 1, 1, 1], [0], [0]>} : vector<4x8x8xf32>, vector<4x8x8xf32>, vector<4x8x8xf32> -> vector<4x8x8xf32>
    "tpu.trace_stop"() : () -> ()
    %cst_31 = arith.constant dense<0xFF800000> : vector<4x8xf32>
    %48 = vector.multi_reduction <maximumf>, %47, %cst_31 [2] : vector<4x8x8xf32> to vector<4x8xf32>
    %49 = vector.shape_cast %48 : vector<4x8xf32> to vector<4x8x1xf32>
    %50 = vector.broadcast %49 : vector<4x8x1xf32> to vector<4x8x8xf32>
    %51 = arith.subf %47, %50 : vector<4x8x8xf32>
    %52 = math.exp %51 : vector<4x8x8xf32>
    %cst_32 = arith.constant dense<0.000000e+00> : vector<4x8xf32>
    %53 = vector.multi_reduction <add>, %52, %cst_32 [2] : vector<4x8x8xf32> to vector<4x8xf32>
    %54 = vector.shape_cast %53 : vector<4x8xf32> to vector<4x8x1xf32>
    %55 = tpu.reciprocal %54 {approx = true} : vector<4x8x1xf32> -> vector<4x8x1xf32>
    %56 = vector.broadcast %55 : vector<4x8x1xf32> to vector<4x8x8xf32>
    %57 = arith.mulf %52, %56 : vector<4x8x8xf32>
    "tpu.trace_start"() <{level = 10 : i32, message = "bqk,bkd->bqd"}> : () -> ()
    %cst_33 = arith.constant dense<0.000000e+00> : vector<4x8x8xf32>
    %58 = tpu.matmul %57, %46, %cst_33 {dimension_numbers = #tpu.dot_dimension_numbers<[2], [1], [1], [2], [0, 0, 0, 1, 1, 2], [0], [0]>} : vector<4x8x8xf32>, vector<4x8x8xf32>, vector<4x8x8xf32> -> vector<4x8x8xf32>
    "tpu.trace_stop"() : () -> ()
    %59 = vector.shape_cast %58 : vector<4x8x8xf32> to vector<32x8xf32>
    %60 = vector.extract_strided_slice %6 {offsets = [8, 0], sizes = [8, 32], strides = [1, 1]} : vector<32x32xf32> to vector<8x32xf32>
    %cst_34 = arith.constant dense<0.000000e+00> : vector<32x32xf32>
    %61 = tpu.matmul %59, %60, %cst_34 {dimension_numbers = #tpu.dot_dimension_numbers<[1], [0], [0], [1], [0, 0, 1, 1], [], []>} : vector<32x8xf32>, vector<8x32xf32>, vector<32x32xf32> -> vector<32x32xf32>
    %62 = arith.addf %43, %61 : vector<32x32xf32>
    %63 = vector.extract_strided_slice %21 {offsets = [0, 0, 16], sizes = [4, 8, 8], strides = [1, 1, 1]} : vector<4x8x32xf32> to vector<4x8x8xf32>
    %64 = vector.extract_strided_slice %23 {offsets = [0, 0, 16], sizes = [4, 8, 8], strides = [1, 1, 1]} : vector<4x8x32xf32> to vector<4x8x8xf32>
    %65 = vector.extract_strided_slice %25 {offsets = [0, 0, 16], sizes = [4, 8, 8], strides = [1, 1, 1]} : vector<4x8x32xf32> to vector<4x8x8xf32>
    "tpu.trace_start"() <{level = 10 : i32, message = "bqd,bkd->bqk"}> : () -> ()
    %cst_35 = arith.constant dense<0.000000e+00> : vector<4x8x8xf32>
    %66 = tpu.matmul %63, %64, %cst_35 {dimension_numbers = #tpu.dot_dimension_numbers<[2], [2], [1], [1], [0, 0, 0, 1, 1, 1], [0], [0]>} : vector<4x8x8xf32>, vector<4x8x8xf32>, vector<4x8x8xf32> -> vector<4x8x8xf32>
    "tpu.trace_stop"() : () -> ()
    %cst_36 = arith.constant dense<0xFF800000> : vector<4x8xf32>
    %67 = vector.multi_reduction <maximumf>, %66, %cst_36 [2] : vector<4x8x8xf32> to vector<4x8xf32>
    %68 = vector.shape_cast %67 : vector<4x8xf32> to vector<4x8x1xf32>
    %69 = vector.broadcast %68 : vector<4x8x1xf32> to vector<4x8x8xf32>
    %70 = arith.subf %66, %69 : vector<4x8x8xf32>
    %71 = math.exp %70 : vector<4x8x8xf32>
    %cst_37 = arith.constant dense<0.000000e+00> : vector<4x8xf32>
    %72 = vector.multi_reduction <add>, %71, %cst_37 [2] : vector<4x8x8xf32> to vector<4x8xf32>
    %73 = vector.shape_cast %72 : vector<4x8xf32> to vector<4x8x1xf32>
    %74 = tpu.reciprocal %73 {approx = true} : vector<4x8x1xf32> -> vector<4x8x1xf32>
    %75 = vector.broadcast %74 : vector<4x8x1xf32> to vector<4x8x8xf32>
    %76 = arith.mulf %71, %75 : vector<4x8x8xf32>
    "tpu.trace_start"() <{level = 10 : i32, message = "bqk,bkd->bqd"}> : () -> ()
    %cst_38 = arith.constant dense<0.000000e+00> : vector<4x8x8xf32>
    %77 = tpu.matmul %76, %65, %cst_38 {dimension_numbers = #tpu.dot_dimension_numbers<[2], [1], [1], [2], [0, 0, 0, 1, 1, 2], [0], [0]>} : vector<4x8x8xf32>, vector<4x8x8xf32>, vector<4x8x8xf32> -> vector<4x8x8xf32>
    "tpu.trace_stop"() : () -> ()
    %78 = vector.shape_cast %77 : vector<4x8x8xf32> to vector<32x8xf32>
    %79 = vector.extract_strided_slice %6 {offsets = [16, 0], sizes = [8, 32], strides = [1, 1]} : vector<32x32xf32> to vector<8x32xf32>
    %cst_39 = arith.constant dense<0.000000e+00> : vector<32x32xf32>
    %80 = tpu.matmul %78, %79, %cst_39 {dimension_numbers = #tpu.dot_dimension_numbers<[1], [0], [0], [1], [0, 0, 1, 1], [], []>} : vector<32x8xf32>, vector<8x32xf32>, vector<32x32xf32> -> vector<32x32xf32>
    %81 = arith.addf %62, %80 : vector<32x32xf32>
    %82 = vector.extract_strided_slice %21 {offsets = [0, 0, 24], sizes = [4, 8, 8], strides = [1, 1, 1]} : vector<4x8x32xf32> to vector<4x8x8xf32>
    %83 = vector.extract_strided_slice %23 {offsets = [0, 0, 24], sizes = [4, 8, 8], strides = [1, 1, 1]} : vector<4x8x32xf32> to vector<4x8x8xf32>
    %84 = vector.extract_strided_slice %25 {offsets = [0, 0, 24], sizes = [4, 8, 8], strides = [1, 1, 1]} : vector<4x8x32xf32> to vector<4x8x8xf32>
    "tpu.trace_start"() <{level = 10 : i32, message = "bqd,bkd->bqk"}> : () -> ()
    %cst_40 = arith.constant dense<0.000000e+00> : vector<4x8x8xf32>
    %85 = tpu.matmul %82, %83, %cst_40 {dimension_numbers = #tpu.dot_dimension_numbers<[2], [2], [1], [1], [0, 0, 0, 1, 1, 1], [0], [0]>} : vector<4x8x8xf32>, vector<4x8x8xf32>, vector<4x8x8xf32> -> vector<4x8x8xf32>
    "tpu.trace_stop"() : () -> ()
    %cst_41 = arith.constant dense<0xFF800000> : vector<4x8xf32>
    %86 = vector.multi_reduction <maximumf>, %85, %cst_41 [2] : vector<4x8x8xf32> to vector<4x8xf32>
    %87 = vector.shape_cast %86 : vector<4x8xf32> to vector<4x8x1xf32>
    %88 = vector.broadcast %87 : vector<4x8x1xf32> to vector<4x8x8xf32>
    %89 = arith.subf %85, %88 : vector<4x8x8xf32>
    %90 = math.exp %89 : vector<4x8x8xf32>
    %cst_42 = arith.constant dense<0.000000e+00> : vector<4x8xf32>
    %91 = vector.multi_reduction <add>, %90, %cst_42 [2] : vector<4x8x8xf32> to vector<4x8xf32>
    %92 = vector.shape_cast %91 : vector<4x8xf32> to vector<4x8x1xf32>
    %93 = tpu.reciprocal %92 {approx = true} : vector<4x8x1xf32> -> vector<4x8x1xf32>
    %94 = vector.broadcast %93 : vector<4x8x1xf32> to vector<4x8x8xf32>
    %95 = arith.mulf %90, %94 : vector<4x8x8xf32>
    "tpu.trace_start"() <{level = 10 : i32, message = "bqk,bkd->bqd"}> : () -> ()
    %cst_43 = arith.constant dense<0.000000e+00> : vector<4x8x8xf32>
    %96 = tpu.matmul %95, %84, %cst_43 {dimension_numbers = #tpu.dot_dimension_numbers<[2], [1], [1], [2], [0, 0, 0, 1, 1, 2], [0], [0]>} : vector<4x8x8xf32>, vector<4x8x8xf32>, vector<4x8x8xf32> -> vector<4x8x8xf32>
    "tpu.trace_stop"() : () -> ()
    %97 = vector.shape_cast %96 : vector<4x8x8xf32> to vector<32x8xf32>
    %98 = vector.extract_strided_slice %6 {offsets = [24, 0], sizes = [8, 32], strides = [1, 1]} : vector<32x32xf32> to vector<8x32xf32>
    %cst_44 = arith.constant dense<0.000000e+00> : vector<32x32xf32>
    %99 = tpu.matmul %97, %98, %cst_44 {dimension_numbers = #tpu.dot_dimension_numbers<[1], [0], [0], [1], [0, 0, 1, 1], [], []>} : vector<32x8xf32>, vector<8x32xf32>, vector<32x32xf32> -> vector<32x32xf32>
    %100 = arith.addf %81, %99 : vector<32x32xf32>
    %101 = arith.addf %0, %100 : vector<32x32xf32>
    %102 = vector.broadcast %8 : vector<1x32xf32> to vector<32x32xf32>
    %103 = arith.addf %101, %102 : vector<32x32xf32>
    %cst_45 = arith.constant dense<0.000000e+00> : vector<32x64xf32>
    %104 = tpu.matmul %103, %10, %cst_45 {dimension_numbers = #tpu.dot_dimension_numbers<[1], [0], [0], [1], [0, 0, 1, 1], [], []>} : vector<32x32xf32>, vector<32x64xf32>, vector<32x64xf32> -> vector<32x64xf32>
    %105 = vector.broadcast %12 : vector<1x64xf32> to vector<32x64xf32>
    %106 = arith.addf %104, %105 : vector<32x64xf32>
    %107 = arith.negf %106 : vector<32x64xf32>
    %108 = math.exp %107 : vector<32x64xf32>
    %cst_46 = arith.constant 1.000000e+00 : f32
    %109 = vector.broadcast %cst_46 : f32 to vector<32x64xf32>
    %110 = arith.addf %109, %108 : vector<32x64xf32>
    %111 = arith.divf %109, %110 : vector<32x64xf32>
    %112 = arith.mulf %106, %111 : vector<32x64xf32>
    %cst_47 = arith.constant dense<0.000000e+00> : vector<32x32xf32>
    %113 = tpu.matmul %112, %14, %cst_47 {dimension_numbers = #tpu.dot_dimension_numbers<[1], [0], [0], [1], [0, 0, 1, 1], [], []>} : vector<32x64xf32>, vector<64x32xf32>, vector<32x32xf32> -> vector<32x32xf32>
    %114 = vector.broadcast %16 : vector<1x32xf32> to vector<32x32xf32>
    %115 = arith.addf %113, %114 : vector<32x32xf32>
    %116 = arith.addf %103, %115 : vector<32x32xf32>
    %c1 = arith.constant 1 : index
    %c0_48 = arith.constant 0 : index
    %c0_49 = arith.constant 0 : index
    %117 = vector.load %arg2[%c1, %c0_48, %c0_49] : memref<2x32x96xf32, #tpu.memory_space<vmem>>, vector<1x32x96xf32>
    %118 = vector.shape_cast %117 : vector<1x32x96xf32> to vector<32x96xf32>
    %c1_50 = arith.constant 1 : index
    %c0_51 = arith.constant 0 : index
    %c0_52 = arith.constant 0 : index
    %119 = vector.load %arg3[%c1_50, %c0_51, %c0_52] : memref<2x1x96xf32, #tpu.memory_space<vmem>>, vector<1x1x96xf32>
    %120 = vector.shape_cast %119 : vector<1x1x96xf32> to vector<1x96xf32>
    %c1_53 = arith.constant 1 : index
    %c0_54 = arith.constant 0 : index
    %c0_55 = arith.constant 0 : index
    %121 = vector.load %arg4[%c1_53, %c0_54, %c0_55] : memref<2x32x32xf32, #tpu.memory_space<vmem>>, vector<1x32x32xf32>
    %122 = vector.shape_cast %121 : vector<1x32x32xf32> to vector<32x32xf32>
    %c1_56 = arith.constant 1 : index
    %c0_57 = arith.constant 0 : index
    %c0_58 = arith.constant 0 : index
    %123 = vector.load %arg5[%c1_56, %c0_57, %c0_58] : memref<2x1x32xf32, #tpu.memory_space<vmem>>, vector<1x1x32xf32>
    %124 = vector.shape_cast %123 : vector<1x1x32xf32> to vector<1x32xf32>
    %c1_59 = arith.constant 1 : index
    %c0_60 = arith.constant 0 : index
    %c0_61 = arith.constant 0 : index
    %125 = vector.load %arg6[%c1_59, %c0_60, %c0_61] : memref<2x32x64xf32, #tpu.memory_space<vmem>>, vector<1x32x64xf32>
    %126 = vector.shape_cast %125 : vector<1x32x64xf32> to vector<32x64xf32>
    %c1_62 = arith.constant 1 : index
    %c0_63 = arith.constant 0 : index
    %c0_64 = arith.constant 0 : index
    %127 = vector.load %arg7[%c1_62, %c0_63, %c0_64] : memref<2x1x64xf32, #tpu.memory_space<vmem>>, vector<1x1x64xf32>
    %128 = vector.shape_cast %127 : vector<1x1x64xf32> to vector<1x64xf32>
    %c1_65 = arith.constant 1 : index
    %c0_66 = arith.constant 0 : index
    %c0_67 = arith.constant 0 : index
    %129 = vector.load %arg8[%c1_65, %c0_66, %c0_67] : memref<2x64x32xf32, #tpu.memory_space<vmem>>, vector<1x64x32xf32>
    %130 = vector.shape_cast %129 : vector<1x64x32xf32> to vector<64x32xf32>
    %c1_68 = arith.constant 1 : index
    %c0_69 = arith.constant 0 : index
    %c0_70 = arith.constant 0 : index
    %131 = vector.load %arg9[%c1_68, %c0_69, %c0_70] : memref<2x1x32xf32, #tpu.memory_space<vmem>>, vector<1x1x32xf32>
    %132 = vector.shape_cast %131 : vector<1x1x32xf32> to vector<1x32xf32>
    %cst_71 = arith.constant dense<0.000000e+00> : vector<32x96xf32>
    %133 = tpu.matmul %116, %118, %cst_71 {dimension_numbers = #tpu.dot_dimension_numbers<[1], [0], [0], [1], [0, 0, 1, 1], [], []>} : vector<32x32xf32>, vector<32x96xf32>, vector<32x96xf32> -> vector<32x96xf32>
    %134 = vector.broadcast %120 : vector<1x96xf32> to vector<32x96xf32>
    %135 = arith.addf %133, %134 : vector<32x96xf32>
    %136 = vector.extract_strided_slice %135 {offsets = [0, 0], sizes = [32, 32], strides = [1, 1]} : vector<32x96xf32> to vector<32x32xf32>
    %137 = vector.shape_cast %136 : vector<32x32xf32> to vector<4x8x32xf32>
    %138 = vector.extract_strided_slice %135 {offsets = [0, 32], sizes = [32, 32], strides = [1, 1]} : vector<32x96xf32> to vector<32x32xf32>
    %139 = vector.shape_cast %138 : vector<32x32xf32> to vector<4x8x32xf32>
    %140 = vector.extract_strided_slice %135 {offsets = [0, 64], sizes = [32, 32], strides = [1, 1]} : vector<32x96xf32> to vector<32x32xf32>
    %141 = vector.shape_cast %140 : vector<32x32xf32> to vector<4x8x32xf32>
    %142 = vector.extract_strided_slice %137 {offsets = [0, 0, 0], sizes = [4, 8, 8], strides = [1, 1, 1]} : vector<4x8x32xf32> to vector<4x8x8xf32>
    %143 = vector.extract_strided_slice %139 {offsets = [0, 0, 0], sizes = [4, 8, 8], strides = [1, 1, 1]} : vector<4x8x32xf32> to vector<4x8x8xf32>
    %144 = vector.extract_strided_slice %141 {offsets = [0, 0, 0], sizes = [4, 8, 8], strides = [1, 1, 1]} : vector<4x8x32xf32> to vector<4x8x8xf32>
    "tpu.trace_start"() <{level = 10 : i32, message = "bqd,bkd->bqk"}> : () -> ()
    %cst_72 = arith.constant dense<0.000000e+00> : vector<4x8x8xf32>
    %145 = tpu.matmul %142, %143, %cst_72 {dimension_numbers = #tpu.dot_dimension_numbers<[2], [2], [1], [1], [0, 0, 0, 1, 1, 1], [0], [0]>} : vector<4x8x8xf32>, vector<4x8x8xf32>, vector<4x8x8xf32> -> vector<4x8x8xf32>
    "tpu.trace_stop"() : () -> ()
    %cst_73 = arith.constant dense<0xFF800000> : vector<4x8xf32>
    %146 = vector.multi_reduction <maximumf>, %145, %cst_73 [2] : vector<4x8x8xf32> to vector<4x8xf32>
    %147 = vector.shape_cast %146 : vector<4x8xf32> to vector<4x8x1xf32>
    %148 = vector.broadcast %147 : vector<4x8x1xf32> to vector<4x8x8xf32>
    %149 = arith.subf %145, %148 : vector<4x8x8xf32>
    %150 = math.exp %149 : vector<4x8x8xf32>
    %cst_74 = arith.constant dense<0.000000e+00> : vector<4x8xf32>
    %151 = vector.multi_reduction <add>, %150, %cst_74 [2] : vector<4x8x8xf32> to vector<4x8xf32>
    %152 = vector.shape_cast %151 : vector<4x8xf32> to vector<4x8x1xf32>
    %153 = tpu.reciprocal %152 {approx = true} : vector<4x8x1xf32> -> vector<4x8x1xf32>
    %154 = vector.broadcast %153 : vector<4x8x1xf32> to vector<4x8x8xf32>
    %155 = arith.mulf %150, %154 : vector<4x8x8xf32>
    "tpu.trace_start"() <{level = 10 : i32, message = "bqk,bkd->bqd"}> : () -> ()
    %cst_75 = arith.constant dense<0.000000e+00> : vector<4x8x8xf32>
    %156 = tpu.matmul %155, %144, %cst_75 {dimension_numbers = #tpu.dot_dimension_numbers<[2], [1], [1], [2], [0, 0, 0, 1, 1, 2], [0], [0]>} : vector<4x8x8xf32>, vector<4x8x8xf32>, vector<4x8x8xf32> -> vector<4x8x8xf32>
    "tpu.trace_stop"() : () -> ()
    %157 = vector.shape_cast %156 : vector<4x8x8xf32> to vector<32x8xf32>
    %158 = vector.extract_strided_slice %122 {offsets = [0, 0], sizes = [8, 32], strides = [1, 1]} : vector<32x32xf32> to vector<8x32xf32>
    %cst_76 = arith.constant dense<0.000000e+00> : vector<32x32xf32>
    %159 = tpu.matmul %157, %158, %cst_76 {dimension_numbers = #tpu.dot_dimension_numbers<[1], [0], [0], [1], [0, 0, 1, 1], [], []>} : vector<32x8xf32>, vector<8x32xf32>, vector<32x32xf32> -> vector<32x32xf32>
    %160 = vector.extract_strided_slice %137 {offsets = [0, 0, 8], sizes = [4, 8, 8], strides = [1, 1, 1]} : vector<4x8x32xf32> to vector<4x8x8xf32>
    %161 = vector.extract_strided_slice %139 {offsets = [0, 0, 8], sizes = [4, 8, 8], strides = [1, 1, 1]} : vector<4x8x32xf32> to vector<4x8x8xf32>
    %162 = vector.extract_strided_slice %141 {offsets = [0, 0, 8], sizes = [4, 8, 8], strides = [1, 1, 1]} : vector<4x8x32xf32> to vector<4x8x8xf32>
    "tpu.trace_start"() <{level = 10 : i32, message = "bqd,bkd->bqk"}> : () -> ()
    %cst_77 = arith.constant dense<0.000000e+00> : vector<4x8x8xf32>
    %163 = tpu.matmul %160, %161, %cst_77 {dimension_numbers = #tpu.dot_dimension_numbers<[2], [2], [1], [1], [0, 0, 0, 1, 1, 1], [0], [0]>} : vector<4x8x8xf32>, vector<4x8x8xf32>, vector<4x8x8xf32> -> vector<4x8x8xf32>
    "tpu.trace_stop"() : () -> ()
    %cst_78 = arith.constant dense<0xFF800000> : vector<4x8xf32>
    %164 = vector.multi_reduction <maximumf>, %163, %cst_78 [2] : vector<4x8x8xf32> to vector<4x8xf32>
    %165 = vector.shape_cast %164 : vector<4x8xf32> to vector<4x8x1xf32>
    %166 = vector.broadcast %165 : vector<4x8x1xf32> to vector<4x8x8xf32>
    %167 = arith.subf %163, %166 : vector<4x8x8xf32>
    %168 = math.exp %167 : vector<4x8x8xf32>
    %cst_79 = arith.constant dense<0.000000e+00> : vector<4x8xf32>
    %169 = vector.multi_reduction <add>, %168, %cst_79 [2] : vector<4x8x8xf32> to vector<4x8xf32>
    %170 = vector.shape_cast %169 : vector<4x8xf32> to vector<4x8x1xf32>
    %171 = tpu.reciprocal %170 {approx = true} : vector<4x8x1xf32> -> vector<4x8x1xf32>
    %172 = vector.broadcast %171 : vector<4x8x1xf32> to vector<4x8x8xf32>
    %173 = arith.mulf %168, %172 : vector<4x8x8xf32>
    "tpu.trace_start"() <{level = 10 : i32, message = "bqk,bkd->bqd"}> : () -> ()
    %cst_80 = arith.constant dense<0.000000e+00> : vector<4x8x8xf32>
    %174 = tpu.matmul %173, %162, %cst_80 {dimension_numbers = #tpu.dot_dimension_numbers<[2], [1], [1], [2], [0, 0, 0, 1, 1, 2], [0], [0]>} : vector<4x8x8xf32>, vector<4x8x8xf32>, vector<4x8x8xf32> -> vector<4x8x8xf32>
    "tpu.trace_stop"() : () -> ()
    %175 = vector.shape_cast %174 : vector<4x8x8xf32> to vector<32x8xf32>
    %176 = vector.extract_strided_slice %122 {offsets = [8, 0], sizes = [8, 32], strides = [1, 1]} : vector<32x32xf32> to vector<8x32xf32>
    %cst_81 = arith.constant dense<0.000000e+00> : vector<32x32xf32>
    %177 = tpu.matmul %175, %176, %cst_81 {dimension_numbers = #tpu.dot_dimension_numbers<[1], [0], [0], [1], [0, 0, 1, 1], [], []>} : vector<32x8xf32>, vector<8x32xf32>, vector<32x32xf32> -> vector<32x32xf32>
    %178 = arith.addf %159, %177 : vector<32x32xf32>
    %179 = vector.extract_strided_slice %137 {offsets = [0, 0, 16], sizes = [4, 8, 8], strides = [1, 1, 1]} : vector<4x8x32xf32> to vector<4x8x8xf32>
    %180 = vector.extract_strided_slice %139 {offsets = [0, 0, 16], sizes = [4, 8, 8], strides = [1, 1, 1]} : vector<4x8x32xf32> to vector<4x8x8xf32>
    %181 = vector.extract_strided_slice %141 {offsets = [0, 0, 16], sizes = [4, 8, 8], strides = [1, 1, 1]} : vector<4x8x32xf32> to vector<4x8x8xf32>
    "tpu.trace_start"() <{level = 10 : i32, message = "bqd,bkd->bqk"}> : () -> ()
    %cst_82 = arith.constant dense<0.000000e+00> : vector<4x8x8xf32>
    %182 = tpu.matmul %179, %180, %cst_82 {dimension_numbers = #tpu.dot_dimension_numbers<[2], [2], [1], [1], [0, 0, 0, 1, 1, 1], [0], [0]>} : vector<4x8x8xf32>, vector<4x8x8xf32>, vector<4x8x8xf32> -> vector<4x8x8xf32>
    "tpu.trace_stop"() : () -> ()
    %cst_83 = arith.constant dense<0xFF800000> : vector<4x8xf32>
    %183 = vector.multi_reduction <maximumf>, %182, %cst_83 [2] : vector<4x8x8xf32> to vector<4x8xf32>
    %184 = vector.shape_cast %183 : vector<4x8xf32> to vector<4x8x1xf32>
    %185 = vector.broadcast %184 : vector<4x8x1xf32> to vector<4x8x8xf32>
    %186 = arith.subf %182, %185 : vector<4x8x8xf32>
    %187 = math.exp %186 : vector<4x8x8xf32>
    %cst_84 = arith.constant dense<0.000000e+00> : vector<4x8xf32>
    %188 = vector.multi_reduction <add>, %187, %cst_84 [2] : vector<4x8x8xf32> to vector<4x8xf32>
    %189 = vector.shape_cast %188 : vector<4x8xf32> to vector<4x8x1xf32>
    %190 = tpu.reciprocal %189 {approx = true} : vector<4x8x1xf32> -> vector<4x8x1xf32>
    %191 = vector.broadcast %190 : vector<4x8x1xf32> to vector<4x8x8xf32>
    %192 = arith.mulf %187, %191 : vector<4x8x8xf32>
    "tpu.trace_start"() <{level = 10 : i32, message = "bqk,bkd->bqd"}> : () -> ()
    %cst_85 = arith.constant dense<0.000000e+00> : vector<4x8x8xf32>
    %193 = tpu.matmul %192, %181, %cst_85 {dimension_numbers = #tpu.dot_dimension_numbers<[2], [1], [1], [2], [0, 0, 0, 1, 1, 2], [0], [0]>} : vector<4x8x8xf32>, vector<4x8x8xf32>, vector<4x8x8xf32> -> vector<4x8x8xf32>
    "tpu.trace_stop"() : () -> ()
    %194 = vector.shape_cast %193 : vector<4x8x8xf32> to vector<32x8xf32>
    %195 = vector.extract_strided_slice %122 {offsets = [16, 0], sizes = [8, 32], strides = [1, 1]} : vector<32x32xf32> to vector<8x32xf32>
    %cst_86 = arith.constant dense<0.000000e+00> : vector<32x32xf32>
    %196 = tpu.matmul %194, %195, %cst_86 {dimension_numbers = #tpu.dot_dimension_numbers<[1], [0], [0], [1], [0, 0, 1, 1], [], []>} : vector<32x8xf32>, vector<8x32xf32>, vector<32x32xf32> -> vector<32x32xf32>
    %197 = arith.addf %178, %196 : vector<32x32xf32>
    %198 = vector.extract_strided_slice %137 {offsets = [0, 0, 24], sizes = [4, 8, 8], strides = [1, 1, 1]} : vector<4x8x32xf32> to vector<4x8x8xf32>
    %199 = vector.extract_strided_slice %139 {offsets = [0, 0, 24], sizes = [4, 8, 8], strides = [1, 1, 1]} : vector<4x8x32xf32> to vector<4x8x8xf32>
    %200 = vector.extract_strided_slice %141 {offsets = [0, 0, 24], sizes = [4, 8, 8], strides = [1, 1, 1]} : vector<4x8x32xf32> to vector<4x8x8xf32>
    "tpu.trace_start"() <{level = 10 : i32, message = "bqd,bkd->bqk"}> : () -> ()
    %cst_87 = arith.constant dense<0.000000e+00> : vector<4x8x8xf32>
    %201 = tpu.matmul %198, %199, %cst_87 {dimension_numbers = #tpu.dot_dimension_numbers<[2], [2], [1], [1], [0, 0, 0, 1, 1, 1], [0], [0]>} : vector<4x8x8xf32>, vector<4x8x8xf32>, vector<4x8x8xf32> -> vector<4x8x8xf32>
    "tpu.trace_stop"() : () -> ()
    %cst_88 = arith.constant dense<0xFF800000> : vector<4x8xf32>
    %202 = vector.multi_reduction <maximumf>, %201, %cst_88 [2] : vector<4x8x8xf32> to vector<4x8xf32>
    %203 = vector.shape_cast %202 : vector<4x8xf32> to vector<4x8x1xf32>
    %204 = vector.broadcast %203 : vector<4x8x1xf32> to vector<4x8x8xf32>
    %205 = arith.subf %201, %204 : vector<4x8x8xf32>
    %206 = math.exp %205 : vector<4x8x8xf32>
    %cst_89 = arith.constant dense<0.000000e+00> : vector<4x8xf32>
    %207 = vector.multi_reduction <add>, %206, %cst_89 [2] : vector<4x8x8xf32> to vector<4x8xf32>
    %208 = vector.shape_cast %207 : vector<4x8xf32> to vector<4x8x1xf32>
    %209 = tpu.reciprocal %208 {approx = true} : vector<4x8x1xf32> -> vector<4x8x1xf32>
    %210 = vector.broadcast %209 : vector<4x8x1xf32> to vector<4x8x8xf32>
    %211 = arith.mulf %206, %210 : vector<4x8x8xf32>
    "tpu.trace_start"() <{level = 10 : i32, message = "bqk,bkd->bqd"}> : () -> ()
    %cst_90 = arith.constant dense<0.000000e+00> : vector<4x8x8xf32>
    %212 = tpu.matmul %211, %200, %cst_90 {dimension_numbers = #tpu.dot_dimension_numbers<[2], [1], [1], [2], [0, 0, 0, 1, 1, 2], [0], [0]>} : vector<4x8x8xf32>, vector<4x8x8xf32>, vector<4x8x8xf32> -> vector<4x8x8xf32>
    "tpu.trace_stop"() : () -> ()
    %213 = vector.shape_cast %212 : vector<4x8x8xf32> to vector<32x8xf32>
    %214 = vector.extract_strided_slice %122 {offsets = [24, 0], sizes = [8, 32], strides = [1, 1]} : vector<32x32xf32> to vector<8x32xf32>
    %cst_91 = arith.constant dense<0.000000e+00> : vector<32x32xf32>
    %215 = tpu.matmul %213, %214, %cst_91 {dimension_numbers = #tpu.dot_dimension_numbers<[1], [0], [0], [1], [0, 0, 1, 1], [], []>} : vector<32x8xf32>, vector<8x32xf32>, vector<32x32xf32> -> vector<32x32xf32>
    %216 = arith.addf %197, %215 : vector<32x32xf32>
    %217 = arith.addf %116, %216 : vector<32x32xf32>
    %218 = vector.broadcast %124 : vector<1x32xf32> to vector<32x32xf32>
    %219 = arith.addf %217, %218 : vector<32x32xf32>
    %cst_92 = arith.constant dense<0.000000e+00> : vector<32x64xf32>
    %220 = tpu.matmul %219, %126, %cst_92 {dimension_numbers = #tpu.dot_dimension_numbers<[1], [0], [0], [1], [0, 0, 1, 1], [], []>} : vector<32x32xf32>, vector<32x64xf32>, vector<32x64xf32> -> vector<32x64xf32>
    %221 = vector.broadcast %128 : vector<1x64xf32> to vector<32x64xf32>
    %222 = arith.addf %220, %221 : vector<32x64xf32>
    %223 = arith.negf %222 : vector<32x64xf32>
    %224 = math.exp %223 : vector<32x64xf32>
    %cst_93 = arith.constant 1.000000e+00 : f32
    %225 = vector.broadcast %cst_93 : f32 to vector<32x64xf32>
    %226 = arith.addf %225, %224 : vector<32x64xf32>
    %227 = arith.divf %225, %226 : vector<32x64xf32>
    %228 = arith.mulf %222, %227 : vector<32x64xf32>
    %cst_94 = arith.constant dense<0.000000e+00> : vector<32x32xf32>
    %229 = tpu.matmul %228, %130, %cst_94 {dimension_numbers = #tpu.dot_dimension_numbers<[1], [0], [0], [1], [0, 0, 1, 1], [], []>} : vector<32x64xf32>, vector<64x32xf32>, vector<32x32xf32> -> vector<32x32xf32>
    %230 = vector.broadcast %132 : vector<1x32xf32> to vector<32x32xf32>
    %231 = arith.addf %229, %230 : vector<32x32xf32>
    %232 = arith.addf %219, %231 : vector<32x32xf32>
    %c0_95 = arith.constant 0 : index
    %c0_96 = arith.constant 0 : index
    %233 = vector.load %arg10[%c0_95, %c0_96] : memref<32x32xf32, #tpu.memory_space<vmem>>, vector<32x32xf32>
    tpu.vector_store %arg10[%c0_95, %c0_96], %232 {strides = array<i32>} : memref<32x32xf32, #tpu.memory_space<vmem>>, vector<32x32xf32>,
    return
  }
  func.func @transform_0(%arg0: i32) -> (i32, i32) {
    %c0_i32 = arith.constant 0 : i32
    %c0_i32_0 = arith.constant 0 : i32
    return %arg0, %c0_i32 : i32, i32
  }
  func.func @transform_1(%arg0: i32) -> (i32, i32, i32) {
    %c0_i32 = arith.constant 0 : i32
    %c0_i32_0 = arith.constant 0 : i32
    %c0_i32_1 = arith.constant 0 : i32
    %c0_i32_2 = arith.constant 0 : i32
    return %c0_i32, %c0_i32_0, %c0_i32_1 : i32, i32, i32
  }
  func.func @transform_2(%arg0: i32) -> (i32, i32, i32) {
    %c0_i32 = arith.constant 0 : i32
    %c0_i32_0 = arith.constant 0 : i32
    %c0_i32_1 = arith.constant 0 : i32
    %c0_i32_2 = arith.constant 0 : i32
    return %c0_i32, %c0_i32_0, %c0_i32_1 : i32, i32, i32
  }
  func.func @transform_3(%arg0: i32) -> (i32, i32, i32) {
    %c0_i32 = arith.constant 0 : i32
    %c0_i32_0 = arith.constant 0 : i32
    %c0_i32_1 = arith.constant 0 : i32
    %c0_i32_2 = arith.constant 0 : i32
    return %c0_i32, %c0_i32_0, %c0_i32_1 : i32, i32, i32
  }
  func.func @transform_4(%arg0: i32) -> (i32, i32, i32) {
    %c0_i32 = arith.constant 0 : i32
    %c0_i32_0 = arith.constant 0 : i32
    %c0_i32_1 = arith.constant 0 : i32
    %c0_i32_2 = arith.constant 0 : i32
    return %c0_i32, %c0_i32_0, %c0_i32_1 : i32, i32, i32
  }
  func.func @transform_5(%arg0: i32) -> (i32, i32, i32) {
    %c0_i32 = arith.constant 0 : i32
    %c0_i32_0 = arith.constant 0 : i32
    %c0_i32_1 = arith.constant 0 : i32
    %c0_i32_2 = arith.constant 0 : i32
    return %c0_i32, %c0_i32_0, %c0_i32_1 : i32, i32, i32
  }
  func.func @transform_6(%arg0: i32) -> (i32, i32, i32) {
    %c0_i32 = arith.constant 0 : i32
    %c0_i32_0 = arith.constant 0 : i32
    %c0_i32_1 = arith.constant 0 : i32
    %c0_i32_2 = arith.constant 0 : i32
    return %c0_i32, %c0_i32_0, %c0_i32_1 : i32, i32, i32
  }
  func.func @transform_7(%arg0: i32) -> (i32, i32, i32) {
    %c0_i32 = arith.constant 0 : i32
    %c0_i32_0 = arith.constant 0 : i32
    %c0_i32_1 = arith.constant 0 : i32
    %c0_i32_2 = arith.constant 0 : i32
    return %c0_i32, %c0_i32_0, %c0_i32_1 : i32, i32, i32
  }
  func.func @transform_8(%arg0: i32) -> (i32, i32, i32) {
    %c0_i32 = arith.constant 0 : i32
    %c0_i32_0 = arith.constant 0 : i32
    %c0_i32_1 = arith.constant 0 : i32
    %c0_i32_2 = arith.constant 0 : i32
    return %c0_i32, %c0_i32_0, %c0_i32_1 : i32, i32, i32
  }
  func.func @transform_9(%arg0: i32) -> (i32, i32) {
    %c0_i32 = arith.constant 0 : i32
    %c0_i32_0 = arith.constant 0 : i32
    return %arg0, %c0_i32 : i32, i32
  }
}

</mosaic_0001>

<llo_original>
// kernel: tpu_custom_call.1
$region0: #{tpu_custom_call.1}
  #allocation0 [shape = 'u32[]', space=smem, size = 0x4, offset = 0x4, fixed_abs, tag = 'smem constant byte address 0x4 - core index']
  #allocation1 [shape = 'u32[72,128]{1,0:T(1,128)}', space=vmem, size = 0x9000, scoped, tag = 'internal scratch']
  %s0 = inlined_call_operand.vmem [shape: f32[64,32], index: 0, kind: input, shape index: {}]
  %s1 = inlined_call_operand.vmem [shape: f32[2,32,96], index: 1, kind: input, shape index: {}]
  %s2 = inlined_call_operand.vmem [shape: f32[2,1,96], index: 2, kind: input, shape index: {}]
  %s3 = inlined_call_operand.vmem [shape: f32[2,32,32], index: 3, kind: input, shape index: {}]
  %s4 = inlined_call_operand.vmem [shape: f32[2,1,32], index: 4, kind: input, shape index: {}]
  %s5 = inlined_call_operand.vmem [shape: f32[2,32,64], index: 5, kind: input, shape index: {}]
  %s6 = inlined_call_operand.vmem [shape: f32[2,1,64], index: 6, kind: input, shape index: {}]
  %s7 = inlined_call_operand.vmem [shape: f32[2,64,32], index: 7, kind: input, shape index: {}]
  %s8 = inlined_call_operand.vmem [shape: f32[2,1,32], index: 8, kind: input, shape index: {}]
  %s9 = inlined_call_operand.vmem [shape: f32[64,32], index: 9, kind: output, shape index: {}]
  %s10 = sld [smem:[#allocation0]]
  $region69: #{tpu_custom_call.1} parent=0
    _
  %s12 = ssub.s32 1, %s10
  %s13 = scalar_select 0, %s12, %s10
  loop: start=0, step=1, limit=4
  $region2: #{tpu_custom_call.1} parent=0 // loop_pre_header
    _
  $region3: #{tpu_custom_call.1} parent=0 // loop_header
    %s15 = sphi 0, %s19
    %p16 = scmp.ge.s32.totalorder %s15, 4
    %s25 = sphi 0, %s27
    %s28 = sphi 0, %s25
    %s29 = sphi 0, %s28
    %s45 = sphi 0, %s29
    %s49 = sphi 0, %s49
    %s51 = sphi 0, %s49
    %s52 = sphi 0, %s51
    %s66 = sphi 0, %s52
    %s70 = sphi 0, %s70
    %s72 = sphi 0, %s70
    %s73 = sphi 0, %s72
    %s87 = sphi 0, %s73
    %s91 = sphi 0, %s91
    %s93 = sphi 0, %s91
    %s94 = sphi 0, %s93
    %s108 = sphi 0, %s94
    %s112 = sphi 0, %s112
    %s114 = sphi 0, %s112
    %s115 = sphi 0, %s114
    %s129 = sphi 0, %s115
    %s133 = sphi 0, %s133
    %s135 = sphi 0, %s133
    %s136 = sphi 0, %s135
    %s150 = sphi 0, %s136
    %s154 = sphi 0, %s154
    %s156 = sphi 0, %s154
    %s157 = sphi 0, %s156
    %s171 = sphi 0, %s157
    %s175 = sphi 0, %s175
    %s177 = sphi 0, %s175
    %s178 = sphi 0, %s177
    %s192 = sphi 0, %s178
    %s196 = sphi 0, %s196
    %s198 = sphi 0, %s196
    %s199 = sphi 0, %s198
    %s213 = sphi 0, %s199
    %s219 = sphi 0, %s221
    %s222 = sphi 0, %s219
    %s223 = sphi 0, %s222
    %s239 = sphi 0, %s223
  $region4: #{tpu_custom_call.1} parent=0 // loop_header_branch
    %18 = sbr.rel (%p16) target = $region8
  $region5: #{tpu_custom_call.1} parent=0 // loop_body
    %s20 = ssub.s32 %s15, 1
    %s21 = ssub.s32 %s15, 2
    %s22 = sadd.s32 %s15, 1
    %s23 = ssub.s32 %s15, %s22
    %p24 = scmp.eq.s32.totalorder %s23, 0
    %s26 = sadd.s32 %s25, 1
    %s27 = scalar_select %p24, %s25, %s26
    %p30 = pneg %p24
    %p31 = scmp.eq.s32.totalorder %s15, 1
    %p32 = por %p30, %p31
    %p33 = scmp.ne.s32.totalorder %s25, %s28
    %p34 = scmp.eq.s32.totalorder %s15, 0
    %p35 = por %p33, %p34
    %p36 = scmp.ne.s32.totalorder %s25, %s28
    %p37 = scmp.eq.s32.totalorder %s20, 1
    %p38 = por %p36, %p37
    %p39 = scmp.ne.s32.totalorder %s28, %s29
    %p40 = scmp.eq.s32.totalorder %s20, 0
    %p41 = por %p39, %p40
    %p42 = scmp.ne.s32.totalorder %s28, %s29
    %p43 = scmp.eq.s32.totalorder %s21, 1
    %p44 = por %p42, %p43
    %p46 = scmp.ne.s32.totalorder %s29, %s45
    %p47 = scmp.eq.s32.totalorder %s21, 0
    %p48 = por %p46, %p47
    %s50 = sadd.s32 %s49, 1
    %p53 = scmp.eq.s32.totalorder %s15, 1
    %p54 = scmp.ne.s32.totalorder %s49, %s51
    %p55 = scmp.eq.s32.totalorder %s15, 0
    %p56 = por %p54, %p55
    %p57 = scmp.ne.s32.totalorder %s49, %s51
    %p58 = scmp.eq.s32.totalorder %s20, 1
    %p59 = por %p57, %p58
    %p60 = scmp.ne.s32.totalorder %s51, %s52
    %p61 = scmp.eq.s32.totalorder %s20, 0
    %p62 = por %p60, %p61
    %p63 = scmp.ne.s32.totalorder %s51, %s52
    %p64 = scmp.eq.s32.totalorder %s21, 1
    %p65 = por %p63, %p64
    %p67 = scmp.ne.s32.totalorder %s52, %s66
    %p68 = scmp.eq.s32.totalorder %s21, 0
    %p69 = por %p67, %p68
    %s71 = sadd.s32 %s70, 1
    %p74 = scmp.eq.s32.totalorder %s15, 1
    %p75 = scmp.ne.s32.totalorder %s70, %s72
    %p76 = scmp.eq.s32.totalorder %s15, 0
    %p77 = por %p75, %p76
    %p78 = scmp.ne.s32.totalorder %s70, %s72
    %p79 = scmp.eq.s32.totalorder %s20, 1
    %p80 = por %p78, %p79
    %p81 = scmp.ne.s32.totalorder %s72, %s73
    %p82 = scmp.eq.s32.totalorder %s20, 0
    %p83 = por %p81, %p82
    %p84 = scmp.ne.s32.totalorder %s72, %s73
    %p85 = scmp.eq.s32.totalorder %s21, 1
    %p86 = por %p84, %p85
    %p88 = scmp.ne.s32.totalorder %s73, %s87
    %p89 = scmp.eq.s32.totalorder %s21, 0
    %p90 = por %p88, %p89
    %s92 = sadd.s32 %s91, 1
    %p95 = scmp.eq.s32.totalorder %s15, 1
    %p96 = scmp.ne.s32.totalorder %s91, %s93
    %p97 = scmp.eq.s32.totalorder %s15, 0
    %p98 = por %p96, %p97
    %p99 = scmp.ne.s32.totalorder %s91, %s93
    %p100 = scmp.eq.s32.totalorder %s20, 1
    %p101 = por %p99, %p100
    %p102 = scmp.ne.s32.totalorder %s93, %s94
    %p103 = scmp.eq.s32.totalorder %s20, 0
    %p104 = por %p102, %p103
    %p105 = scmp.ne.s32.totalorder %s93, %s94
    %p106 = scmp.eq.s32.totalorder %s21, 1
    %p107 = por %p105, %p106
    %p109 = scmp.ne.s32.totalorder %s94, %s108
    %p110 = scmp.eq.s32.totalorder %s21, 0
    %p111 = por %p109, %p110
    %s113 = sadd.s32 %s112, 1
    %p116 = scmp.eq.s32.totalorder %s15, 1
    %p117 = scmp.ne.s32.totalorder %s112, %s114
    %p118 = scmp.eq.s32.totalorder %s15, 0
    %p119 = por %p117, %p118
    %p120 = scmp.ne.s32.totalorder %s112, %s114
    %p121 = scmp.eq.s32.totalorder %s20, 1
    %p122 = por %p120, %p121
    %p123 = scmp.ne.s32.totalorder %s114, %s115
    %p124 = scmp.eq.s32.totalorder %s20, 0
    %p125 = por %p123, %p124
    %p126 = scmp.ne.s32.totalorder %s114, %s115
    %p127 = scmp.eq.s32.totalorder %s21, 1
    %p128 = por %p126, %p127
    %p130 = scmp.ne.s32.totalorder %s115, %s129
    %p131 = scmp.eq.s32.totalorder %s21, 0
    %p132 = por %p130, %p131
    %s134 = sadd.s32 %s133, 1
    %p137 = scmp.eq.s32.totalorder %s15, 1
    %p138 = scmp.ne.s32.totalorder %s133, %s135
    %p139 = scmp.eq.s32.totalorder %s15, 0
    %p140 = por %p138, %p139
    %p141 = scmp.ne.s32.totalorder %s133, %s135
    %p142 = scmp.eq.s32.totalorder %s20, 1
    %p143 = por %p141, %p142
    %p144 = scmp.ne.s32.totalorder %s135, %s136
    %p145 = scmp.eq.s32.totalorder %s20, 0
    %p146 = por %p144, %p145
    %p147 = scmp.ne.s32.totalorder %s135, %s136
    %p148 = scmp.eq.s32.totalorder %s21, 1
    %p149 = por %p147, %p148
    %p151 = scmp.ne.s32.totalorder %s136, %s150
    %p152 = scmp.eq.s32.totalorder %s21, 0
    %p153 = por %p151, %p152
    %s155 = sadd.s32 %s154, 1
    %p158 = scmp.eq.s32.totalorder %s15, 1
    %p159 = scmp.ne.s32.totalorder %s154, %s156
    %p160 = scmp.eq.s32.totalorder %s15, 0
    %p161 = por %p159, %p160
    %p162 = scmp.ne.s32.totalorder %s154, %s156
    %p163 = scmp.eq.s32.totalorder %s20, 1
    %p164 = por %p162, %p163
    %p165 = scmp.ne.s32.totalorder %s156, %s157
    %p166 = scmp.eq.s32.totalorder %s20, 0
    %p167 = por %p165, %p166
    %p168 = scmp.ne.s32.totalorder %s156, %s157
    %p169 = scmp.eq.s32.totalorder %s21, 1
    %p170 = por %p168, %p169
    %p172 = scmp.ne.s32.totalorder %s157, %s171
    %p173 = scmp.eq.s32.totalorder %s21, 0
    %p174 = por %p172, %p173
    %s176 = sadd.s32 %s175, 1
    %p179 = scmp.eq.s32.totalorder %s15, 1
    %p180 = scmp.ne.s32.totalorder %s175, %s177
    %p181 = scmp.eq.s32.totalorder %s15, 0
    %p182 = por %p180, %p181
    %p183 = scmp.ne.s32.totalorder %s175, %s177
    %p184 = scmp.eq.s32.totalorder %s20, 1
    %p185 = por %p183, %p184
    %p186 = scmp.ne.s32.totalorder %s177, %s178
    %p187 = scmp.eq.s32.totalorder %s20, 0
    %p188 = por %p186, %p187
    %p189 = scmp.ne.s32.totalorder %s177, %s178
    %p190 = scmp.eq.s32.totalorder %s21, 1
    %p191 = por %p189, %p190
    %p193 = scmp.ne.s32.totalorder %s178, %s192
    %p194 = scmp.eq.s32.totalorder %s21, 0
    %p195 = por %p193, %p194
    %s197 = sadd.s32 %s196, 1
    %p200 = scmp.eq.s32.totalorder %s15, 1
    %p201 = scmp.ne.s32.totalorder %s196, %s198
    %p202 = scmp.eq.s32.totalorder %s15, 0
    %p203 = por %p201, %p202
    %p204 = scmp.ne.s32.totalorder %s196, %s198
    %p205 = scmp.eq.s32.totalorder %s20, 1
    %p206 = por %p204, %p205
    %p207 = scmp.ne.s32.totalorder %s198, %s199
    %p208 = scmp.eq.s32.totalorder %s20, 0
    %p209 = por %p207, %p208
    %p210 = scmp.ne.s32.totalorder %s198, %s199
    %p211 = scmp.eq.s32.totalorder %s21, 1
    %p212 = por %p210, %p211
    %p214 = scmp.ne.s32.totalorder %s199, %s213
    %p215 = scmp.eq.s32.totalorder %s21, 0
    %p216 = por %p214, %p215
    %s217 = ssub.s32 %s15, %s22
    %p218 = scmp.eq.s32.totalorder %s217, 0
    %s220 = sadd.s32 %s219, 1
    %s221 = scalar_select %p218, %s219, %s220
    %p224 = pneg %p218
    %p225 = scmp.eq.s32.totalorder %s15, 1
    %p226 = por %p224, %p225
    %p227 = scmp.ne.s32.totalorder %s219, %s222
    %p228 = scmp.eq.s32.totalorder %s15, 0
    %p229 = por %p227, %p228
    %p230 = scmp.ne.s32.totalorder %s219, %s222
    %p231 = scmp.eq.s32.totalorder %s20, 1
    %p232 = por %p230, %p231
    %p233 = scmp.ne.s32.totalorder %s222, %s223
    %p234 = scmp.eq.s32.totalorder %s20, 0
    %p235 = por %p233, %p234
    %p236 = scmp.ne.s32.totalorder %s222, %s223
    %p237 = scmp.eq.s32.totalorder %s21, 1
    %p238 = por %p236, %p237
    %p240 = scmp.ne.s32.totalorder %s223, %s239
    %p241 = scmp.eq.s32.totalorder %s21, 0
    %p242 = por %p240, %p241
    %p243 = scmp.le.s32.totalorder 1, %s15
    %p244 = scmp.lt.s32.totalorder %s15, 3
    %p245 = pnand %p243, %p244
    %p246 = pneg %p245
    // Predicated region
    $region9: #{tpu_custom_call.1} parent=5 // pred_check
      _
    $region10: #{tpu_custom_call.1} parent=5 // pred_check_branch
      %248 = sbr.rel (%p245) target = $region12
    $region11: #{tpu_custom_call.1} parent=5 // pred_region
      %s249 = ssub.s32 %s15, 1
      // Predicated region
      $region13: #{tpu_custom_call.1} parent=11 // pred_check
        %p250 = pneg %p62
      $region14: #{tpu_custom_call.1} parent=11 // pred_check_branch
        %252 = sbr.rel (%p250) target = $region16
      $region15: #{tpu_custom_call.1} parent=11 // pred_region
        _
      $region16: #{tpu_custom_call.1} parent=11 // pred_fallthru
        _
      // Predicated region
      $region17: #{tpu_custom_call.1} parent=11 // pred_check
        %p253 = pneg %p83
      $region18: #{tpu_custom_call.1} parent=11 // pred_check_branch
        %255 = sbr.rel (%p253) target = $region20
      $region19: #{tpu_custom_call.1} parent=11 // pred_region
        _
      $region20: #{tpu_custom_call.1} parent=11 // pred_fallthru
        _
      // Predicated region
      $region21: #{tpu_custom_call.1} parent=11 // pred_check
        %p256 = pneg %p104
      $region22: #{tpu_custom_call.1} parent=11 // pred_check_branch
        %258 = sbr.rel (%p256) target = $region24
      $region23: #{tpu_custom_call.1} parent=11 // pred_region
        _
      $region24: #{tpu_custom_call.1} parent=11 // pred_fallthru
        _
      // Predicated region
      $region25: #{tpu_custom_call.1} parent=11 // pred_check
        %p259 = pneg %p125
      $region26: #{tpu_custom_call.1} parent=11 // pred_check_branch
        %261 = sbr.rel (%p259) target = $region28
      $region27: #{tpu_custom_call.1} parent=11 // pred_region
        _
      $region28: #{tpu_custom_call.1} parent=11 // pred_fallthru
        _
      // Predicated region
      $region29: #{tpu_custom_call.1} parent=11 // pred_check
        %p262 = pneg %p146
      $region30: #{tpu_custom_call.1} parent=11 // pred_check_branch
        %264 = sbr.rel (%p262) target = $region32
      $region31: #{tpu_custom_call.1} parent=11 // pred_region
        _
      $region32: #{tpu_custom_call.1} parent=11 // pred_fallthru
        _
      // Predicated region
      $region33: #{tpu_custom_call.1} parent=11 // pred_check
        %p265 = pneg %p167
      $region34: #{tpu_custom_call.1} parent=11 // pred_check_branch
        %267 = sbr.rel (%p265) target = $region36
      $region35: #{tpu_custom_call.1} parent=11 // pred_region
        _
      $region36: #{tpu_custom_call.1} parent=11 // pred_fallthru
        _
      // Predicated region
      $region37: #{tpu_custom_call.1} parent=11 // pred_check
        %p268 = pneg %p188
      $region38: #{tpu_custom_call.1} parent=11 // pred_check_branch
        %270 = sbr.rel (%p268) target = $region40
      $region39: #{tpu_custom_call.1} parent=11 // pred_region
        _
      $region40: #{tpu_custom_call.1} parent=11 // pred_fallthru
        _
      // Predicated region
      $region41: #{tpu_custom_call.1} parent=11 // pred_check
        %p271 = pneg %p209
      $region42: #{tpu_custom_call.1} parent=11 // pred_check_branch
        %273 = sbr.rel (%p271) target = $region44
      $region43: #{tpu_custom_call.1} parent=11 // pred_region
        _
      $region44: #{tpu_custom_call.1} parent=11 // pred_fallthru
        _
    $region12: #{tpu_custom_call.1} parent=5 // pred_fallthru
      _
    %p274 = scmp.lt.s32.totalorder %s15, 2
    // Predicated region
    $region45: #{tpu_custom_call.1} parent=5 // pred_check
      %p275 = pneg %p274
    $region46: #{tpu_custom_call.1} parent=5 // pred_check_branch
      %277 = sbr.rel (%p275) target = $region48
    $region47: #{tpu_custom_call.1} parent=5 // pred_region
      // Predicated region
      $region49: #{tpu_custom_call.1} parent=47 // pred_check
        %p278 = pneg %p35
      $region50: #{tpu_custom_call.1} parent=47 // pred_check_branch
        %280 = sbr.rel (%p278) target = $region52
      $region51: #{tpu_custom_call.1} parent=47 // pred_region
        %s281 = smul.u32 4, %s15
        %p282 = scmp.lt.s32.totalorder %s281, 7
        %s283 = scalar_select %p282, %s281, 7
        %s284 = smul.addr %s283, 8
        %s285 = scalar_lea.vmem %s0, %s284
        %s286 = smul.u32 4, %s15
      $region52: #{tpu_custom_call.1} parent=47 // pred_fallthru
        _
    $region48: #{tpu_custom_call.1} parent=5 // pred_fallthru
      _
    %p287 = scmp.le.s32.totalorder 1, %s15
    %p288 = scmp.lt.s32.totalorder %s15, 3
    %p289 = pnand %p287, %p288
    %p290 = pneg %p289
    // Predicated region
    $region53: #{tpu_custom_call.1} parent=5 // pred_check
      _
    $region54: #{tpu_custom_call.1} parent=5 // pred_check_branch
      %292 = sbr.rel (%p289) target = $region56
    $region55: #{tpu_custom_call.1} parent=5 // pred_region
      %s293 = ssub.s32 %s15, 1
      %s294 = smul.u32 4, %s20
      %p295 = scmp.lt.s32.totalorder %s294, 7
      %s296 = scalar_select %p295, %s294, 7
      %s297 = smul.addr %s296, 8
      %s298 = scalar_lea.vmem %s0, %s297
      %p299 = pneg %p41
      %p300 = pneg %p38
      %p301 = pneg %p62
      %p302 = pneg %p59
      %p303 = pneg %p83
      %p304 = pneg %p80
      %p305 = pneg %p104
      %p306 = pneg %p101
      %p307 = pneg %p125
      %p308 = pneg %p122
      %p309 = pneg %p146
      %p310 = pneg %p143
      %p311 = pneg %p167
      %p312 = pneg %p164
      %p313 = pneg %p188
      %p314 = pneg %p185
      %p315 = pneg %p209
      %p316 = pneg %p206
      %p317 = pneg %p235
      %p318 = pneg %p232
      %s319 = smul.u32 4, %s20
      %p320 = scmp.lt.s32.totalorder %s319, 7
      %s321 = scalar_select %p320, %s319, 7
      %s322 = smul.addr %s321, 8
      %s323 = scalar_lea.vmem %s9, %s322
      %s324 = smul.u32 4, %s20
      %p325 = scmp.lt.s32.totalorder %s324, 7
      %s326 = scalar_select %p325, %s324, 7
      %s327 = smul.addr %s326, 8
      %s328 = scalar_lea.vmem %s0, %s327
      %s329 = smul.u32 4, %s20
      %s330 = smul.u32 4, %s20
      %p331 = scmp.lt.s32.totalorder %s330, 7
      %s332 = scalar_select %p331, %s330, 7
      %s333 = smul.addr %s332, 8
      %s334 = scalar_lea.vmem %s9, %s333
      %s335 = smul.u32 4, %s20
      %v336 = vld [vmem:[%s328] sm:$0xff]
      %v337 = vld [vmem:[%s328 + $0x8] sm:$0xff]
      %v338 = vld [vmem:[%s328 + $0x10] sm:$0xff]
      %v339 = vld [vmem:[%s328 + $0x18] sm:$0xff]
      %v340 = vld [vmem:[%s1] sm:$0xff]
      %v341 = vld [vmem:[%s1 + $0x8] sm:$0xff]
      %v342 = vld [vmem:[%s1 + $0x10] sm:$0xff]
      %v343 = vld [vmem:[%s1 + $0x18] sm:$0xff]
      %v344 = vld [vmem:[%s2] sm:$0x1]
      %v345 = vld [vmem:[%s3] sm:$0xff]
      %v346 = vld [vmem:[%s3 + $0x8] sm:$0xff]
      %v347 = vld [vmem:[%s3 + $0x10] sm:$0xff]
      %v348 = vld [vmem:[%s3 + $0x18] sm:$0xff]
      %v349 = vld [vmem:[%s4] sm:$0x1]
      %v350 = vld [vmem:[%s5] sm:$0xff]
      %v351 = vld [vmem:[%s5 + $0x8] sm:$0xff]
      %v352 = vld [vmem:[%s5 + $0x10] sm:$0xff]
      %v353 = vld [vmem:[%s5 + $0x18] sm:$0xff]
      %v354 = vld [vmem:[%s6] sm:$0x1]
      %v355 = vld [vmem:[%s7] sm:$0xff]
      %v356 = vld [vmem:[%s7 + $0x8] sm:$0xff]
      %v357 = vld [vmem:[%s7 + $0x10] sm:$0xff]
      %v358 = vld [vmem:[%s7 + $0x18] sm:$0xff]
      %v359 = vld [vmem:[%s7 + $0x20] sm:$0xff]
      %v360 = vld [vmem:[%s7 + $0x28] sm:$0xff]
      %v361 = vld [vmem:[%s7 + $0x30] sm:$0xff]
      %v362 = vld [vmem:[%s7 + $0x38] sm:$0xff]
      %v363 = vld [vmem:[%s8] sm:$0x1]
      %v365 = vperm.slane %v344, 0
      %vm367 = vcmask 261120
      %v369 = vsel %vm367, %v336, 0
      %v372 = vsel %vm367, %v337, 0
      %v375 = vsel %vm367, %v338, 0
      %v378 = vsel %vm367, %v339, 0
      %380 = vmatpush.msra.mxu0 0.0
      %381 = vmatpush.msra.mxu0 0.0
      %382 = vmatpush.msra.mxu0 0.0
      %383 = vmatpush.msra.mxu0 0.0
      %384 = vmatpush.msra.mxu0 0.0
      %385 = vmatpush.msra.mxu0 0.0
      %386 = vmatpush.msra.mxu0 0.0
      %387 = vmatpush.msra.mxu0 0.0
      %388 = vmatpush.msra.mxu0 0.0
      %389 = vmatpush.msra.mxu0 0.0
      %390 = vmatpush.msra.mxu0 0.0
      %391 = vmatpush.msra.mxu0 0.0
      %392 = vmatpush.msra.mxu0 %v343
      %393 = vmatpush.msra.mxu0 %v342
      %394 = vmatpush.msra.mxu0 %v341
      %395 = vmatpush.msra.mxu0 %v340
      %396 = vmatmul.f32.gmra.mxu0 %v369
      %v397 = vpop.f32.mrf.mxu0
      %v398 = vadd.f32 %v365, %v397
      %399 = vmatmul.f32.gmra.mxu0 %v372
      %v400 = vpop.f32.mrf.mxu0
      %v401 = vadd.f32 %v365, %v400
      %402 = vmatmul.f32.gmra.mxu0 %v375
      %v403 = vpop.f32.mrf.mxu0
      %v404 = vadd.f32 %v365, %v403
      %405 = vmatmul.f32.gmra.mxu0 %v378
      %v406 = vpop.f32.mrf.mxu0
      %v407 = vadd.f32 %v365, %v406
      %408 = vdwg.mxu0
      %410 = vrot.lane.b32.xlu0 %v398, 96
      %v411 = vpop.permute.xlu0 %410
      %vm412 = vcmask 64512
      %v413 = vsel %vm412, %v398, 0
      %v415 = vsel %vm412, %v411, 0
      %417 = vmatpush.xpose.msra.mxu0 0.0
      %418 = vmatpush.xpose.msra.mxu0 0.0
      %419 = vmatpush.xpose.msra.mxu0 0.0
      %420 = vmatpush.xpose.msra.mxu0 0.0
      %421 = vmatpush.xpose.msra.mxu0 0.0
      %422 = vmatpush.xpose.msra.mxu0 0.0
      %423 = vmatpush.xpose.msra.mxu0 0.0
      %424 = vmatpush.xpose.msra.mxu0 0.0
      %425 = vmatpush.xpose.msra.mxu0 0.0
      %426 = vmatpush.xpose.msra.mxu0 0.0
      %427 = vmatpush.xpose.msra.mxu0 0.0
      %428 = vmatpush.xpose.msra.mxu0 0.0
      %429 = vmatpush.xpose.msra.mxu0 0.0
      %430 = vmatpush.xpose.msra.mxu0 0.0
      %431 = vmatpush.xpose.msra.mxu0 0.0
      %432 = vmatpush.xpose.msra.mxu0 %v415
      %433 = vmatmul.f32.gmra.mxu0 %v413
      %v434 = vpop.f32.mrf.mxu0
      %v435 = vadd.f32 0.0, %v434
      %436 = vdwg.mxu0
      %438 = vrot.lane.b32.xlu0 %v401, 96
      %v439 = vpop.permute.xlu0 %438
      %v440 = vsel %vm412, %v401, 0
      %v442 = vsel %vm412, %v439, 0
      %444 = vmatpush.xpose.msra.mxu0 0.0
      %445 = vmatpush.xpose.msra.mxu0 0.0
      %446 = vmatpush.xpose.msra.mxu0 0.0
      %447 = vmatpush.xpose.msra.mxu0 0.0
      %448 = vmatpush.xpose.msra.mxu0 0.0
      %449 = vmatpush.xpose.msra.mxu0 0.0
      %450 = vmatpush.xpose.msra.mxu0 0.0
      %451 = vmatpush.xpose.msra.mxu0 0.0
      %452 = vmatpush.xpose.msra.mxu0 0.0
      %453 = vmatpush.xpose.msra.mxu0 0.0
      %454 = vmatpush.xpose.msra.mxu0 0.0
      %455 = vmatpush.xpose.msra.mxu0 0.0
      %456 = vmatpush.xpose.msra.mxu0 0.0
      %457 = vmatpush.xpose.msra.mxu0 0.0
      %458 = vmatpush.xpose.msra.mxu0 0.0
      %459 = vmatpush.xpose.msra.mxu0 %v442
      %460 = vmatmul.f32.gmra.mxu0 %v440
      %v461 = vpop.f32.mrf.mxu0
      %v462 = vadd.f32 0.0, %v461
      %463 = vdwg.mxu0
      %465 = vrot.lane.b32.xlu0 %v404, 96
      %v466 = vpop.permute.xlu0 %465
      %v467 = vsel %vm412, %v404, 0
      %v469 = vsel %vm412, %v466, 0
      %471 = vmatpush.xpose.msra.mxu0 0.0
      %472 = vmatpush.xpose.msra.mxu0 0.0
      %473 = vmatpush.xpose.msra.mxu0 0.0
      %474 = vmatpush.xpose.msra.mxu0 0.0
      %475 = vmatpush.xpose.msra.mxu0 0.0
      %476 = vmatpush.xpose.msra.mxu0 0.0
      %477 = vmatpush.xpose.msra.mxu0 0.0
      %478 = vmatpush.xpose.msra.mxu0 0.0
      %479 = vmatpush.xpose.msra.mxu0 0.0
      %480 = vmatpush.xpose.msra.mxu0 0.0
      %481 = vmatpush.xpose.msra.mxu0 0.0
      %482 = vmatpush.xpose.msra.mxu0 0.0
      %483 = vmatpush.xpose.msra.mxu0 0.0
      %484 = vmatpush.xpose.msra.mxu0 0.0
      %485 = vmatpush.xpose.msra.mxu0 0.0
      %486 = vmatpush.xpose.msra.mxu0 %v469
      %487 = vmatmul.f32.gmra.mxu0 %v467
      %v488 = vpop.f32.mrf.mxu0
      %v489 = vadd.f32 0.0, %v488
      %490 = vdwg.mxu0
      %492 = vrot.lane.b32.xlu0 %v407, 96
      %v493 = vpop.permute.xlu0 %492
      %v494 = vsel %vm412, %v407, 0
      %v496 = vsel %vm412, %v493, 0
      %498 = vmatpush.xpose.msra.mxu0 0.0
      %499 = vmatpush.xpose.msra.mxu0 0.0
      %500 = vmatpush.xpose.msra.mxu0 0.0
      %501 = vmatpush.xpose.msra.mxu0 0.0
      %502 = vmatpush.xpose.msra.mxu0 0.0
      %503 = vmatpush.xpose.msra.mxu0 0.0
      %504 = vmatpush.xpose.msra.mxu0 0.0
      %505 = vmatpush.xpose.msra.mxu0 0.0
      %506 = vmatpush.xpose.msra.mxu0 0.0
      %507 = vmatpush.xpose.msra.mxu0 0.0
      %508 = vmatpush.xpose.msra.mxu0 0.0
      %509 = vmatpush.xpose.msra.mxu0 0.0
      %510 = vmatpush.xpose.msra.mxu0 0.0
      %511 = vmatpush.xpose.msra.mxu0 0.0
      %512 = vmatpush.xpose.msra.mxu0 0.0
      %513 = vmatpush.xpose.msra.mxu0 %v496
      %514 = vmatmul.f32.gmra.mxu0 %v494
      %v515 = vpop.f32.mrf.mxu0
      %v516 = vadd.f32 0.0, %v515
      %517 = vdwg.mxu0
      %v518 = vsel %vm412, %v435, -inf
      %519 = vmax.xlane.f32.xlu0 %v518
      %v520 = vpop.xlane.xlu0 %519
      %v521 = vsel %vm412, %v462, -inf
      %522 = vmax.xlane.f32.xlu0 %v521
      %v523 = vpop.xlane.xlu0 %522
      %v524 = vsel %vm412, %v489, -inf
      %525 = vmax.xlane.f32.xlu0 %v524
      %v526 = vpop.xlane.xlu0 %525
      %v527 = vsel %vm412, %v516, -inf
      %528 = vmax.xlane.f32.xlu0 %v527
      %v529 = vpop.xlane.xlu0 %528
      %v530 = vsub.f32 %v435, %v520
      %v531 = vsub.f32 %v462, %v523
      %v532 = vsub.f32 %v489, %v526
      %v533 = vsub.f32 %v516, %v529
      %v534 = vmul.f32 %v530, 1.442695
      %v535 = vpow.pop %v534
      %v536 = vmul.f32 %v531, 1.442695
      %v537 = vpow.pop %v536
      %v538 = vmul.f32 %v532, 1.442695
      %v539 = vpow.pop %v538
      %v540 = vmul.f32 %v533, 1.442695
      %v541 = vpow.pop %v540
      %v542 = vsel %vm412, %v535, 0.0
      %543 = vadd.xlane.f32.xlu0 %v542
      %v544 = vpop.xlane.xlu0 %543
      %v545 = vsel %vm412, %v537, 0.0
      %546 = vadd.xlane.f32.xlu0 %v545
      %v547 = vpop.xlane.xlu0 %546
      %v548 = vsel %vm412, %v539, 0.0
      %549 = vadd.xlane.f32.xlu0 %v548
      %v550 = vpop.xlane.xlu0 %549
      %v551 = vsel %vm412, %v541, 0.0
      %552 = vadd.xlane.f32.xlu0 %v551
      %v553 = vpop.xlane.xlu0 %552
      %v554 = vrcp.pop %v544
      %v555 = vrcp.pop %v547
      %v556 = vrcp.pop %v550
      %v557 = vrcp.pop %v553
      %v558 = vmul.f32 %v535, %v554
      %v559 = vmul.f32 %v537, %v555
      %v560 = vmul.f32 %v539, %v556
      %v561 = vmul.f32 %v541, %v557
      %562 = vrot.lane.b32.xlu0 %v398, 64
      %v563 = vpop.permute.xlu0 %562
      %v566 = vsel %vm412, %v558, 0
      %568 = vmatpush.msra.mxu0 0.0
      %569 = vmatpush.msra.mxu0 0.0
      %570 = vmatpush.msra.mxu0 0.0
      %571 = vmatpush.msra.mxu0 0.0
      %572 = vmatpush.msra.mxu0 0.0
      %573 = vmatpush.msra.mxu0 0.0
      %574 = vmatpush.msra.mxu0 0.0
      %575 = vmatpush.msra.mxu0 0.0
      %576 = vmatpush.msra.mxu0 0.0
      %577 = vmatpush.msra.mxu0 0.0
      %578 = vmatpush.msra.mxu0 0.0
      %579 = vmatpush.msra.mxu0 0.0
      %580 = vmatpush.msra.mxu0 0.0
      %581 = vmatpush.msra.mxu0 0.0
      %582 = vmatpush.msra.mxu0 0.0
      %583 = vmatpush.msra.mxu0 %v563
      %584 = vmatmul.f32.gmra.mxu0 %v566
      %v585 = vpop.f32.mrf.mxu0
      %v586 = vadd.f32 0.0, %v585
      %587 = vdwg.mxu0
      %588 = vrot.lane.b32.xlu0 %v401, 64
      %v589 = vpop.permute.xlu0 %588
      %v592 = vsel %vm412, %v559, 0
      %594 = vmatpush.msra.mxu0 0.0
      %595 = vmatpush.msra.mxu0 0.0
      %596 = vmatpush.msra.mxu0 0.0
      %597 = vmatpush.msra.mxu0 0.0
      %598 = vmatpush.msra.mxu0 0.0
      %599 = vmatpush.msra.mxu0 0.0
      %600 = vmatpush.msra.mxu0 0.0
      %601 = vmatpush.msra.mxu0 0.0
      %602 = vmatpush.msra.mxu0 0.0
      %603 = vmatpush.msra.mxu0 0.0
      %604 = vmatpush.msra.mxu0 0.0
      %605 = vmatpush.msra.mxu0 0.0
      %606 = vmatpush.msra.mxu0 0.0
      %607 = vmatpush.msra.mxu0 0.0
      %608 = vmatpush.msra.mxu0 0.0
      %609 = vmatpush.msra.mxu0 %v589
      %610 = vmatmul.f32.gmra.mxu0 %v592
      %v611 = vpop.f32.mrf.mxu0
      %v612 = vadd.f32 0.0, %v611
      %613 = vdwg.mxu0
      %614 = vrot.lane.b32.xlu0 %v404, 64
      %v615 = vpop.permute.xlu0 %614
      %v618 = vsel %vm412, %v560, 0
      %620 = vmatpush.msra.mxu0 0.0
      %621 = vmatpush.msra.mxu0 0.0
      %622 = vmatpush.msra.mxu0 0.0
      %623 = vmatpush.msra.mxu0 0.0
      %624 = vmatpush.msra.mxu0 0.0
      %625 = vmatpush.msra.mxu0 0.0
      %626 = vmatpush.msra.mxu0 0.0
      %627 = vmatpush.msra.mxu0 0.0
      %628 = vmatpush.msra.mxu0 0.0
      %629 = vmatpush.msra.mxu0 0.0
      %630 = vmatpush.msra.mxu0 0.0
      %631 = vmatpush.msra.mxu0 0.0
      %632 = vmatpush.msra.mxu0 0.0
      %633 = vmatpush.msra.mxu0 0.0
      %634 = vmatpush.msra.mxu0 0.0
      %635 = vmatpush.msra.mxu0 %v615
      %636 = vmatmul.f32.gmra.mxu0 %v618
      %v637 = vpop.f32.mrf.mxu0
      %v638 = vadd.f32 0.0, %v637
      %639 = vdwg.mxu0
      %640 = vrot.lane.b32.xlu0 %v407, 64
      %v641 = vpop.permute.xlu0 %640
      %v644 = vsel %vm412, %v561, 0
      %646 = vmatpush.msra.mxu0 0.0
      %647 = vmatpush.msra.mxu0 0.0
      %648 = vmatpush.msra.mxu0 0.0
      %649 = vmatpush.msra.mxu0 0.0
      %650 = vmatpush.msra.mxu0 0.0
      %651 = vmatpush.msra.mxu0 0.0
      %652 = vmatpush.msra.mxu0 0.0
      %653 = vmatpush.msra.mxu0 0.0
      %654 = vmatpush.msra.mxu0 0.0
      %655 = vmatpush.msra.mxu0 0.0
      %656 = vmatpush.msra.mxu0 0.0
      %657 = vmatpush.msra.mxu0 0.0
      %658 = vmatpush.msra.mxu0 0.0
      %659 = vmatpush.msra.mxu0 0.0
      %660 = vmatpush.msra.mxu0 0.0
      %661 = vmatpush.msra.mxu0 %v641
      %662 = vmatmul.f32.gmra.mxu0 %v644
      %v663 = vpop.f32.mrf.mxu0
      %v664 = vadd.f32 0.0, %v663
      %665 = vdwg.mxu0
      %666 = vrot.lane.b32.xlu0 %v398, 120
      %v667 = vpop.permute.xlu0 %666
      %668 = vrot.lane.b32.xlu0 %v398, 88
      %v669 = vpop.permute.xlu0 %668
      %v670 = vsel %vm412, %v667, 0
      %v672 = vsel %vm412, %v669, 0
      %674 = vmatpush.xpose.msra.mxu0 0.0
      %675 = vmatpush.xpose.msra.mxu0 0.0
      %676 = vmatpush.xpose.msra.mxu0 0.0
      %677 = vmatpush.xpose.msra.mxu0 0.0
      %678 = vmatpush.xpose.msra.mxu0 0.0
      %679 = vmatpush.xpose.msra.mxu0 0.0
      %680 = vmatpush.xpose.msra.mxu0 0.0
      %681 = vmatpush.xpose.msra.mxu0 0.0
      %682 = vmatpush.xpose.msra.mxu0 0.0
      %683 = vmatpush.xpose.msra.mxu0 0.0
      %684 = vmatpush.xpose.msra.mxu0 0.0
      %685 = vmatpush.xpose.msra.mxu0 0.0
      %686 = vmatpush.xpose.msra.mxu0 0.0
      %687 = vmatpush.xpose.msra.mxu0 0.0
      %688 = vmatpush.xpose.msra.mxu0 0.0
      %689 = vmatpush.xpose.msra.mxu0 %v672
      %690 = vmatmul.f32.gmra.mxu0 %v670
      %v691 = vpop.f32.mrf.mxu0
      %v692 = vadd.f32 0.0, %v691
      %693 = vdwg.mxu0
      %694 = vrot.lane.b32.xlu0 %v401, 120
      %v695 = vpop.permute.xlu0 %694
      %696 = vrot.lane.b32.xlu0 %v401, 88
      %v697 = vpop.permute.xlu0 %696
      %v698 = vsel %vm412, %v695, 0
      %v700 = vsel %vm412, %v697, 0
      %702 = vmatpush.xpose.msra.mxu0 0.0
      %703 = vmatpush.xpose.msra.mxu0 0.0
      %704 = vmatpush.xpose.msra.mxu0 0.0
      %705 = vmatpush.xpose.msra.mxu0 0.0
      %706 = vmatpush.xpose.msra.mxu0 0.0
      %707 = vmatpush.xpose.msra.mxu0 0.0
      %708 = vmatpush.xpose.msra.mxu0 0.0
      %709 = vmatpush.xpose.msra.mxu0 0.0
      %710 = vmatpush.xpose.msra.mxu0 0.0
      %711 = vmatpush.xpose.msra.mxu0 0.0
      %712 = vmatpush.xpose.msra.mxu0 0.0
      %713 = vmatpush.xpose.msra.mxu0 0.0
      %714 = vmatpush.xpose.msra.mxu0 0.0
      %715 = vmatpush.xpose.msra.mxu0 0.0
      %716 = vmatpush.xpose.msra.mxu0 0.0
      %717 = vmatpush.xpose.msra.mxu0 %v700
      %718 = vmatmul.f32.gmra.mxu0 %v698
      %v719 = vpop.f32.mrf.mxu0
      %v720 = vadd.f32 0.0, %v719
      %721 = vdwg.mxu0
      %722 = vrot.lane.b32.xlu0 %v404, 120
      %v723 = vpop.permute.xlu0 %722
      %724 = vrot.lane.b32.xlu0 %v404, 88
      %v725 = vpop.permute.xlu0 %724
      %v726 = vsel %vm412, %v723, 0
      %v728 = vsel %vm412, %v725, 0
      %730 = vmatpush.xpose.msra.mxu0 0.0
      %731 = vmatpush.xpose.msra.mxu0 0.0
      %732 = vmatpush.xpose.msra.mxu0 0.0
      %733 = vmatpush.xpose.msra.mxu0 0.0
      %734 = vmatpush.xpose.msra.mxu0 0.0
      %735 = vmatpush.xpose.msra.mxu0 0.0
      %736 = vmatpush.xpose.msra.mxu0 0.0
      %737 = vmatpush.xpose.msra.mxu0 0.0
      %738 = vmatpush.xpose.msra.mxu0 0.0
      %739 = vmatpush.xpose.msra.mxu0 0.0
      %740 = vmatpush.xpose.msra.mxu0 0.0
      %741 = vmatpush.xpose.msra.mxu0 0.0
      %742 = vmatpush.xpose.msra.mxu0 0.0
      %743 = vmatpush.xpose.msra.mxu0 0.0
      %744 = vmatpush.xpose.msra.mxu0 0.0
      %745 = vmatpush.xpose.msra.mxu0 %v728
      %746 = vmatmul.f32.gmra.mxu0 %v726
      %v747 = vpop.f32.mrf.mxu0
      %v748 = vadd.f32 0.0, %v747
      %749 = vdwg.mxu0
      %750 = vrot.lane.b32.xlu0 %v407, 120
      %v751 = vpop.permute.xlu0 %750
      %752 = vrot.lane.b32.xlu0 %v407, 88
      %v753 = vpop.permute.xlu0 %752
      %v754 = vsel %vm412, %v751, 0
      %v756 = vsel %vm412, %v753, 0
      %758 = vmatpush.xpose.msra.mxu0 0.0
      %759 = vmatpush.xpose.msra.mxu0 0.0
      %760 = vmatpush.xpose.msra.mxu0 0.0
      %761 = vmatpush.xpose.msra.mxu0 0.0
      %762 = vmatpush.xpose.msra.mxu0 0.0
      %763 = vmatpush.xpose.msra.mxu0 0.0
      %764 = vmatpush.xpose.msra.mxu0 0.0
      %765 = vmatpush.xpose.msra.mxu0 0.0
      %766 = vmatpush.xpose.msra.mxu0 0.0
      %767 = vmatpush.xpose.msra.mxu0 0.0
      %768 = vmatpush.xpose.msra.mxu0 0.0
      %769 = vmatpush.xpose.msra.mxu0 0.0
      %770 = vmatpush.xpose.msra.mxu0 0.0
      %771 = vmatpush.xpose.msra.mxu0 0.0
      %772 = vmatpush.xpose.msra.mxu0 0.0
      %773 = vmatpush.xpose.msra.mxu0 %v756
      %774 = vmatmul.f32.gmra.mxu0 %v754
      %v775 = vpop.f32.mrf.mxu0
      %v776 = vadd.f32 0.0, %v775
      %777 = vdwg.mxu0
      %v778 = vsel %vm412, %v692, -inf
      %779 = vmax.xlane.f32.xlu0 %v778
      %v780 = vpop.xlane.xlu0 %779
      %v781 = vsel %vm412, %v720, -inf
      %782 = vmax.xlane.f32.xlu0 %v781
      %v783 = vpop.xlane.xlu0 %782
      %v784 = vsel %vm412, %v748, -inf
      %785 = vmax.xlane.f32.xlu0 %v784
      %v786 = vpop.xlane.xlu0 %785
      %v787 = vsel %vm412, %v776, -inf
      %788 = vmax.xlane.f32.xlu0 %v787
      %v789 = vpop.xlane.xlu0 %788
      %v790 = vsub.f32 %v692, %v780
      %v791 = vsub.f32 %v720, %v783
      %v792 = vsub.f32 %v748, %v786
      %v793 = vsub.f32 %v776, %v789
      %v794 = vmul.f32 %v790, 1.442695
      %v795 = vpow.pop %v794
      %v796 = vmul.f32 %v791, 1.442695
      %v797 = vpow.pop %v796
      %v798 = vmul.f32 %v792, 1.442695
      %v799 = vpow.pop %v798
      %v800 = vmul.f32 %v793, 1.442695
      %v801 = vpow.pop %v800
      %v802 = vsel %vm412, %v795, 0.0
      %803 = vadd.xlane.f32.xlu0 %v802
      %v804 = vpop.xlane.xlu0 %803
      %v805 = vsel %vm412, %v797, 0.0
      %806 = vadd.xlane.f32.xlu0 %v805
      %v807 = vpop.xlane.xlu0 %806
      %v808 = vsel %vm412, %v799, 0.0
      %809 = vadd.xlane.f32.xlu0 %v808
      %v810 = vpop.xlane.xlu0 %809
      %v811 = vsel %vm412, %v801, 0.0
      %812 = vadd.xlane.f32.xlu0 %v811
      %v813 = vpop.xlane.xlu0 %812
      %v814 = vrcp.pop %v804
      %v815 = vrcp.pop %v807
      %v816 = vrcp.pop %v810
      %v817 = vrcp.pop %v813
      %v818 = vmul.f32 %v795, %v814
      %v819 = vmul.f32 %v797, %v815
      %v820 = vmul.f32 %v799, %v816
      %v821 = vmul.f32 %v801, %v817
      %822 = vrot.lane.b32.xlu0 %v398, 56
      %v823 = vpop.permute.xlu0 %822
      %v826 = vsel %vm412, %v818, 0
      %828 = vmatpush.msra.mxu0 0.0
      %829 = vmatpush.msra.mxu0 0.0
      %830 = vmatpush.msra.mxu0 0.0
      %831 = vmatpush.msra.mxu0 0.0
      %832 = vmatpush.msra.mxu0 0.0
      %833 = vmatpush.msra.mxu0 0.0
      %834 = vmatpush.msra.mxu0 0.0
      %835 = vmatpush.msra.mxu0 0.0
      %836 = vmatpush.msra.mxu0 0.0
      %837 = vmatpush.msra.mxu0 0.0
      %838 = vmatpush.msra.mxu0 0.0
      %839 = vmatpush.msra.mxu0 0.0
      %840 = vmatpush.msra.mxu0 0.0
      %841 = vmatpush.msra.mxu0 0.0
      %842 = vmatpush.msra.mxu0 0.0
      %843 = vmatpush.msra.mxu0 %v823
      %844 = vmatmul.f32.gmra.mxu0 %v826
      %v845 = vpop.f32.mrf.mxu0
      %v846 = vadd.f32 0.0, %v845
      %847 = vdwg.mxu0
      %848 = vrot.lane.b32.xlu0 %v401, 56
      %v849 = vpop.permute.xlu0 %848
      %v852 = vsel %vm412, %v819, 0
      %854 = vmatpush.msra.mxu0 0.0
      %855 = vmatpush.msra.mxu0 0.0
      %856 = vmatpush.msra.mxu0 0.0
      %857 = vmatpush.msra.mxu0 0.0
      %858 = vmatpush.msra.mxu0 0.0
      %859 = vmatpush.msra.mxu0 0.0
      %860 = vmatpush.msra.mxu0 0.0
      %861 = vmatpush.msra.mxu0 0.0
      %862 = vmatpush.msra.mxu0 0.0
      %863 = vmatpush.msra.mxu0 0.0
      %864 = vmatpush.msra.mxu0 0.0
      %865 = vmatpush.msra.mxu0 0.0
      %866 = vmatpush.msra.mxu0 0.0
      %867 = vmatpush.msra.mxu0 0.0
      %868 = vmatpush.msra.mxu0 0.0
      %869 = vmatpush.msra.mxu0 %v849
      %870 = vmatmul.f32.gmra.mxu0 %v852
      %v871 = vpop.f32.mrf.mxu0
      %v872 = vadd.f32 0.0, %v871
      %873 = vdwg.mxu0
      %874 = vrot.lane.b32.xlu0 %v404, 56
      %v875 = vpop.permute.xlu0 %874
      %v878 = vsel %vm412, %v820, 0
      %880 = vmatpush.msra.mxu0 0.0
      %881 = vmatpush.msra.mxu0 0.0
      %882 = vmatpush.msra.mxu0 0.0
      %883 = vmatpush.msra.mxu0 0.0
      %884 = vmatpush.msra.mxu0 0.0
      %885 = vmatpush.msra.mxu0 0.0
      %886 = vmatpush.msra.mxu0 0.0
      %887 = vmatpush.msra.mxu0 0.0
      %888 = vmatpush.msra.mxu0 0.0
      %889 = vmatpush.msra.mxu0 0.0
      %890 = vmatpush.msra.mxu0 0.0
      %891 = vmatpush.msra.mxu0 0.0
      %892 = vmatpush.msra.mxu0 0.0
      %893 = vmatpush.msra.mxu0 0.0
      %894 = vmatpush.msra.mxu0 0.0
      %895 = vmatpush.msra.mxu0 %v875
      %896 = vmatmul.f32.gmra.mxu0 %v878
      %v897 = vpop.f32.mrf.mxu0
      %v898 = vadd.f32 0.0, %v897
      %899 = vdwg.mxu0
      %900 = vrot.lane.b32.xlu0 %v407, 56
      %v901 = vpop.permute.xlu0 %900
      %v904 = vsel %vm412, %v821, 0
      %906 = vmatpush.msra.mxu0 0.0
      %907 = vmatpush.msra.mxu0 0.0
      %908 = vmatpush.msra.mxu0 0.0
      %909 = vmatpush.msra.mxu0 0.0
      %910 = vmatpush.msra.mxu0 0.0
      %911 = vmatpush.msra.mxu0 0.0
      %912 = vmatpush.msra.mxu0 0.0
      %913 = vmatpush.msra.mxu0 0.0
      %914 = vmatpush.msra.mxu0 0.0
      %915 = vmatpush.msra.mxu0 0.0
      %916 = vmatpush.msra.mxu0 0.0
      %917 = vmatpush.msra.mxu0 0.0
      %918 = vmatpush.msra.mxu0 0.0
      %919 = vmatpush.msra.mxu0 0.0
      %920 = vmatpush.msra.mxu0 0.0
      %921 = vmatpush.msra.mxu0 %v901
      %922 = vmatmul.f32.gmra.mxu0 %v904
      %v923 = vpop.f32.mrf.mxu0
      %v924 = vadd.f32 0.0, %v923
      %925 = vdwg.mxu0
      %v927 = vsel %vm412, %v846, 0
      %v930 = vsel %vm412, %v872, 0
      %v933 = vsel %vm412, %v898, 0
      %v936 = vsel %vm412, %v924, 0
      %938 = vmatpush.msra.mxu0 0.0
      %939 = vmatpush.msra.mxu0 0.0
      %940 = vmatpush.msra.mxu0 0.0
      %941 = vmatpush.msra.mxu0 0.0
      %942 = vmatpush.msra.mxu0 0.0
      %943 = vmatpush.msra.mxu0 0.0
      %944 = vmatpush.msra.mxu0 0.0
      %945 = vmatpush.msra.mxu0 0.0
      %946 = vmatpush.msra.mxu0 0.0
      %947 = vmatpush.msra.mxu0 0.0
      %948 = vmatpush.msra.mxu0 0.0
      %949 = vmatpush.msra.mxu0 0.0
      %950 = vmatpush.msra.mxu0 0.0
      %951 = vmatpush.msra.mxu0 0.0
      %952 = vmatpush.msra.mxu0 0.0
      %953 = vmatpush.msra.mxu0 %v346
      %954 = vmatmul.f32.gmra.mxu0 %v927
      %v955 = vpop.f32.mrf.mxu0
      %v956 = vadd.f32 0.0, %v955
      %957 = vmatmul.f32.gmra.mxu0 %v930
      %v958 = vpop.f32.mrf.mxu0
      %v959 = vadd.f32 0.0, %v958
      %960 = vmatmul.f32.gmra.mxu0 %v933
      %v961 = vpop.f32.mrf.mxu0
      %v962 = vadd.f32 0.0, %v961
      %963 = vmatmul.f32.gmra.mxu0 %v936
      %v964 = vpop.f32.mrf.mxu0
      %v965 = vadd.f32 0.0, %v964
      %966 = vdwg.mxu0
      %v968 = vsel %vm412, %v586, 0
      %v971 = vsel %vm412, %v612, 0
      %v974 = vsel %vm412, %v638, 0
      %v977 = vsel %vm412, %v664, 0
      %979 = vmatpush.msra.mxu0 0.0
      %980 = vmatpush.msra.mxu0 0.0
      %981 = vmatpush.msra.mxu0 0.0
      %982 = vmatpush.msra.mxu0 0.0
      %983 = vmatpush.msra.mxu0 0.0
      %984 = vmatpush.msra.mxu0 0.0
      %985 = vmatpush.msra.mxu0 0.0
      %986 = vmatpush.msra.mxu0 0.0
      %987 = vmatpush.msra.mxu0 0.0
      %988 = vmatpush.msra.mxu0 0.0
      %989 = vmatpush.msra.mxu0 0.0
      %990 = vmatpush.msra.mxu0 0.0
      %991 = vmatpush.msra.mxu0 0.0
      %992 = vmatpush.msra.mxu0 0.0
      %993 = vmatpush.msra.mxu0 0.0
      %994 = vmatpush.msra.mxu0 %v345
      %995 = vmatmul.f32.gmra.mxu0 %v968
      %v996 = vpop.f32.mrf.mxu0
      %v997 = vadd.f32 %v956, %v996
      %998 = vmatmul.f32.gmra.mxu0 %v971
      %v999 = vpop.f32.mrf.mxu0
      %v1000 = vadd.f32 %v959, %v999
      %1001 = vmatmul.f32.gmra.mxu0 %v974
      %v1002 = vpop.f32.mrf.mxu0
      %v1003 = vadd.f32 %v962, %v1002
      %1004 = vmatmul.f32.gmra.mxu0 %v977
      %v1005 = vpop.f32.mrf.mxu0
      %v1006 = vadd.f32 %v965, %v1005
      %1007 = vdwg.mxu0
      %1008 = vrot.lane.b32.xlu0 %v398, 112
      %v1009 = vpop.permute.xlu0 %1008
      %1010 = vrot.lane.b32.xlu0 %v398, 80
      %v1011 = vpop.permute.xlu0 %1010
      %v1012 = vsel %vm412, %v1009, 0
      %v1014 = vsel %vm412, %v1011, 0
      %1016 = vmatpush.xpose.msra.mxu0 0.0
      %1017 = vmatpush.xpose.msra.mxu0 0.0
      %1018 = vmatpush.xpose.msra.mxu0 0.0
      %1019 = vmatpush.xpose.msra.mxu0 0.0
      %1020 = vmatpush.xpose.msra.mxu0 0.0
      %1021 = vmatpush.xpose.msra.mxu0 0.0
      %1022 = vmatpush.xpose.msra.mxu0 0.0
      %1023 = vmatpush.xpose.msra.mxu0 0.0
      %1024 = vmatpush.xpose.msra.mxu0 0.0
      %1025 = vmatpush.xpose.msra.mxu0 0.0
      %1026 = vmatpush.xpose.msra.mxu0 0.0
      %1027 = vmatpush.xpose.msra.mxu0 0.0
      %1028 = vmatpush.xpose.msra.mxu0 0.0
      %1029 = vmatpush.xpose.msra.mxu0 0.0
      %1030 = vmatpush.xpose.msra.mxu0 0.0
      %1031 = vmatpush.xpose.msra.mxu0 %v1014
      %1032 = vmatmul.f32.gmra.mxu0 %v1012
      %v1033 = vpop.f32.mrf.mxu0
      %v1034 = vadd.f32 0.0, %v1033
      %1035 = vdwg.mxu0
      %1036 = vrot.lane.b32.xlu0 %v401, 112
      %v1037 = vpop.permute.xlu0 %1036
      %1038 = vrot.lane.b32.xlu0 %v401, 80
      %v1039 = vpop.permute.xlu0 %1038
      %v1040 = vsel %vm412, %v1037, 0
      %v1042 = vsel %vm412, %v1039, 0
      %1044 = vmatpush.xpose.msra.mxu0 0.0
      %1045 = vmatpush.xpose.msra.mxu0 0.0
      %1046 = vmatpush.xpose.msra.mxu0 0.0
      %1047 = vmatpush.xpose.msra.mxu0 0.0
      %1048 = vmatpush.xpose.msra.mxu0 0.0
      %1049 = vmatpush.xpose.msra.mxu0 0.0
      %1050 = vmatpush.xpose.msra.mxu0 0.0
      %1051 = vmatpush.xpose.msra.mxu0 0.0
      %1052 = vmatpush.xpose.msra.mxu0 0.0
      %1053 = vmatpush.xpose.msra.mxu0 0.0
      %1054 = vmatpush.xpose.msra.mxu0 0.0
      %1055 = vmatpush.xpose.msra.mxu0 0.0
      %1056 = vmatpush.xpose.msra.mxu0 0.0
      %1057 = vmatpush.xpose.msra.mxu0 0.0
      %1058 = vmatpush.xpose.msra.mxu0 0.0
      %1059 = vmatpush.xpose.msra.mxu0 %v1042
      %1060 = vmatmul.f32.gmra.mxu0 %v1040
      %v1061 = vpop.f32.mrf.mxu0
      %v1062 = vadd.f32 0.0, %v1061
      %1063 = vdwg.mxu0
      %1064 = vrot.lane.b32.xlu0 %v404, 112
      %v1065 = vpop.permute.xlu0 %1064
      %1066 = vrot.lane.b32.xlu0 %v404, 80
      %v1067 = vpop.permute.xlu0 %1066
      %v1068 = vsel %vm412, %v1065, 0
      %v1070 = vsel %vm412, %v1067, 0
      %1072 = vmatpush.xpose.msra.mxu0 0.0
      %1073 = vmatpush.xpose.msra.mxu0 0.0
      %1074 = vmatpush.xpose.msra.mxu0 0.0
      %1075 = vmatpush.xpose.msra.mxu0 0.0
      %1076 = vmatpush.xpose.msra.mxu0 0.0
      %1077 = vmatpush.xpose.msra.mxu0 0.0
      %1078 = vmatpush.xpose.msra.mxu0 0.0
      %1079 = vmatpush.xpose.msra.mxu0 0.0
      %1080 = vmatpush.xpose.msra.mxu0 0.0
      %1081 = vmatpush.xpose.msra.mxu0 0.0
      %1082 = vmatpush.xpose.msra.mxu0 0.0
      %1083 = vmatpush.xpose.msra.mxu0 0.0
      %1084 = vmatpush.xpose.msra.mxu0 0.0
      %1085 = vmatpush.xpose.msra.mxu0 0.0
      %1086 = vmatpush.xpose.msra.mxu0 0.0
      %1087 = vmatpush.xpose.msra.mxu0 %v1070
      %1088 = vmatmul.f32.gmra.mxu0 %v1068
      %v1089 = vpop.f32.mrf.mxu0
      %v1090 = vadd.f32 0.0, %v1089
      %1091 = vdwg.mxu0
      %1092 = vrot.lane.b32.xlu0 %v407, 112
      %v1093 = vpop.permute.xlu0 %1092
      %1094 = vrot.lane.b32.xlu0 %v407, 80
      %v1095 = vpop.permute.xlu0 %1094
      %v1096 = vsel %vm412, %v1093, 0
      %v1098 = vsel %vm412, %v1095, 0
      %1100 = vmatpush.xpose.msra.mxu0 0.0
      %1101 = vmatpush.xpose.msra.mxu0 0.0
      %1102 = vmatpush.xpose.msra.mxu0 0.0
      %1103 = vmatpush.xpose.msra.mxu0 0.0
      %1104 = vmatpush.xpose.msra.mxu0 0.0
      %1105 = vmatpush.xpose.msra.mxu0 0.0
      %1106 = vmatpush.xpose.msra.mxu0 0.0
      %1107 = vmatpush.xpose.msra.mxu0 0.0
      %1108 = vmatpush.xpose.msra.mxu0 0.0
      %1109 = vmatpush.xpose.msra.mxu0 0.0
      %1110 = vmatpush.xpose.msra.mxu0 0.0
      %1111 = vmatpush.xpose.msra.mxu0 0.0
      %1112 = vmatpush.xpose.msra.mxu0 0.0
      %1113 = vmatpush.xpose.msra.mxu0 0.0
      %1114 = vmatpush.xpose.msra.mxu0 0.0
      %1115 = vmatpush.xpose.msra.mxu0 %v1098
      %1116 = vmatmul.f32.gmra.mxu0 %v1096
      %v1117 = vpop.f32.mrf.mxu0
      %v1118 = vadd.f32 0.0, %v1117
      %1119 = vdwg.mxu0
      %v1120 = vsel %vm412, %v1034, -inf
      %1121 = vmax.xlane.f32.xlu0 %v1120
      %v1122 = vpop.xlane.xlu0 %1121
      %v1123 = vsel %vm412, %v1062, -inf
      %1124 = vmax.xlane.f32.xlu0 %v1123
      %v1125 = vpop.xlane.xlu0 %1124
      %v1126 = vsel %vm412, %v1090, -inf
      %1127 = vmax.xlane.f32.xlu0 %v1126
      %v1128 = vpop.xlane.xlu0 %1127
      %v1129 = vsel %vm412, %v1118, -inf
      %1130 = vmax.xlane.f32.xlu0 %v1129
      %v1131 = vpop.xlane.xlu0 %1130
      %v1132 = vsub.f32 %v1034, %v1122
      %v1133 = vsub.f32 %v1062, %v1125
      %v1134 = vsub.f32 %v1090, %v1128
      %v1135 = vsub.f32 %v1118, %v1131
      %v1136 = vmul.f32 %v1132, 1.442695
      %v1137 = vpow.pop %v1136
      %v1138 = vmul.f32 %v1133, 1.442695
      %v1139 = vpow.pop %v1138
      %v1140 = vmul.f32 %v1134, 1.442695
      %v1141 = vpow.pop %v1140
      %v1142 = vmul.f32 %v1135, 1.442695
      %v1143 = vpow.pop %v1142
      %v1144 = vsel %vm412, %v1137, 0.0
      %1145 = vadd.xlane.f32.xlu0 %v1144
      %v1146 = vpop.xlane.xlu0 %1145
      %v1147 = vsel %vm412, %v1139, 0.0
      %1148 = vadd.xlane.f32.xlu0 %v1147
      %v1149 = vpop.xlane.xlu0 %1148
      %v1150 = vsel %vm412, %v1141, 0.0
      %1151 = vadd.xlane.f32.xlu0 %v1150
      %v1152 = vpop.xlane.xlu0 %1151
      %v1153 = vsel %vm412, %v1143, 0.0
      %1154 = vadd.xlane.f32.xlu0 %v1153
      %v1155 = vpop.xlane.xlu0 %1154
      %v1156 = vrcp.pop %v1146
      %v1157 = vrcp.pop %v1149
      %v1158 = vrcp.pop %v1152
      %v1159 = vrcp.pop %v1155
      %v1160 = vmul.f32 %v1137, %v1156
      %v1161 = vmul.f32 %v1139, %v1157
      %v1162 = vmul.f32 %v1141, %v1158
      %v1163 = vmul.f32 %v1143, %v1159
      %1164 = vrot.lane.b32.xlu0 %v398, 48
      %v1165 = vpop.permute.xlu0 %1164
      %v1168 = vsel %vm412, %v1160, 0
      %1170 = vmatpush.msra.mxu0 0.0
      %1171 = vmatpush.msra.mxu0 0.0
      %1172 = vmatpush.msra.mxu0 0.0
      %1173 = vmatpush.msra.mxu0 0.0
      %1174 = vmatpush.msra.mxu0 0.0
      %1175 = vmatpush.msra.mxu0 0.0
      %1176 = vmatpush.msra.mxu0 0.0
      %1177 = vmatpush.msra.mxu0 0.0
      %1178 = vmatpush.msra.mxu0 0.0
      %1179 = vmatpush.msra.mxu0 0.0
      %1180 = vmatpush.msra.mxu0 0.0
      %1181 = vmatpush.msra.mxu0 0.0
      %1182 = vmatpush.msra.mxu0 0.0
      %1183 = vmatpush.msra.mxu0 0.0
      %1184 = vmatpush.msra.mxu0 0.0
      %1185 = vmatpush.msra.mxu0 %v1165
      %1186 = vmatmul.f32.gmra.mxu0 %v1168
      %v1187 = vpop.f32.mrf.mxu0
      %v1188 = vadd.f32 0.0, %v1187
      %1189 = vdwg.mxu0
      %1190 = vrot.lane.b32.xlu0 %v401, 48
      %v1191 = vpop.permute.xlu0 %1190
      %v1194 = vsel %vm412, %v1161, 0
      %1196 = vmatpush.msra.mxu0 0.0
      %1197 = vmatpush.msra.mxu0 0.0
      %1198 = vmatpush.msra.mxu0 0.0
      %1199 = vmatpush.msra.mxu0 0.0
      %1200 = vmatpush.msra.mxu0 0.0
      %1201 = vmatpush.msra.mxu0 0.0
      %1202 = vmatpush.msra.mxu0 0.0
      %1203 = vmatpush.msra.mxu0 0.0
      %1204 = vmatpush.msra.mxu0 0.0
      %1205 = vmatpush.msra.mxu0 0.0
      %1206 = vmatpush.msra.mxu0 0.0
      %1207 = vmatpush.msra.mxu0 0.0
      %1208 = vmatpush.msra.mxu0 0.0
      %1209 = vmatpush.msra.mxu0 0.0
      %1210 = vmatpush.msra.mxu0 0.0
      %1211 = vmatpush.msra.mxu0 %v1191
      %1212 = vmatmul.f32.gmra.mxu0 %v1194
      %v1213 = vpop.f32.mrf.mxu0
      %v1214 = vadd.f32 0.0, %v1213
      %1215 = vdwg.mxu0
      %1216 = vrot.lane.b32.xlu0 %v404, 48
      %v1217 = vpop.permute.xlu0 %1216
      %v1220 = vsel %vm412, %v1162, 0
      %1222 = vmatpush.msra.mxu0 0.0
      %1223 = vmatpush.msra.mxu0 0.0
      %1224 = vmatpush.msra.mxu0 0.0
      %1225 = vmatpush.msra.mxu0 0.0
      %1226 = vmatpush.msra.mxu0 0.0
      %1227 = vmatpush.msra.mxu0 0.0
      %1228 = vmatpush.msra.mxu0 0.0
      %1229 = vmatpush.msra.mxu0 0.0
      %1230 = vmatpush.msra.mxu0 0.0
      %1231 = vmatpush.msra.mxu0 0.0
      %1232 = vmatpush.msra.mxu0 0.0
      %1233 = vmatpush.msra.mxu0 0.0
      %1234 = vmatpush.msra.mxu0 0.0
      %1235 = vmatpush.msra.mxu0 0.0
      %1236 = vmatpush.msra.mxu0 0.0
      %1237 = vmatpush.msra.mxu0 %v1217
      %1238 = vmatmul.f32.gmra.mxu0 %v1220
      %v1239 = vpop.f32.mrf.mxu0
      %v1240 = vadd.f32 0.0, %v1239
      %1241 = vdwg.mxu0
      %1242 = vrot.lane.b32.xlu0 %v407, 48
      %v1243 = vpop.permute.xlu0 %1242
      %v1246 = vsel %vm412, %v1163, 0
      %1248 = vmatpush.msra.mxu0 0.0
      %1249 = vmatpush.msra.mxu0 0.0
      %1250 = vmatpush.msra.mxu0 0.0
      %1251 = vmatpush.msra.mxu0 0.0
      %1252 = vmatpush.msra.mxu0 0.0
      %1253 = vmatpush.msra.mxu0 0.0
      %1254 = vmatpush.msra.mxu0 0.0
      %1255 = vmatpush.msra.mxu0 0.0
      %1256 = vmatpush.msra.mxu0 0.0
      %1257 = vmatpush.msra.mxu0 0.0
      %1258 = vmatpush.msra.mxu0 0.0
      %1259 = vmatpush.msra.mxu0 0.0
      %1260 = vmatpush.msra.mxu0 0.0
      %1261 = vmatpush.msra.mxu0 0.0
      %1262 = vmatpush.msra.mxu0 0.0
      %1263 = vmatpush.msra.mxu0 %v1243
      %1264 = vmatmul.f32.gmra.mxu0 %v1246
      %v1265 = vpop.f32.mrf.mxu0
      %v1266 = vadd.f32 0.0, %v1265
      %1267 = vdwg.mxu0
      %v1269 = vsel %vm412, %v1188, 0
      %v1272 = vsel %vm412, %v1214, 0
      %v1275 = vsel %vm412, %v1240, 0
      %v1278 = vsel %vm412, %v1266, 0
      %1280 = vmatpush.msra.mxu0 0.0
      %1281 = vmatpush.msra.mxu0 0.0
      %1282 = vmatpush.msra.mxu0 0.0
      %1283 = vmatpush.msra.mxu0 0.0
      %1284 = vmatpush.msra.mxu0 0.0
      %1285 = vmatpush.msra.mxu0 0.0
      %1286 = vmatpush.msra.mxu0 0.0
      %1287 = vmatpush.msra.mxu0 0.0
      %1288 = vmatpush.msra.mxu0 0.0
      %1289 = vmatpush.msra.mxu0 0.0
      %1290 = vmatpush.msra.mxu0 0.0
      %1291 = vmatpush.msra.mxu0 0.0
      %1292 = vmatpush.msra.mxu0 0.0
      %1293 = vmatpush.msra.mxu0 0.0
      %1294 = vmatpush.msra.mxu0 0.0
      %1295 = vmatpush.msra.mxu0 %v347
      %1296 = vmatmul.f32.gmra.mxu0 %v1269
      %v1297 = vpop.f32.mrf.mxu0
      %v1298 = vadd.f32 0.0, %v1297
      %1299 = vmatmul.f32.gmra.mxu0 %v1272
      %v1300 = vpop.f32.mrf.mxu0
      %v1301 = vadd.f32 0.0, %v1300
      %1302 = vmatmul.f32.gmra.mxu0 %v1275
      %v1303 = vpop.f32.mrf.mxu0
      %v1304 = vadd.f32 0.0, %v1303
      %1305 = vmatmul.f32.gmra.mxu0 %v1278
      %v1306 = vpop.f32.mrf.mxu0
      %v1307 = vadd.f32 0.0, %v1306
      %1308 = vdwg.mxu0
      %v1309 = vadd.f32 %v997, %v1298
      %v1310 = vadd.f32 %v1000, %v1301
      %v1311 = vadd.f32 %v1003, %v1304
      %v1312 = vadd.f32 %v1006, %v1307
      %1313 = vrot.lane.b32.xlu0 %v398, 104
      %v1314 = vpop.permute.xlu0 %1313
      %1315 = vrot.lane.b32.xlu0 %v398, 72
      %v1316 = vpop.permute.xlu0 %1315
      %v1317 = vsel %vm412, %v1314, 0
      %v1319 = vsel %vm412, %v1316, 0
      %1321 = vmatpush.xpose.msra.mxu0 0.0
      %1322 = vmatpush.xpose.msra.mxu0 0.0
      %1323 = vmatpush.xpose.msra.mxu0 0.0
      %1324 = vmatpush.xpose.msra.mxu0 0.0
      %1325 = vmatpush.xpose.msra.mxu0 0.0
      %1326 = vmatpush.xpose.msra.mxu0 0.0
      %1327 = vmatpush.xpose.msra.mxu0 0.0
      %1328 = vmatpush.xpose.msra.mxu0 0.0
      %1329 = vmatpush.xpose.msra.mxu0 0.0
      %1330 = vmatpush.xpose.msra.mxu0 0.0
      %1331 = vmatpush.xpose.msra.mxu0 0.0
      %1332 = vmatpush.xpose.msra.mxu0 0.0
      %1333 = vmatpush.xpose.msra.mxu0 0.0
      %1334 = vmatpush.xpose.msra.mxu0 0.0
      %1335 = vmatpush.xpose.msra.mxu0 0.0
      %1336 = vmatpush.xpose.msra.mxu0 %v1319
      %1337 = vmatmul.f32.gmra.mxu0 %v1317
      %v1338 = vpop.f32.mrf.mxu0
      %v1339 = vadd.f32 0.0, %v1338
      %1340 = vdwg.mxu0
      %1341 = vrot.lane.b32.xlu0 %v401, 104
      %v1342 = vpop.permute.xlu0 %1341
      %1343 = vrot.lane.b32.xlu0 %v401, 72
      %v1344 = vpop.permute.xlu0 %1343
      %v1345 = vsel %vm412, %v1342, 0
      %v1347 = vsel %vm412, %v1344, 0
      %1349 = vmatpush.xpose.msra.mxu0 0.0
      %1350 = vmatpush.xpose.msra.mxu0 0.0
      %1351 = vmatpush.xpose.msra.mxu0 0.0
      %1352 = vmatpush.xpose.msra.mxu0 0.0
      %1353 = vmatpush.xpose.msra.mxu0 0.0
      %1354 = vmatpush.xpose.msra.mxu0 0.0
      %1355 = vmatpush.xpose.msra.mxu0 0.0
      %1356 = vmatpush.xpose.msra.mxu0 0.0
      %1357 = vmatpush.xpose.msra.mxu0 0.0
      %1358 = vmatpush.xpose.msra.mxu0 0.0
      %1359 = vmatpush.xpose.msra.mxu0 0.0
      %1360 = vmatpush.xpose.msra.mxu0 0.0
      %1361 = vmatpush.xpose.msra.mxu0 0.0
      %1362 = vmatpush.xpose.msra.mxu0 0.0
      %1363 = vmatpush.xpose.msra.mxu0 0.0
      %1364 = vmatpush.xpose.msra.mxu0 %v1347
      %1365 = vmatmul.f32.gmra.mxu0 %v1345
      %v1366 = vpop.f32.mrf.mxu0
      %v1367 = vadd.f32 0.0, %v1366
      %1368 = vdwg.mxu0
      %1369 = vrot.lane.b32.xlu0 %v404, 104
      %v1370 = vpop.permute.xlu0 %1369
      %1371 = vrot.lane.b32.xlu0 %v404, 72
      %v1372 = vpop.permute.xlu0 %1371
      %v1373 = vsel %vm412, %v1370, 0
      %v1375 = vsel %vm412, %v1372, 0
      %1377 = vmatpush.xpose.msra.mxu0 0.0
      %1378 = vmatpush.xpose.msra.mxu0 0.0
      %1379 = vmatpush.xpose.msra.mxu0 0.0
      %1380 = vmatpush.xpose.msra.mxu0 0.0
      %1381 = vmatpush.xpose.msra.mxu0 0.0
      %1382 = vmatpush.xpose.msra.mxu0 0.0
      %1383 = vmatpush.xpose.msra.mxu0 0.0
      %1384 = vmatpush.xpose.msra.mxu0 0.0
      %1385 = vmatpush.xpose.msra.mxu0 0.0
      %1386 = vmatpush.xpose.msra.mxu0 0.0
      %1387 = vmatpush.xpose.msra.mxu0 0.0
      %1388 = vmatpush.xpose.msra.mxu0 0.0
      %1389 = vmatpush.xpose.msra.mxu0 0.0
      %1390 = vmatpush.xpose.msra.mxu0 0.0
      %1391 = vmatpush.xpose.msra.mxu0 0.0
      %1392 = vmatpush.xpose.msra.mxu0 %v1375
      %1393 = vmatmul.f32.gmra.mxu0 %v1373
      %v1394 = vpop.f32.mrf.mxu0
      %v1395 = vadd.f32 0.0, %v1394
      %1396 = vdwg.mxu0
      %1397 = vrot.lane.b32.xlu0 %v407, 104
      %v1398 = vpop.permute.xlu0 %1397
      %1399 = vrot.lane.b32.xlu0 %v407, 72
      %v1400 = vpop.permute.xlu0 %1399
      %v1401 = vsel %vm412, %v1398, 0
      %v1403 = vsel %vm412, %v1400, 0
      %1405 = vmatpush.xpose.msra.mxu0 0.0
      %1406 = vmatpush.xpose.msra.mxu0 0.0
      %1407 = vmatpush.xpose.msra.mxu0 0.0
      %1408 = vmatpush.xpose.msra.mxu0 0.0
      %1409 = vmatpush.xpose.msra.mxu0 0.0
      %1410 = vmatpush.xpose.msra.mxu0 0.0
      %1411 = vmatpush.xpose.msra.mxu0 0.0
      %1412 = vmatpush.xpose.msra.mxu0 0.0
      %1413 = vmatpush.xpose.msra.mxu0 0.0
      %1414 = vmatpush.xpose.msra.mxu0 0.0
      %1415 = vmatpush.xpose.msra.mxu0 0.0
      %1416 = vmatpush.xpose.msra.mxu0 0.0
      %1417 = vmatpush.xpose.msra.mxu0 0.0
      %1418 = vmatpush.xpose.msra.mxu0 0.0
      %1419 = vmatpush.xpose.msra.mxu0 0.0
      %1420 = vmatpush.xpose.msra.mxu0 %v1403
      %1421 = vmatmul.f32.gmra.mxu0 %v1401
      %v1422 = vpop.f32.mrf.mxu0
      %v1423 = vadd.f32 0.0, %v1422
      %1424 = vdwg.mxu0
      %v1425 = vsel %vm412, %v1339, -inf
      %1426 = vmax.xlane.f32.xlu0 %v1425
      %v1427 = vpop.xlane.xlu0 %1426
      %v1428 = vsel %vm412, %v1367, -inf
      %1429 = vmax.xlane.f32.xlu0 %v1428
      %v1430 = vpop.xlane.xlu0 %1429
      %v1431 = vsel %vm412, %v1395, -inf
      %1432 = vmax.xlane.f32.xlu0 %v1431
      %v1433 = vpop.xlane.xlu0 %1432
      %v1434 = vsel %vm412, %v1423, -inf
      %1435 = vmax.xlane.f32.xlu0 %v1434
      %v1436 = vpop.xlane.xlu0 %1435
      %v1437 = vsub.f32 %v1339, %v1427
      %v1438 = vsub.f32 %v1367, %v1430
      %v1439 = vsub.f32 %v1395, %v1433
      %v1440 = vsub.f32 %v1423, %v1436
      %v1441 = vmul.f32 %v1437, 1.442695
      %v1442 = vpow.pop %v1441
      %v1443 = vmul.f32 %v1438, 1.442695
      %v1444 = vpow.pop %v1443
      %v1445 = vmul.f32 %v1439, 1.442695
      %v1446 = vpow.pop %v1445
      %v1447 = vmul.f32 %v1440, 1.442695
      %v1448 = vpow.pop %v1447
      %v1449 = vsel %vm412, %v1442, 0.0
      %1450 = vadd.xlane.f32.xlu0 %v1449
      %v1451 = vpop.xlane.xlu0 %1450
      %v1452 = vsel %vm412, %v1444, 0.0
      %1453 = vadd.xlane.f32.xlu0 %v1452
      %v1454 = vpop.xlane.xlu0 %1453
      %v1455 = vsel %vm412, %v1446, 0.0
      %1456 = vadd.xlane.f32.xlu0 %v1455
      %v1457 = vpop.xlane.xlu0 %1456
      %v1458 = vsel %vm412, %v1448, 0.0
      %1459 = vadd.xlane.f32.xlu0 %v1458
      %v1460 = vpop.xlane.xlu0 %1459
      %v1461 = vrcp.pop %v1451
      %v1462 = vrcp.pop %v1454
      %v1463 = vrcp.pop %v1457
      %v1464 = vrcp.pop %v1460
      %v1465 = vmul.f32 %v1442, %v1461
      %v1466 = vmul.f32 %v1444, %v1462
      %v1467 = vmul.f32 %v1446, %v1463
      %v1468 = vmul.f32 %v1448, %v1464
      %1469 = vrot.lane.b32.xlu0 %v398, 40
      %v1470 = vpop.permute.xlu0 %1469
      %v1473 = vsel %vm412, %v1465, 0
      %1475 = vmatpush.msra.mxu0 0.0
      %1476 = vmatpush.msra.mxu0 0.0
      %1477 = vmatpush.msra.mxu0 0.0
      %1478 = vmatpush.msra.mxu0 0.0
      %1479 = vmatpush.msra.mxu0 0.0
      %1480 = vmatpush.msra.mxu0 0.0
      %1481 = vmatpush.msra.mxu0 0.0
      %1482 = vmatpush.msra.mxu0 0.0
      %1483 = vmatpush.msra.mxu0 0.0
      %1484 = vmatpush.msra.mxu0 0.0
      %1485 = vmatpush.msra.mxu0 0.0
      %1486 = vmatpush.msra.mxu0 0.0
      %1487 = vmatpush.msra.mxu0 0.0
      %1488 = vmatpush.msra.mxu0 0.0
      %1489 = vmatpush.msra.mxu0 0.0
      %1490 = vmatpush.msra.mxu0 %v1470
      %1491 = vmatmul.f32.gmra.mxu0 %v1473
      %v1492 = vpop.f32.mrf.mxu0
      %v1493 = vadd.f32 0.0, %v1492
      %1494 = vdwg.mxu0
      %1495 = vrot.lane.b32.xlu0 %v401, 40
      %v1496 = vpop.permute.xlu0 %1495
      %v1499 = vsel %vm412, %v1466, 0
      %1501 = vmatpush.msra.mxu0 0.0
      %1502 = vmatpush.msra.mxu0 0.0
      %1503 = vmatpush.msra.mxu0 0.0
      %1504 = vmatpush.msra.mxu0 0.0
      %1505 = vmatpush.msra.mxu0 0.0
      %1506 = vmatpush.msra.mxu0 0.0
      %1507 = vmatpush.msra.mxu0 0.0
      %1508 = vmatpush.msra.mxu0 0.0
      %1509 = vmatpush.msra.mxu0 0.0
      %1510 = vmatpush.msra.mxu0 0.0
      %1511 = vmatpush.msra.mxu0 0.0
      %1512 = vmatpush.msra.mxu0 0.0
      %1513 = vmatpush.msra.mxu0 0.0
      %1514 = vmatpush.msra.mxu0 0.0
      %1515 = vmatpush.msra.mxu0 0.0
      %1516 = vmatpush.msra.mxu0 %v1496
      %1517 = vmatmul.f32.gmra.mxu0 %v1499
      %v1518 = vpop.f32.mrf.mxu0
      %v1519 = vadd.f32 0.0, %v1518
      %1520 = vdwg.mxu0
      %1521 = vrot.lane.b32.xlu0 %v404, 40
      %v1522 = vpop.permute.xlu0 %1521
      %v1525 = vsel %vm412, %v1467, 0
      %1527 = vmatpush.msra.mxu0 0.0
      %1528 = vmatpush.msra.mxu0 0.0
      %1529 = vmatpush.msra.mxu0 0.0
      %1530 = vmatpush.msra.mxu0 0.0
      %1531 = vmatpush.msra.mxu0 0.0
      %1532 = vmatpush.msra.mxu0 0.0
      %1533 = vmatpush.msra.mxu0 0.0
      %1534 = vmatpush.msra.mxu0 0.0
      %1535 = vmatpush.msra.mxu0 0.0
      %1536 = vmatpush.msra.mxu0 0.0
      %1537 = vmatpush.msra.mxu0 0.0
      %1538 = vmatpush.msra.mxu0 0.0
      %1539 = vmatpush.msra.mxu0 0.0
      %1540 = vmatpush.msra.mxu0 0.0
      %1541 = vmatpush.msra.mxu0 0.0
      %1542 = vmatpush.msra.mxu0 %v1522
      %1543 = vmatmul.f32.gmra.mxu0 %v1525
      %v1544 = vpop.f32.mrf.mxu0
      %v1545 = vadd.f32 0.0, %v1544
      %1546 = vdwg.mxu0
      %1547 = vrot.lane.b32.xlu0 %v407, 40
      %v1548 = vpop.permute.xlu0 %1547
      %v1551 = vsel %vm412, %v1468, 0
      %1553 = vmatpush.msra.mxu0 0.0
      %1554 = vmatpush.msra.mxu0 0.0
      %1555 = vmatpush.msra.mxu0 0.0
      %1556 = vmatpush.msra.mxu0 0.0
      %1557 = vmatpush.msra.mxu0 0.0
      %1558 = vmatpush.msra.mxu0 0.0
      %1559 = vmatpush.msra.mxu0 0.0
      %1560 = vmatpush.msra.mxu0 0.0
      %1561 = vmatpush.msra.mxu0 0.0
      %1562 = vmatpush.msra.mxu0 0.0
      %1563 = vmatpush.msra.mxu0 0.0
      %1564 = vmatpush.msra.mxu0 0.0
      %1565 = vmatpush.msra.mxu0 0.0
      %1566 = vmatpush.msra.mxu0 0.0
      %1567 = vmatpush.msra.mxu0 0.0
      %1568 = vmatpush.msra.mxu0 %v1548
      %1569 = vmatmul.f32.gmra.mxu0 %v1551
      %v1570 = vpop.f32.mrf.mxu0
      %v1571 = vadd.f32 0.0, %v1570
      %1572 = vdwg.mxu0
      %v1574 = vsel %vm412, %v1493, 0
      %v1577 = vsel %vm412, %v1519, 0
      %v1580 = vsel %vm412, %v1545, 0
      %v1583 = vsel %vm412, %v1571, 0
      %1585 = vmatpush.msra.mxu0 0.0
      %1586 = vmatpush.msra.mxu0 0.0
      %1587 = vmatpush.msra.mxu0 0.0
      %1588 = vmatpush.msra.mxu0 0.0
      %1589 = vmatpush.msra.mxu0 0.0
      %1590 = vmatpush.msra.mxu0 0.0
      %1591 = vmatpush.msra.mxu0 0.0
      %1592 = vmatpush.msra.mxu0 0.0
      %1593 = vmatpush.msra.mxu0 0.0
      %1594 = vmatpush.msra.mxu0 0.0
      %1595 = vmatpush.msra.mxu0 0.0
      %1596 = vmatpush.msra.mxu0 0.0
      %1597 = vmatpush.msra.mxu0 0.0
      %1598 = vmatpush.msra.mxu0 0.0
      %1599 = vmatpush.msra.mxu0 0.0
      %1600 = vmatpush.msra.mxu0 %v348
      %1601 = vmatmul.f32.gmra.mxu0 %v1574
      %v1602 = vpop.f32.mrf.mxu0
      %v1603 = vadd.f32 0.0, %v1602
      %1604 = vmatmul.f32.gmra.mxu0 %v1577
      %v1605 = vpop.f32.mrf.mxu0
      %v1606 = vadd.f32 0.0, %v1605
      %1607 = vmatmul.f32.gmra.mxu0 %v1580
      %v1608 = vpop.f32.mrf.mxu0
      %v1609 = vadd.f32 0.0, %v1608
      %1610 = vmatmul.f32.gmra.mxu0 %v1583
      %v1611 = vpop.f32.mrf.mxu0
      %v1612 = vadd.f32 0.0, %v1611
      %1613 = vdwg.mxu0
      %v1614 = vadd.f32 %v1309, %v1603
      %v1615 = vadd.f32 %v1310, %v1606
      %v1616 = vadd.f32 %v1311, %v1609
      %v1617 = vadd.f32 %v1312, %v1612
      %v1618 = vadd.f32 %v336, %v1614
      %v1619 = vadd.f32 %v337, %v1615
      %v1620 = vadd.f32 %v338, %v1616
      %v1621 = vadd.f32 %v339, %v1617
      %v1623 = vperm.slane %v349, 0
      %v1625 = vadd.f32 %v1618, %v1623
      %v1626 = vadd.f32 %v1619, %v1623
      %v1627 = vadd.f32 %v1620, %v1623
      %v1628 = vadd.f32 %v1621, %v1623
      %v1630 = vperm.slane %v354, 0
      %v1633 = vsel %vm367, %v1625, 0
      %v1636 = vsel %vm367, %v1626, 0
      %v1639 = vsel %vm367, %v1627, 0
      %v1642 = vsel %vm367, %v1628, 0
      %1644 = vmatpush.msra.mxu0 0.0
      %1645 = vmatpush.msra.mxu0 0.0
      %1646 = vmatpush.msra.mxu0 0.0
      %1647 = vmatpush.msra.mxu0 0.0
      %1648 = vmatpush.msra.mxu0 0.0
      %1649 = vmatpush.msra.mxu0 0.0
      %1650 = vmatpush.msra.mxu0 0.0
      %1651 = vmatpush.msra.mxu0 0.0
      %1652 = vmatpush.msra.mxu0 0.0
      %1653 = vmatpush.msra.mxu0 0.0
      %1654 = vmatpush.msra.mxu0 0.0
      %1655 = vmatpush.msra.mxu0 0.0
      %1656 = vmatpush.msra.mxu0 %v353
      %1657 = vmatpush.msra.mxu0 %v352
      %1658 = vmatpush.msra.mxu0 %v351
      %1659 = vmatpush.msra.mxu0 %v350
      %1660 = vmatmul.f32.gmra.mxu0 %v1633
      %v1661 = vpop.f32.mrf.mxu0
      %v1662 = vadd.f32 %v1630, %v1661
      %1663 = vmatmul.f32.gmra.mxu0 %v1636
      %v1664 = vpop.f32.mrf.mxu0
      %v1665 = vadd.f32 %v1630, %v1664
      %1666 = vmatmul.f32.gmra.mxu0 %v1639
      %v1667 = vpop.f32.mrf.mxu0
      %v1668 = vadd.f32 %v1630, %v1667
      %1669 = vmatmul.f32.gmra.mxu0 %v1642
      %v1670 = vpop.f32.mrf.mxu0
      %v1671 = vadd.f32 %v1630, %v1670
      %1672 = vdwg.mxu0
      %v1673 = vxor.u32 %v1662, 2147483648
      %v1674 = vxor.u32 %v1665, 2147483648
      %v1675 = vxor.u32 %v1668, 2147483648
      %v1676 = vxor.u32 %v1671, 2147483648
      %v1677 = vmul.f32 %v1673, 1.442695
      %v1678 = vpow.pop %v1677
      %v1679 = vmul.f32 %v1674, 1.442695
      %v1680 = vpow.pop %v1679
      %v1681 = vmul.f32 %v1675, 1.442695
      %v1682 = vpow.pop %v1681
      %v1683 = vmul.f32 %v1676, 1.442695
      %v1684 = vpow.pop %v1683
      %v1685 = vadd.f32 %v1678, 1.0
      %v1686 = vadd.f32 %v1680, 1.0
      %v1687 = vadd.f32 %v1682, 1.0
      %v1688 = vadd.f32 %v1684, 1.0
      %v1689 = vrcp.pop %v1685
      %v1690 = vmul.f32 %v1685, %v1689
      %v1691 = vsub.f32 1.0, %v1690
      %v1692 = vmul.f32 %v1689, %v1691
      %v1693 = vadd.f32 %v1689, %v1692
      %vm1694 = vweird.f32 %v1685
      %vm1695 = vweird.f32 %v1689
      %vm1696 = vmor %vm1694, %vm1695
      %v1697 = vsel %vm1696, %v1689, %v1693
      %v1698 = vand.u32 2147483647, %v1685
      %vm1699 = vcmp.eq.f32.partialorder %v1698, 8.507059e+37
      %v1700 = vand.u32 %v1685, 2147483648
      %v1701 = vor.u32 1.1754944e-38, %v1700
      %v1702 = vsel %vm1699, %v1701, %v1697
      %v1703 = vmul.f32 1.0, %v1702
      %v1704 = vrcp.pop %v1686
      %v1705 = vmul.f32 %v1686, %v1704
      %v1706 = vsub.f32 1.0, %v1705
      %v1707 = vmul.f32 %v1704, %v1706
      %v1708 = vadd.f32 %v1704, %v1707
      %vm1709 = vweird.f32 %v1686
      %vm1710 = vweird.f32 %v1704
      %vm1711 = vmor %vm1709, %vm1710
      %v1712 = vsel %vm1711, %v1704, %v1708
      %v1713 = vand.u32 2147483647, %v1686
      %vm1714 = vcmp.eq.f32.partialorder %v1713, 8.507059e+37
      %v1715 = vand.u32 %v1686, 2147483648
      %v1716 = vor.u32 1.1754944e-38, %v1715
      %v1717 = vsel %vm1714, %v1716, %v1712
      %v1718 = vmul.f32 1.0, %v1717
      %v1719 = vrcp.pop %v1687
      %v1720 = vmul.f32 %v1687, %v1719
      %v1721 = vsub.f32 1.0, %v1720
      %v1722 = vmul.f32 %v1719, %v1721
      %v1723 = vadd.f32 %v1719, %v1722
      %vm1724 = vweird.f32 %v1687
      %vm1725 = vweird.f32 %v1719
      %vm1726 = vmor %vm1724, %vm1725
      %v1727 = vsel %vm1726, %v1719, %v1723
      %v1728 = vand.u32 2147483647, %v1687
      %vm1729 = vcmp.eq.f32.partialorder %v1728, 8.507059e+37
      %v1730 = vand.u32 %v1687, 2147483648
      %v1731 = vor.u32 1.1754944e-38, %v1730
      %v1732 = vsel %vm1729, %v1731, %v1727
      %v1733 = vmul.f32 1.0, %v1732
      %v1734 = vrcp.pop %v1688
      %v1735 = vmul.f32 %v1688, %v1734
      %v1736 = vsub.f32 1.0, %v1735
      %v1737 = vmul.f32 %v1734, %v1736
      %v1738 = vadd.f32 %v1734, %v1737
      %vm1739 = vweird.f32 %v1688
      %vm1740 = vweird.f32 %v1734
      %vm1741 = vmor %vm1739, %vm1740
      %v1742 = vsel %vm1741, %v1734, %v1738
      %v1743 = vand.u32 2147483647, %v1688
      %vm1744 = vcmp.eq.f32.partialorder %v1743, 8.507059e+37
      %v1745 = vand.u32 %v1688, 2147483648
      %v1746 = vor.u32 1.1754944e-38, %v1745
      %v1747 = vsel %vm1744, %v1746, %v1742
      %v1748 = vmul.f32 1.0, %v1747
      %v1749 = vmul.f32 %v1662, %v1703
      %v1750 = vmul.f32 %v1665, %v1718
      %v1751 = vmul.f32 %v1668, %v1733
      %v1752 = vmul.f32 %v1671, %v1748
      %v1754 = vperm.slane %v363, 0
      %vm1756 = vcmask 523264
      %v1758 = vsel %vm1756, %v1749, 0
      %v1761 = vsel %vm1756, %v1750, 0
      %v1764 = vsel %vm1756, %v1751, 0
      %v1767 = vsel %vm1756, %v1752, 0
      %1769 = vmatpush.msra.mxu0 0.0
      %1770 = vmatpush.msra.mxu0 0.0
      %1771 = vmatpush.msra.mxu0 0.0
      %1772 = vmatpush.msra.mxu0 0.0
      %1773 = vmatpush.msra.mxu0 0.0
      %1774 = vmatpush.msra.mxu0 0.0
      %1775 = vmatpush.msra.mxu0 0.0
      %1776 = vmatpush.msra.mxu0 0.0
      %1777 = vmatpush.msra.mxu0 %v362
      %1778 = vmatpush.msra.mxu0 %v361
      %1779 = vmatpush.msra.mxu0 %v360
      %1780 = vmatpush.msra.mxu0 %v359
      %1781 = vmatpush.msra.mxu0 %v358
      %1782 = vmatpush.msra.mxu0 %v357
      %1783 = vmatpush.msra.mxu0 %v356
      %1784 = vmatpush.msra.mxu0 %v355
      %1785 = vmatmul.f32.gmra.mxu0 %v1758
      %v1786 = vpop.f32.mrf.mxu0
      %v1787 = vadd.f32 %v1754, %v1786
      %1788 = vmatmul.f32.gmra.mxu0 %v1761
      %v1789 = vpop.f32.mrf.mxu0
      %v1790 = vadd.f32 %v1754, %v1789
      %1791 = vmatmul.f32.gmra.mxu0 %v1764
      %v1792 = vpop.f32.mrf.mxu0
      %v1793 = vadd.f32 %v1754, %v1792
      %1794 = vmatmul.f32.gmra.mxu0 %v1767
      %v1795 = vpop.f32.mrf.mxu0
      %v1796 = vadd.f32 %v1754, %v1795
      %1797 = vdwg.mxu0
      %v1798 = vadd.f32 %v1625, %v1787
      %v1799 = vadd.f32 %v1626, %v1790
      %v1800 = vadd.f32 %v1627, %v1793
      %v1801 = vadd.f32 %v1628, %v1796
      %s1802 = scalar_lea.vmem %s1, 32
      %v1803 = vld [vmem:[%s1802] sm:$0xff]
      %v1804 = vld [vmem:[%s1802 + $0x8] sm:$0xff]
      %v1805 = vld [vmem:[%s1802 + $0x10] sm:$0xff]
      %v1806 = vld [vmem:[%s1802 + $0x18] sm:$0xff]
      %s1807 = scalar_lea.vmem %s2, 1
      %v1808 = vld [vmem:[%s1807] sm:$0x1]
      %s1809 = scalar_lea.vmem %s3, 32
      %v1810 = vld [vmem:[%s1809] sm:$0xff]
      %v1811 = vld [vmem:[%s1809 + $0x8] sm:$0xff]
      %v1812 = vld [vmem:[%s1809 + $0x10] sm:$0xff]
      %v1813 = vld [vmem:[%s1809 + $0x18] sm:$0xff]
      %s1814 = scalar_lea.vmem %s4, 1
      %v1815 = vld [vmem:[%s1814] sm:$0x1]
      %s1816 = scalar_lea.vmem %s5, 32
      %v1817 = vld [vmem:[%s1816] sm:$0xff]
      %v1818 = vld [vmem:[%s1816 + $0x8] sm:$0xff]
      %v1819 = vld [vmem:[%s1816 + $0x10] sm:$0xff]
      %v1820 = vld [vmem:[%s1816 + $0x18] sm:$0xff]
      %s1821 = scalar_lea.vmem %s6, 1
      %v1822 = vld [vmem:[%s1821] sm:$0x1]
      %s1823 = scalar_lea.vmem %s7, 64
      %v1824 = vld [vmem:[%s1823] sm:$0xff]
      %v1825 = vld [vmem:[%s1823 + $0x8] sm:$0xff]
      %v1826 = vld [vmem:[%s1823 + $0x10] sm:$0xff]
      %v1827 = vld [vmem:[%s1823 + $0x18] sm:$0xff]
      %v1828 = vld [vmem:[%s1823 + $0x20] sm:$0xff]
      %v1829 = vld [vmem:[%s1823 + $0x28] sm:$0xff]
      %v1830 = vld [vmem:[%s1823 + $0x30] sm:$0xff]
      %v1831 = vld [vmem:[%s1823 + $0x38] sm:$0xff]
      %s1832 = scalar_lea.vmem %s8, 1
      %v1833 = vld [vmem:[%s1832] sm:$0x1]
      %v1835 = vperm.slane %v1808, 0
      %v1838 = vsel %vm367, %v1798, 0
      %v1841 = vsel %vm367, %v1799, 0
      %v1844 = vsel %vm367, %v1800, 0
      %v1847 = vsel %vm367, %v1801, 0
      %1849 = vmatpush.msra.mxu0 0.0
      %1850 = vmatpush.msra.mxu0 0.0
      %1851 = vmatpush.msra.mxu0 0.0
      %1852 = vmatpush.msra.mxu0 0.0
      %1853 = vmatpush.msra.mxu0 0.0
      %1854 = vmatpush.msra.mxu0 0.0
      %1855 = vmatpush.msra.mxu0 0.0
      %1856 = vmatpush.msra.mxu0 0.0
      %1857 = vmatpush.msra.mxu0 0.0
      %1858 = vmatpush.msra.mxu0 0.0
      %1859 = vmatpush.msra.mxu0 0.0
      %1860 = vmatpush.msra.mxu0 0.0
      %1861 = vmatpush.msra.mxu0 %v1806
      %1862 = vmatpush.msra.mxu0 %v1805
      %1863 = vmatpush.msra.mxu0 %v1804
      %1864 = vmatpush.msra.mxu0 %v1803
      %1865 = vmatmul.f32.gmra.mxu0 %v1838
      %v1866 = vpop.f32.mrf.mxu0
      %v1867 = vadd.f32 %v1835, %v1866
      %1868 = vmatmul.f32.gmra.mxu0 %v1841
      %v1869 = vpop.f32.mrf.mxu0
      %v1870 = vadd.f32 %v1835, %v1869
      %1871 = vmatmul.f32.gmra.mxu0 %v1844
      %v1872 = vpop.f32.mrf.mxu0
      %v1873 = vadd.f32 %v1835, %v1872
      %1874 = vmatmul.f32.gmra.mxu0 %v1847
      %v1875 = vpop.f32.mrf.mxu0
      %v1876 = vadd.f32 %v1835, %v1875
      %1877 = vdwg.mxu0
      %1879 = vrot.lane.b32.xlu0 %v1867, 96
      %v1880 = vpop.permute.xlu0 %1879
      %v1881 = vsel %vm412, %v1867, 0
      %v1883 = vsel %vm412, %v1880, 0
      %1885 = vmatpush.xpose.msra.mxu0 0.0
      %1886 = vmatpush.xpose.msra.mxu0 0.0
      %1887 = vmatpush.xpose.msra.mxu0 0.0
      %1888 = vmatpush.xpose.msra.mxu0 0.0
      %1889 = vmatpush.xpose.msra.mxu0 0.0
      %1890 = vmatpush.xpose.msra.mxu0 0.0
      %1891 = vmatpush.xpose.msra.mxu0 0.0
      %1892 = vmatpush.xpose.msra.mxu0 0.0
      %1893 = vmatpush.xpose.msra.mxu0 0.0
      %1894 = vmatpush.xpose.msra.mxu0 0.0
      %1895 = vmatpush.xpose.msra.mxu0 0.0
      %1896 = vmatpush.xpose.msra.mxu0 0.0
      %1897 = vmatpush.xpose.msra.mxu0 0.0
      %1898 = vmatpush.xpose.msra.mxu0 0.0
      %1899 = vmatpush.xpose.msra.mxu0 0.0
      %1900 = vmatpush.xpose.msra.mxu0 %v1883
      %1901 = vmatmul.f32.gmra.mxu0 %v1881
      %v1902 = vpop.f32.mrf.mxu0
      %v1903 = vadd.f32 0.0, %v1902
      %1904 = vdwg.mxu0
      %1906 = vrot.lane.b32.xlu0 %v1870, 96
      %v1907 = vpop.permute.xlu0 %1906
      %v1908 = vsel %vm412, %v1870, 0
      %v1910 = vsel %vm412, %v1907, 0
      %1912 = vmatpush.xpose.msra.mxu0 0.0
      %1913 = vmatpush.xpose.msra.mxu0 0.0
      %1914 = vmatpush.xpose.msra.mxu0 0.0
      %1915 = vmatpush.xpose.msra.mxu0 0.0
      %1916 = vmatpush.xpose.msra.mxu0 0.0
      %1917 = vmatpush.xpose.msra.mxu0 0.0
      %1918 = vmatpush.xpose.msra.mxu0 0.0
      %1919 = vmatpush.xpose.msra.mxu0 0.0
      %1920 = vmatpush.xpose.msra.mxu0 0.0
      %1921 = vmatpush.xpose.msra.mxu0 0.0
      %1922 = vmatpush.xpose.msra.mxu0 0.0
      %1923 = vmatpush.xpose.msra.mxu0 0.0
      %1924 = vmatpush.xpose.msra.mxu0 0.0
      %1925 = vmatpush.xpose.msra.mxu0 0.0
      %1926 = vmatpush.xpose.msra.mxu0 0.0
      %1927 = vmatpush.xpose.msra.mxu0 %v1910
      %1928 = vmatmul.f32.gmra.mxu0 %v1908
      %v1929 = vpop.f32.mrf.mxu0
      %v1930 = vadd.f32 0.0, %v1929
      %1931 = vdwg.mxu0
      %1933 = vrot.lane.b32.xlu0 %v1873, 96
      %v1934 = vpop.permute.xlu0 %1933
      %v1935 = vsel %vm412, %v1873, 0
      %v1937 = vsel %vm412, %v1934, 0
      %1939 = vmatpush.xpose.msra.mxu0 0.0
      %1940 = vmatpush.xpose.msra.mxu0 0.0
      %1941 = vmatpush.xpose.msra.mxu0 0.0
      %1942 = vmatpush.xpose.msra.mxu0 0.0
      %1943 = vmatpush.xpose.msra.mxu0 0.0
      %1944 = vmatpush.xpose.msra.mxu0 0.0
      %1945 = vmatpush.xpose.msra.mxu0 0.0
      %1946 = vmatpush.xpose.msra.mxu0 0.0
      %1947 = vmatpush.xpose.msra.mxu0 0.0
      %1948 = vmatpush.xpose.msra.mxu0 0.0
      %1949 = vmatpush.xpose.msra.mxu0 0.0
      %1950 = vmatpush.xpose.msra.mxu0 0.0
      %1951 = vmatpush.xpose.msra.mxu0 0.0
      %1952 = vmatpush.xpose.msra.mxu0 0.0
      %1953 = vmatpush.xpose.msra.mxu0 0.0
      %1954 = vmatpush.xpose.msra.mxu0 %v1937
      %1955 = vmatmul.f32.gmra.mxu0 %v1935
      %v1956 = vpop.f32.mrf.mxu0
      %v1957 = vadd.f32 0.0, %v1956
      %1958 = vdwg.mxu0
      %1960 = vrot.lane.b32.xlu0 %v1876, 96
      %v1961 = vpop.permute.xlu0 %1960
      %v1962 = vsel %vm412, %v1876, 0
      %v1964 = vsel %vm412, %v1961, 0
      %1966 = vmatpush.xpose.msra.mxu0 0.0
      %1967 = vmatpush.xpose.msra.mxu0 0.0
      %1968 = vmatpush.xpose.msra.mxu0 0.0
      %1969 = vmatpush.xpose.msra.mxu0 0.0
      %1970 = vmatpush.xpose.msra.mxu0 0.0
      %1971 = vmatpush.xpose.msra.mxu0 0.0
      %1972 = vmatpush.xpose.msra.mxu0 0.0
      %1973 = vmatpush.xpose.msra.mxu0 0.0
      %1974 = vmatpush.xpose.msra.mxu0 0.0
      %1975 = vmatpush.xpose.msra.mxu0 0.0
      %1976 = vmatpush.xpose.msra.mxu0 0.0
      %1977 = vmatpush.xpose.msra.mxu0 0.0
      %1978 = vmatpush.xpose.msra.mxu0 0.0
      %1979 = vmatpush.xpose.msra.mxu0 0.0
      %1980 = vmatpush.xpose.msra.mxu0 0.0
      %1981 = vmatpush.xpose.msra.mxu0 %v1964
      %1982 = vmatmul.f32.gmra.mxu0 %v1962
      %v1983 = vpop.f32.mrf.mxu0
      %v1984 = vadd.f32 0.0, %v1983
      %1985 = vdwg.mxu0
      %v1986 = vsel %vm412, %v1903, -inf
      %1987 = vmax.xlane.f32.xlu0 %v1986
      %v1988 = vpop.xlane.xlu0 %1987
      %v1989 = vsel %vm412, %v1930, -inf
      %1990 = vmax.xlane.f32.xlu0 %v1989
      %v1991 = vpop.xlane.xlu0 %1990
      %v1992 = vsel %vm412, %v1957, -inf
      %1993 = vmax.xlane.f32.xlu0 %v1992
      %v1994 = vpop.xlane.xlu0 %1993
      %v1995 = vsel %vm412, %v1984, -inf
      %1996 = vmax.xlane.f32.xlu0 %v1995
      %v1997 = vpop.xlane.xlu0 %1996
      %v1998 = vsub.f32 %v1903, %v1988
      %v1999 = vsub.f32 %v1930, %v1991
      %v2000 = vsub.f32 %v1957, %v1994
      %v2001 = vsub.f32 %v1984, %v1997
      %v2002 = vmul.f32 %v1998, 1.442695
      %v2003 = vpow.pop %v2002
      %v2004 = vmul.f32 %v1999, 1.442695
      %v2005 = vpow.pop %v2004
      %v2006 = vmul.f32 %v2000, 1.442695
      %v2007 = vpow.pop %v2006
      %v2008 = vmul.f32 %v2001, 1.442695
      %v2009 = vpow.pop %v2008
      %v2010 = vsel %vm412, %v2003, 0.0
      %2011 = vadd.xlane.f32.xlu0 %v2010
      %v2012 = vpop.xlane.xlu0 %2011
      %v2013 = vsel %vm412, %v2005, 0.0
      %2014 = vadd.xlane.f32.xlu0 %v2013
      %v2015 = vpop.xlane.xlu0 %2014
      %v2016 = vsel %vm412, %v2007, 0.0
      %2017 = vadd.xlane.f32.xlu0 %v2016
      %v2018 = vpop.xlane.xlu0 %2017
      %v2019 = vsel %vm412, %v2009, 0.0
      %2020 = vadd.xlane.f32.xlu0 %v2019
      %v2021 = vpop.xlane.xlu0 %2020
      %v2022 = vrcp.pop %v2012
      %v2023 = vrcp.pop %v2015
      %v2024 = vrcp.pop %v2018
      %v2025 = vrcp.pop %v2021
      %v2026 = vmul.f32 %v2003, %v2022
      %v2027 = vmul.f32 %v2005, %v2023
      %v2028 = vmul.f32 %v2007, %v2024
      %v2029 = vmul.f32 %v2009, %v2025
      %2030 = vrot.lane.b32.xlu0 %v1867, 64
      %v2031 = vpop.permute.xlu0 %2030
      %v2034 = vsel %vm412, %v2026, 0
      %2036 = vmatpush.msra.mxu0 0.0
      %2037 = vmatpush.msra.mxu0 0.0
      %2038 = vmatpush.msra.mxu0 0.0
      %2039 = vmatpush.msra.mxu0 0.0
      %2040 = vmatpush.msra.mxu0 0.0
      %2041 = vmatpush.msra.mxu0 0.0
      %2042 = vmatpush.msra.mxu0 0.0
      %2043 = vmatpush.msra.mxu0 0.0
      %2044 = vmatpush.msra.mxu0 0.0
      %2045 = vmatpush.msra.mxu0 0.0
      %2046 = vmatpush.msra.mxu0 0.0
      %2047 = vmatpush.msra.mxu0 0.0
      %2048 = vmatpush.msra.mxu0 0.0
      %2049 = vmatpush.msra.mxu0 0.0
      %2050 = vmatpush.msra.mxu0 0.0
      %2051 = vmatpush.msra.mxu0 %v2031
      %2052 = vmatmul.f32.gmra.mxu0 %v2034
      %v2053 = vpop.f32.mrf.mxu0
      %v2054 = vadd.f32 0.0, %v2053
      %2055 = vdwg.mxu0
      %2056 = vrot.lane.b32.xlu0 %v1870, 64
      %v2057 = vpop.permute.xlu0 %2056
      %v2060 = vsel %vm412, %v2027, 0
      %2062 = vmatpush.msra.mxu0 0.0
      %2063 = vmatpush.msra.mxu0 0.0
      %2064 = vmatpush.msra.mxu0 0.0
      %2065 = vmatpush.msra.mxu0 0.0
      %2066 = vmatpush.msra.mxu0 0.0
      %2067 = vmatpush.msra.mxu0 0.0
      %2068 = vmatpush.msra.mxu0 0.0
      %2069 = vmatpush.msra.mxu0 0.0
      %2070 = vmatpush.msra.mxu0 0.0
      %2071 = vmatpush.msra.mxu0 0.0
      %2072 = vmatpush.msra.mxu0 0.0
      %2073 = vmatpush.msra.mxu0 0.0
      %2074 = vmatpush.msra.mxu0 0.0
      %2075 = vmatpush.msra.mxu0 0.0
      %2076 = vmatpush.msra.mxu0 0.0
      %2077 = vmatpush.msra.mxu0 %v2057
      %2078 = vmatmul.f32.gmra.mxu0 %v2060
      %v2079 = vpop.f32.mrf.mxu0
      %v2080 = vadd.f32 0.0, %v2079
      %2081 = vdwg.mxu0
      %2082 = vrot.lane.b32.xlu0 %v1873, 64
      %v2083 = vpop.permute.xlu0 %2082
      %v2086 = vsel %vm412, %v2028, 0
      %2088 = vmatpush.msra.mxu0 0.0
      %2089 = vmatpush.msra.mxu0 0.0
      %2090 = vmatpush.msra.mxu0 0.0
      %2091 = vmatpush.msra.mxu0 0.0
      %2092 = vmatpush.msra.mxu0 0.0
      %2093 = vmatpush.msra.mxu0 0.0
      %2094 = vmatpush.msra.mxu0 0.0
      %2095 = vmatpush.msra.mxu0 0.0
      %2096 = vmatpush.msra.mxu0 0.0
      %2097 = vmatpush.msra.mxu0 0.0
      %2098 = vmatpush.msra.mxu0 0.0
      %2099 = vmatpush.msra.mxu0 0.0
      %2100 = vmatpush.msra.mxu0 0.0
      %2101 = vmatpush.msra.mxu0 0.0
      %2102 = vmatpush.msra.mxu0 0.0
      %2103 = vmatpush.msra.mxu0 %v2083
      %2104 = vmatmul.f32.gmra.mxu0 %v2086
      %v2105 = vpop.f32.mrf.mxu0
      %v2106 = vadd.f32 0.0, %v2105
      %2107 = vdwg.mxu0
      %2108 = vrot.lane.b32.xlu0 %v1876, 64
      %v2109 = vpop.permute.xlu0 %2108
      %v2112 = vsel %vm412, %v2029, 0
      %2114 = vmatpush.msra.mxu0 0.0
      %2115 = vmatpush.msra.mxu0 0.0
      %2116 = vmatpush.msra.mxu0 0.0
      %2117 = vmatpush.msra.mxu0 0.0
      %2118 = vmatpush.msra.mxu0 0.0
      %2119 = vmatpush.msra.mxu0 0.0
      %2120 = vmatpush.msra.mxu0 0.0
      %2121 = vmatpush.msra.mxu0 0.0
      %2122 = vmatpush.msra.mxu0 0.0
      %2123 = vmatpush.msra.mxu0 0.0
      %2124 = vmatpush.msra.mxu0 0.0
      %2125 = vmatpush.msra.mxu0 0.0
      %2126 = vmatpush.msra.mxu0 0.0
      %2127 = vmatpush.msra.mxu0 0.0
      %2128 = vmatpush.msra.mxu0 0.0
      %2129 = vmatpush.msra.mxu0 %v2109
      %2130 = vmatmul.f32.gmra.mxu0 %v2112
      %v2131 = vpop.f32.mrf.mxu0
      %v2132 = vadd.f32 0.0, %v2131
      %2133 = vdwg.mxu0
      %2134 = vrot.lane.b32.xlu0 %v1867, 120
      %v2135 = vpop.permute.xlu0 %2134
      %2136 = vrot.lane.b32.xlu0 %v1867, 88
      %v2137 = vpop.permute.xlu0 %2136
      %v2138 = vsel %vm412, %v2135, 0
      %v2140 = vsel %vm412, %v2137, 0
      %2142 = vmatpush.xpose.msra.mxu0 0.0
      %2143 = vmatpush.xpose.msra.mxu0 0.0
      %2144 = vmatpush.xpose.msra.mxu0 0.0
      %2145 = vmatpush.xpose.msra.mxu0 0.0
      %2146 = vmatpush.xpose.msra.mxu0 0.0
      %2147 = vmatpush.xpose.msra.mxu0 0.0
      %2148 = vmatpush.xpose.msra.mxu0 0.0
      %2149 = vmatpush.xpose.msra.mxu0 0.0
      %2150 = vmatpush.xpose.msra.mxu0 0.0
      %2151 = vmatpush.xpose.msra.mxu0 0.0
      %2152 = vmatpush.xpose.msra.mxu0 0.0
      %2153 = vmatpush.xpose.msra.mxu0 0.0
      %2154 = vmatpush.xpose.msra.mxu0 0.0
      %2155 = vmatpush.xpose.msra.mxu0 0.0
      %2156 = vmatpush.xpose.msra.mxu0 0.0
      %2157 = vmatpush.xpose.msra.mxu0 %v2140
      %2158 = vmatmul.f32.gmra.mxu0 %v2138
      %v2159 = vpop.f32.mrf.mxu0
      %v2160 = vadd.f32 0.0, %v2159
      %2161 = vdwg.mxu0
      %2162 = vrot.lane.b32.xlu0 %v1870, 120
      %v2163 = vpop.permute.xlu0 %2162
      %2164 = vrot.lane.b32.xlu0 %v1870, 88
      %v2165 = vpop.permute.xlu0 %2164
      %v2166 = vsel %vm412, %v2163, 0
      %v2168 = vsel %vm412, %v2165, 0
      %2170 = vmatpush.xpose.msra.mxu0 0.0
      %2171 = vmatpush.xpose.msra.mxu0 0.0
      %2172 = vmatpush.xpose.msra.mxu0 0.0
      %2173 = vmatpush.xpose.msra.mxu0 0.0
      %2174 = vmatpush.xpose.msra.mxu0 0.0
      %2175 = vmatpush.xpose.msra.mxu0 0.0
      %2176 = vmatpush.xpose.msra.mxu0 0.0
      %2177 = vmatpush.xpose.msra.mxu0 0.0
      %2178 = vmatpush.xpose.msra.mxu0 0.0
      %2179 = vmatpush.xpose.msra.mxu0 0.0
      %2180 = vmatpush.xpose.msra.mxu0 0.0
      %2181 = vmatpush.xpose.msra.mxu0 0.0
      %2182 = vmatpush.xpose.msra.mxu0 0.0
      %2183 = vmatpush.xpose.msra.mxu0 0.0
      %2184 = vmatpush.xpose.msra.mxu0 0.0
      %2185 = vmatpush.xpose.msra.mxu0 %v2168
      %2186 = vmatmul.f32.gmra.mxu0 %v2166
      %v2187 = vpop.f32.mrf.mxu0
      %v2188 = vadd.f32 0.0, %v2187
      %2189 = vdwg.mxu0
      %2190 = vrot.lane.b32.xlu0 %v1873, 120
      %v2191 = vpop.permute.xlu0 %2190
      %2192 = vrot.lane.b32.xlu0 %v1873, 88
      %v2193 = vpop.permute.xlu0 %2192
      %v2194 = vsel %vm412, %v2191, 0
      %v2196 = vsel %vm412, %v2193, 0
      %2198 = vmatpush.xpose.msra.mxu0 0.0
      %2199 = vmatpush.xpose.msra.mxu0 0.0
      %2200 = vmatpush.xpose.msra.mxu0 0.0
      %2201 = vmatpush.xpose.msra.mxu0 0.0
      %2202 = vmatpush.xpose.msra.mxu0 0.0
      %2203 = vmatpush.xpose.msra.mxu0 0.0
      %2204 = vmatpush.xpose.msra.mxu0 0.0
      %2205 = vmatpush.xpose.msra.mxu0 0.0
      %2206 = vmatpush.xpose.msra.mxu0 0.0
      %2207 = vmatpush.xpose.msra.mxu0 0.0
      %2208 = vmatpush.xpose.msra.mxu0 0.0
      %2209 = vmatpush.xpose.msra.mxu0 0.0
      %2210 = vmatpush.xpose.msra.mxu0 0.0
      %2211 = vmatpush.xpose.msra.mxu0 0.0
      %2212 = vmatpush.xpose.msra.mxu0 0.0
      %2213 = vmatpush.xpose.msra.mxu0 %v2196
      %2214 = vmatmul.f32.gmra.mxu0 %v2194
      %v2215 = vpop.f32.mrf.mxu0
      %v2216 = vadd.f32 0.0, %v2215
      %2217 = vdwg.mxu0
      %2218 = vrot.lane.b32.xlu0 %v1876, 120
      %v2219 = vpop.permute.xlu0 %2218
      %2220 = vrot.lane.b32.xlu0 %v1876, 88
      %v2221 = vpop.permute.xlu0 %2220
      %v2222 = vsel %vm412, %v2219, 0
      %v2224 = vsel %vm412, %v2221, 0
      %2226 = vmatpush.xpose.msra.mxu0 0.0
      %2227 = vmatpush.xpose.msra.mxu0 0.0
      %2228 = vmatpush.xpose.msra.mxu0 0.0
      %2229 = vmatpush.xpose.msra.mxu0 0.0
      %2230 = vmatpush.xpose.msra.mxu0 0.0
      %2231 = vmatpush.xpose.msra.mxu0 0.0
      %2232 = vmatpush.xpose.msra.mxu0 0.0
      %2233 = vmatpush.xpose.msra.mxu0 0.0
      %2234 = vmatpush.xpose.msra.mxu0 0.0
      %2235 = vmatpush.xpose.msra.mxu0 0.0
      %2236 = vmatpush.xpose.msra.mxu0 0.0
      %2237 = vmatpush.xpose.msra.mxu0 0.0
      %2238 = vmatpush.xpose.msra.mxu0 0.0
      %2239 = vmatpush.xpose.msra.mxu0 0.0
      %2240 = vmatpush.xpose.msra.mxu0 0.0
      %2241 = vmatpush.xpose.msra.mxu0 %v2224
      %2242 = vmatmul.f32.gmra.mxu0 %v2222
      %v2243 = vpop.f32.mrf.mxu0
      %v2244 = vadd.f32 0.0, %v2243
      %2245 = vdwg.mxu0
      %v2246 = vsel %vm412, %v2160, -inf
      %2247 = vmax.xlane.f32.xlu0 %v2246
      %v2248 = vpop.xlane.xlu0 %2247
      %v2249 = vsel %vm412, %v2188, -inf
      %2250 = vmax.xlane.f32.xlu0 %v2249
      %v2251 = vpop.xlane.xlu0 %2250
      %v2252 = vsel %vm412, %v2216, -inf
      %2253 = vmax.xlane.f32.xlu0 %v2252
      %v2254 = vpop.xlane.xlu0 %2253
      %v2255 = vsel %vm412, %v2244, -inf
      %2256 = vmax.xlane.f32.xlu0 %v2255
      %v2257 = vpop.xlane.xlu0 %2256
      %v2258 = vsub.f32 %v2160, %v2248
      %v2259 = vsub.f32 %v2188, %v2251
      %v2260 = vsub.f32 %v2216, %v2254
      %v2261 = vsub.f32 %v2244, %v2257
      %v2262 = vmul.f32 %v2258, 1.442695
      %v2263 = vpow.pop %v2262
      %v2264 = vmul.f32 %v2259, 1.442695
      %v2265 = vpow.pop %v2264
      %v2266 = vmul.f32 %v2260, 1.442695
      %v2267 = vpow.pop %v2266
      %v2268 = vmul.f32 %v2261, 1.442695
      %v2269 = vpow.pop %v2268
      %v2270 = vsel %vm412, %v2263, 0.0
      %2271 = vadd.xlane.f32.xlu0 %v2270
      %v2272 = vpop.xlane.xlu0 %2271
      %v2273 = vsel %vm412, %v2265, 0.0
      %2274 = vadd.xlane.f32.xlu0 %v2273
      %v2275 = vpop.xlane.xlu0 %2274
      %v2276 = vsel %vm412, %v2267, 0.0
      %2277 = vadd.xlane.f32.xlu0 %v2276
      %v2278 = vpop.xlane.xlu0 %2277
      %v2279 = vsel %vm412, %v2269, 0.0
      %2280 = vadd.xlane.f32.xlu0 %v2279
      %v2281 = vpop.xlane.xlu0 %2280
      %v2282 = vrcp.pop %v2272
      %v2283 = vrcp.pop %v2275
      %v2284 = vrcp.pop %v2278
      %v2285 = vrcp.pop %v2281
      %v2286 = vmul.f32 %v2263, %v2282
      %v2287 = vmul.f32 %v2265, %v2283
      %v2288 = vmul.f32 %v2267, %v2284
      %v2289 = vmul.f32 %v2269, %v2285
      %2290 = vrot.lane.b32.xlu0 %v1867, 56
      %v2291 = vpop.permute.xlu0 %2290
      %v2294 = vsel %vm412, %v2286, 0
      %2296 = vmatpush.msra.mxu0 0.0
      %2297 = vmatpush.msra.mxu0 0.0
      %2298 = vmatpush.msra.mxu0 0.0
      %2299 = vmatpush.msra.mxu0 0.0
      %2300 = vmatpush.msra.mxu0 0.0
      %2301 = vmatpush.msra.mxu0 0.0
      %2302 = vmatpush.msra.mxu0 0.0
      %2303 = vmatpush.msra.mxu0 0.0
      %2304 = vmatpush.msra.mxu0 0.0
      %2305 = vmatpush.msra.mxu0 0.0
      %2306 = vmatpush.msra.mxu0 0.0
      %2307 = vmatpush.msra.mxu0 0.0
      %2308 = vmatpush.msra.mxu0 0.0
      %2309 = vmatpush.msra.mxu0 0.0
      %2310 = vmatpush.msra.mxu0 0.0
      %2311 = vmatpush.msra.mxu0 %v2291
      %2312 = vmatmul.f32.gmra.mxu0 %v2294
      %v2313 = vpop.f32.mrf.mxu0
      %v2314 = vadd.f32 0.0, %v2313
      %2315 = vdwg.mxu0
      %2316 = vrot.lane.b32.xlu0 %v1870, 56
      %v2317 = vpop.permute.xlu0 %2316
      %v2320 = vsel %vm412, %v2287, 0
      %2322 = vmatpush.msra.mxu0 0.0
      %2323 = vmatpush.msra.mxu0 0.0
      %2324 = vmatpush.msra.mxu0 0.0
      %2325 = vmatpush.msra.mxu0 0.0
      %2326 = vmatpush.msra.mxu0 0.0
      %2327 = vmatpush.msra.mxu0 0.0
      %2328 = vmatpush.msra.mxu0 0.0
      %2329 = vmatpush.msra.mxu0 0.0
      %2330 = vmatpush.msra.mxu0 0.0
      %2331 = vmatpush.msra.mxu0 0.0
      %2332 = vmatpush.msra.mxu0 0.0
      %2333 = vmatpush.msra.mxu0 0.0
      %2334 = vmatpush.msra.mxu0 0.0
      %2335 = vmatpush.msra.mxu0 0.0
      %2336 = vmatpush.msra.mxu0 0.0
      %2337 = vmatpush.msra.mxu0 %v2317
      %2338 = vmatmul.f32.gmra.mxu0 %v2320
      %v2339 = vpop.f32.mrf.mxu0
      %v2340 = vadd.f32 0.0, %v2339
      %2341 = vdwg.mxu0
      %2342 = vrot.lane.b32.xlu0 %v1873, 56
      %v2343 = vpop.permute.xlu0 %2342
      %v2346 = vsel %vm412, %v2288, 0
      %2348 = vmatpush.msra.mxu0 0.0
      %2349 = vmatpush.msra.mxu0 0.0
      %2350 = vmatpush.msra.mxu0 0.0
      %2351 = vmatpush.msra.mxu0 0.0
      %2352 = vmatpush.msra.mxu0 0.0
      %2353 = vmatpush.msra.mxu0 0.0
      %2354 = vmatpush.msra.mxu0 0.0
      %2355 = vmatpush.msra.mxu0 0.0
      %2356 = vmatpush.msra.mxu0 0.0
      %2357 = vmatpush.msra.mxu0 0.0
      %2358 = vmatpush.msra.mxu0 0.0
      %2359 = vmatpush.msra.mxu0 0.0
      %2360 = vmatpush.msra.mxu0 0.0
      %2361 = vmatpush.msra.mxu0 0.0
      %2362 = vmatpush.msra.mxu0 0.0
      %2363 = vmatpush.msra.mxu0 %v2343
      %2364 = vmatmul.f32.gmra.mxu0 %v2346
      %v2365 = vpop.f32.mrf.mxu0
      %v2366 = vadd.f32 0.0, %v2365
      %2367 = vdwg.mxu0
      %2368 = vrot.lane.b32.xlu0 %v1876, 56
      %v2369 = vpop.permute.xlu0 %2368
      %v2372 = vsel %vm412, %v2289, 0
      %2374 = vmatpush.msra.mxu0 0.0
      %2375 = vmatpush.msra.mxu0 0.0
      %2376 = vmatpush.msra.mxu0 0.0
      %2377 = vmatpush.msra.mxu0 0.0
      %2378 = vmatpush.msra.mxu0 0.0
      %2379 = vmatpush.msra.mxu0 0.0
      %2380 = vmatpush.msra.mxu0 0.0
      %2381 = vmatpush.msra.mxu0 0.0
      %2382 = vmatpush.msra.mxu0 0.0
      %2383 = vmatpush.msra.mxu0 0.0
      %2384 = vmatpush.msra.mxu0 0.0
      %2385 = vmatpush.msra.mxu0 0.0
      %2386 = vmatpush.msra.mxu0 0.0
      %2387 = vmatpush.msra.mxu0 0.0
      %2388 = vmatpush.msra.mxu0 0.0
      %2389 = vmatpush.msra.mxu0 %v2369
      %2390 = vmatmul.f32.gmra.mxu0 %v2372
      %v2391 = vpop.f32.mrf.mxu0
      %v2392 = vadd.f32 0.0, %v2391
      %2393 = vdwg.mxu0
      %v2395 = vsel %vm412, %v2314, 0
      %v2398 = vsel %vm412, %v2340, 0
      %v2401 = vsel %vm412, %v2366, 0
      %v2404 = vsel %vm412, %v2392, 0
      %2406 = vmatpush.msra.mxu0 0.0
      %2407 = vmatpush.msra.mxu0 0.0
      %2408 = vmatpush.msra.mxu0 0.0
      %2409 = vmatpush.msra.mxu0 0.0
      %2410 = vmatpush.msra.mxu0 0.0
      %2411 = vmatpush.msra.mxu0 0.0
      %2412 = vmatpush.msra.mxu0 0.0
      %2413 = vmatpush.msra.mxu0 0.0
      %2414 = vmatpush.msra.mxu0 0.0
      %2415 = vmatpush.msra.mxu0 0.0
      %2416 = vmatpush.msra.mxu0 0.0
      %2417 = vmatpush.msra.mxu0 0.0
      %2418 = vmatpush.msra.mxu0 0.0
      %2419 = vmatpush.msra.mxu0 0.0
      %2420 = vmatpush.msra.mxu0 0.0
      %2421 = vmatpush.msra.mxu0 %v1811
      %2422 = vmatmul.f32.gmra.mxu0 %v2395
      %v2423 = vpop.f32.mrf.mxu0
      %v2424 = vadd.f32 0.0, %v2423
      %2425 = vmatmul.f32.gmra.mxu0 %v2398
      %v2426 = vpop.f32.mrf.mxu0
      %v2427 = vadd.f32 0.0, %v2426
      %2428 = vmatmul.f32.gmra.mxu0 %v2401
      %v2429 = vpop.f32.mrf.mxu0
      %v2430 = vadd.f32 0.0, %v2429
      %2431 = vmatmul.f32.gmra.mxu0 %v2404
      %v2432 = vpop.f32.mrf.mxu0
      %v2433 = vadd.f32 0.0, %v2432
      %2434 = vdwg.mxu0
      %v2436 = vsel %vm412, %v2054, 0
      %v2439 = vsel %vm412, %v2080, 0
      %v2442 = vsel %vm412, %v2106, 0
      %v2445 = vsel %vm412, %v2132, 0
      %2447 = vmatpush.msra.mxu0 0.0
      %2448 = vmatpush.msra.mxu0 0.0
      %2449 = vmatpush.msra.mxu0 0.0
      %2450 = vmatpush.msra.mxu0 0.0
      %2451 = vmatpush.msra.mxu0 0.0
      %2452 = vmatpush.msra.mxu0 0.0
      %2453 = vmatpush.msra.mxu0 0.0
      %2454 = vmatpush.msra.mxu0 0.0
      %2455 = vmatpush.msra.mxu0 0.0
      %2456 = vmatpush.msra.mxu0 0.0
      %2457 = vmatpush.msra.mxu0 0.0
      %2458 = vmatpush.msra.mxu0 0.0
      %2459 = vmatpush.msra.mxu0 0.0
      %2460 = vmatpush.msra.mxu0 0.0
      %2461 = vmatpush.msra.mxu0 0.0
      %2462 = vmatpush.msra.mxu0 %v1810
      %2463 = vmatmul.f32.gmra.mxu0 %v2436
      %v2464 = vpop.f32.mrf.mxu0
      %v2465 = vadd.f32 %v2424, %v2464
      %2466 = vmatmul.f32.gmra.mxu0 %v2439
      %v2467 = vpop.f32.mrf.mxu0
      %v2468 = vadd.f32 %v2427, %v2467
      %2469 = vmatmul.f32.gmra.mxu0 %v2442
      %v2470 = vpop.f32.mrf.mxu0
      %v2471 = vadd.f32 %v2430, %v2470
      %2472 = vmatmul.f32.gmra.mxu0 %v2445
      %v2473 = vpop.f32.mrf.mxu0
      %v2474 = vadd.f32 %v2433, %v2473
      %2475 = vdwg.mxu0
      %2476 = vrot.lane.b32.xlu0 %v1867, 112
      %v2477 = vpop.permute.xlu0 %2476
      %2478 = vrot.lane.b32.xlu0 %v1867, 80
      %v2479 = vpop.permute.xlu0 %2478
      %v2480 = vsel %vm412, %v2477, 0
      %v2482 = vsel %vm412, %v2479, 0
      %2484 = vmatpush.xpose.msra.mxu0 0.0
      %2485 = vmatpush.xpose.msra.mxu0 0.0
      %2486 = vmatpush.xpose.msra.mxu0 0.0
      %2487 = vmatpush.xpose.msra.mxu0 0.0
      %2488 = vmatpush.xpose.msra.mxu0 0.0
      %2489 = vmatpush.xpose.msra.mxu0 0.0
      %2490 = vmatpush.xpose.msra.mxu0 0.0
      %2491 = vmatpush.xpose.msra.mxu0 0.0
      %2492 = vmatpush.xpose.msra.mxu0 0.0
      %2493 = vmatpush.xpose.msra.mxu0 0.0
      %2494 = vmatpush.xpose.msra.mxu0 0.0
      %2495 = vmatpush.xpose.msra.mxu0 0.0
      %2496 = vmatpush.xpose.msra.mxu0 0.0
      %2497 = vmatpush.xpose.msra.mxu0 0.0
      %2498 = vmatpush.xpose.msra.mxu0 0.0
      %2499 = vmatpush.xpose.msra.mxu0 %v2482
      %2500 = vmatmul.f32.gmra.mxu0 %v2480
      %v2501 = vpop.f32.mrf.mxu0
      %v2502 = vadd.f32 0.0, %v2501
      %2503 = vdwg.mxu0
      %2504 = vrot.lane.b32.xlu0 %v1870, 112
      %v2505 = vpop.permute.xlu0 %2504
      %2506 = vrot.lane.b32.xlu0 %v1870, 80
      %v2507 = vpop.permute.xlu0 %2506
      %v2508 = vsel %vm412, %v2505, 0
      %v2510 = vsel %vm412, %v2507, 0
      %2512 = vmatpush.xpose.msra.mxu0 0.0
      %2513 = vmatpush.xpose.msra.mxu0 0.0
      %2514 = vmatpush.xpose.msra.mxu0 0.0
      %2515 = vmatpush.xpose.msra.mxu0 0.0
      %2516 = vmatpush.xpose.msra.mxu0 0.0
      %2517 = vmatpush.xpose.msra.mxu0 0.0
      %2518 = vmatpush.xpose.msra.mxu0 0.0
      %2519 = vmatpush.xpose.msra.mxu0 0.0
      %2520 = vmatpush.xpose.msra.mxu0 0.0
      %2521 = vmatpush.xpose.msra.mxu0 0.0
      %2522 = vmatpush.xpose.msra.mxu0 0.0
      %2523 = vmatpush.xpose.msra.mxu0 0.0
      %2524 = vmatpush.xpose.msra.mxu0 0.0
      %2525 = vmatpush.xpose.msra.mxu0 0.0
      %2526 = vmatpush.xpose.msra.mxu0 0.0
      %2527 = vmatpush.xpose.msra.mxu0 %v2510
      %2528 = vmatmul.f32.gmra.mxu0 %v2508
      %v2529 = vpop.f32.mrf.mxu0
      %v2530 = vadd.f32 0.0, %v2529
      %2531 = vdwg.mxu0
      %2532 = vrot.lane.b32.xlu0 %v1873, 112
      %v2533 = vpop.permute.xlu0 %2532
      %2534 = vrot.lane.b32.xlu0 %v1873, 80
      %v2535 = vpop.permute.xlu0 %2534
      %v2536 = vsel %vm412, %v2533, 0
      %v2538 = vsel %vm412, %v2535, 0
      %2540 = vmatpush.xpose.msra.mxu0 0.0
      %2541 = vmatpush.xpose.msra.mxu0 0.0
      %2542 = vmatpush.xpose.msra.mxu0 0.0
      %2543 = vmatpush.xpose.msra.mxu0 0.0
      %2544 = vmatpush.xpose.msra.mxu0 0.0
      %2545 = vmatpush.xpose.msra.mxu0 0.0
      %2546 = vmatpush.xpose.msra.mxu0 0.0
      %2547 = vmatpush.xpose.msra.mxu0 0.0
      %2548 = vmatpush.xpose.msra.mxu0 0.0
      %2549 = vmatpush.xpose.msra.mxu0 0.0
      %2550 = vmatpush.xpose.msra.mxu0 0.0
      %2551 = vmatpush.xpose.msra.mxu0 0.0
      %2552 = vmatpush.xpose.msra.mxu0 0.0
      %2553 = vmatpush.xpose.msra.mxu0 0.0
      %2554 = vmatpush.xpose.msra.mxu0 0.0
      %2555 = vmatpush.xpose.msra.mxu0 %v2538
      %2556 = vmatmul.f32.gmra.mxu0 %v2536
      %v2557 = vpop.f32.mrf.mxu0
      %v2558 = vadd.f32 0.0, %v2557
      %2559 = vdwg.mxu0
      %2560 = vrot.lane.b32.xlu0 %v1876, 112
      %v2561 = vpop.permute.xlu0 %2560
      %2562 = vrot.lane.b32.xlu0 %v1876, 80
      %v2563 = vpop.permute.xlu0 %2562
      %v2564 = vsel %vm412, %v2561, 0
      %v2566 = vsel %vm412, %v2563, 0
      %2568 = vmatpush.xpose.msra.mxu0 0.0
      %2569 = vmatpush.xpose.msra.mxu0 0.0
      %2570 = vmatpush.xpose.msra.mxu0 0.0
      %2571 = vmatpush.xpose.msra.mxu0 0.0
      %2572 = vmatpush.xpose.msra.mxu0 0.0
      %2573 = vmatpush.xpose.msra.mxu0 0.0
      %2574 = vmatpush.xpose.msra.mxu0 0.0
      %2575 = vmatpush.xpose.msra.mxu0 0.0
      %2576 = vmatpush.xpose.msra.mxu0 0.0
      %2577 = vmatpush.xpose.msra.mxu0 0.0
      %2578 = vmatpush.xpose.msra.mxu0 0.0
      %2579 = vmatpush.xpose.msra.mxu0 0.0
      %2580 = vmatpush.xpose.msra.mxu0 0.0
      %2581 = vmatpush.xpose.msra.mxu0 0.0
      %2582 = vmatpush.xpose.msra.mxu0 0.0
      %2583 = vmatpush.xpose.msra.mxu0 %v2566
      %2584 = vmatmul.f32.gmra.mxu0 %v2564
      %v2585 = vpop.f32.mrf.mxu0
      %v2586 = vadd.f32 0.0, %v2585
      %2587 = vdwg.mxu0
      %v2588 = vsel %vm412, %v2502, -inf
      %2589 = vmax.xlane.f32.xlu0 %v2588
      %v2590 = vpop.xlane.xlu0 %2589
      %v2591 = vsel %vm412, %v2530, -inf
      %2592 = vmax.xlane.f32.xlu0 %v2591
      %v2593 = vpop.xlane.xlu0 %2592
      %v2594 = vsel %vm412, %v2558, -inf
      %2595 = vmax.xlane.f32.xlu0 %v2594
      %v2596 = vpop.xlane.xlu0 %2595
      %v2597 = vsel %vm412, %v2586, -inf
      %2598 = vmax.xlane.f32.xlu0 %v2597
      %v2599 = vpop.xlane.xlu0 %2598
      %v2600 = vsub.f32 %v2502, %v2590
      %v2601 = vsub.f32 %v2530, %v2593
      %v2602 = vsub.f32 %v2558, %v2596
      %v2603 = vsub.f32 %v2586, %v2599
      %v2604 = vmul.f32 %v2600, 1.442695
      %v2605 = vpow.pop %v2604
      %v2606 = vmul.f32 %v2601, 1.442695
      %v2607 = vpow.pop %v2606
      %v2608 = vmul.f32 %v2602, 1.442695
      %v2609 = vpow.pop %v2608
      %v2610 = vmul.f32 %v2603, 1.442695
      %v2611 = vpow.pop %v2610
      %v2612 = vsel %vm412, %v2605, 0.0
      %2613 = vadd.xlane.f32.xlu0 %v2612
      %v2614 = vpop.xlane.xlu0 %2613
      %v2615 = vsel %vm412, %v2607, 0.0
      %2616 = vadd.xlane.f32.xlu0 %v2615
      %v2617 = vpop.xlane.xlu0 %2616
      %v2618 = vsel %vm412, %v2609, 0.0
      %2619 = vadd.xlane.f32.xlu0 %v2618
      %v2620 = vpop.xlane.xlu0 %2619
      %v2621 = vsel %vm412, %v2611, 0.0
      %2622 = vadd.xlane.f32.xlu0 %v2621
      %v2623 = vpop.xlane.xlu0 %2622
      %v2624 = vrcp.pop %v2614
      %v2625 = vrcp.pop %v2617
      %v2626 = vrcp.pop %v2620
      %v2627 = vrcp.pop %v2623
      %v2628 = vmul.f32 %v2605, %v2624
      %v2629 = vmul.f32 %v2607, %v2625
      %v2630 = vmul.f32 %v2609, %v2626
      %v2631 = vmul.f32 %v2611, %v2627
      %2632 = vrot.lane.b32.xlu0 %v1867, 48
      %v2633 = vpop.permute.xlu0 %2632
      %v2636 = vsel %vm412, %v2628, 0
      %2638 = vmatpush.msra.mxu0 0.0
      %2639 = vmatpush.msra.mxu0 0.0
      %2640 = vmatpush.msra.mxu0 0.0
      %2641 = vmatpush.msra.mxu0 0.0
      %2642 = vmatpush.msra.mxu0 0.0
      %2643 = vmatpush.msra.mxu0 0.0
      %2644 = vmatpush.msra.mxu0 0.0
      %2645 = vmatpush.msra.mxu0 0.0
      %2646 = vmatpush.msra.mxu0 0.0
      %2647 = vmatpush.msra.mxu0 0.0
      %2648 = vmatpush.msra.mxu0 0.0
      %2649 = vmatpush.msra.mxu0 0.0
      %2650 = vmatpush.msra.mxu0 0.0
      %2651 = vmatpush.msra.mxu0 0.0
      %2652 = vmatpush.msra.mxu0 0.0
      %2653 = vmatpush.msra.mxu0 %v2633
      %2654 = vmatmul.f32.gmra.mxu0 %v2636
      %v2655 = vpop.f32.mrf.mxu0
      %v2656 = vadd.f32 0.0, %v2655
      %2657 = vdwg.mxu0
      %2658 = vrot.lane.b32.xlu0 %v1870, 48
      %v2659 = vpop.permute.xlu0 %2658
      %v2662 = vsel %vm412, %v2629, 0
      %2664 = vmatpush.msra.mxu0 0.0
      %2665 = vmatpush.msra.mxu0 0.0
      %2666 = vmatpush.msra.mxu0 0.0
      %2667 = vmatpush.msra.mxu0 0.0
      %2668 = vmatpush.msra.mxu0 0.0
      %2669 = vmatpush.msra.mxu0 0.0
      %2670 = vmatpush.msra.mxu0 0.0
      %2671 = vmatpush.msra.mxu0 0.0
      %2672 = vmatpush.msra.mxu0 0.0
      %2673 = vmatpush.msra.mxu0 0.0
      %2674 = vmatpush.msra.mxu0 0.0
      %2675 = vmatpush.msra.mxu0 0.0
      %2676 = vmatpush.msra.mxu0 0.0
      %2677 = vmatpush.msra.mxu0 0.0
      %2678 = vmatpush.msra.mxu0 0.0
      %2679 = vmatpush.msra.mxu0 %v2659
      %2680 = vmatmul.f32.gmra.mxu0 %v2662
      %v2681 = vpop.f32.mrf.mxu0
      %v2682 = vadd.f32 0.0, %v2681
      %2683 = vdwg.mxu0
      %2684 = vrot.lane.b32.xlu0 %v1873, 48
      %v2685 = vpop.permute.xlu0 %2684
      %v2688 = vsel %vm412, %v2630, 0
      %2690 = vmatpush.msra.mxu0 0.0
      %2691 = vmatpush.msra.mxu0 0.0
      %2692 = vmatpush.msra.mxu0 0.0
      %2693 = vmatpush.msra.mxu0 0.0
      %2694 = vmatpush.msra.mxu0 0.0
      %2695 = vmatpush.msra.mxu0 0.0
      %2696 = vmatpush.msra.mxu0 0.0
      %2697 = vmatpush.msra.mxu0 0.0
      %2698 = vmatpush.msra.mxu0 0.0
      %2699 = vmatpush.msra.mxu0 0.0
      %2700 = vmatpush.msra.mxu0 0.0
      %2701 = vmatpush.msra.mxu0 0.0
      %2702 = vmatpush.msra.mxu0 0.0
      %2703 = vmatpush.msra.mxu0 0.0
      %2704 = vmatpush.msra.mxu0 0.0
      %2705 = vmatpush.msra.mxu0 %v2685
      %2706 = vmatmul.f32.gmra.mxu0 %v2688
      %v2707 = vpop.f32.mrf.mxu0
      %v2708 = vadd.f32 0.0, %v2707
      %2709 = vdwg.mxu0
      %2710 = vrot.lane.b32.xlu0 %v1876, 48
      %v2711 = vpop.permute.xlu0 %2710
      %v2714 = vsel %vm412, %v2631, 0
      %2716 = vmatpush.msra.mxu0 0.0
      %2717 = vmatpush.msra.mxu0 0.0
      %2718 = vmatpush.msra.mxu0 0.0
      %2719 = vmatpush.msra.mxu0 0.0
      %2720 = vmatpush.msra.mxu0 0.0
      %2721 = vmatpush.msra.mxu0 0.0
      %2722 = vmatpush.msra.mxu0 0.0
      %2723 = vmatpush.msra.mxu0 0.0
      %2724 = vmatpush.msra.mxu0 0.0
      %2725 = vmatpush.msra.mxu0 0.0
      %2726 = vmatpush.msra.mxu0 0.0
      %2727 = vmatpush.msra.mxu0 0.0
      %2728 = vmatpush.msra.mxu0 0.0
      %2729 = vmatpush.msra.mxu0 0.0
      %2730 = vmatpush.msra.mxu0 0.0
      %2731 = vmatpush.msra.mxu0 %v2711
      %2732 = vmatmul.f32.gmra.mxu0 %v2714
      %v2733 = vpop.f32.mrf.mxu0
      %v2734 = vadd.f32 0.0, %v2733
      %2735 = vdwg.mxu0
      %v2737 = vsel %vm412, %v2656, 0
      %v2740 = vsel %vm412, %v2682, 0
      %v2743 = vsel %vm412, %v2708, 0
      %v2746 = vsel %vm412, %v2734, 0
      %2748 = vmatpush.msra.mxu0 0.0
      %2749 = vmatpush.msra.mxu0 0.0
      %2750 = vmatpush.msra.mxu0 0.0
      %2751 = vmatpush.msra.mxu0 0.0
      %2752 = vmatpush.msra.mxu0 0.0
      %2753 = vmatpush.msra.mxu0 0.0
      %2754 = vmatpush.msra.mxu0 0.0
      %2755 = vmatpush.msra.mxu0 0.0
      %2756 = vmatpush.msra.mxu0 0.0
      %2757 = vmatpush.msra.mxu0 0.0
      %2758 = vmatpush.msra.mxu0 0.0
      %2759 = vmatpush.msra.mxu0 0.0
      %2760 = vmatpush.msra.mxu0 0.0
      %2761 = vmatpush.msra.mxu0 0.0
      %2762 = vmatpush.msra.mxu0 0.0
      %2763 = vmatpush.msra.mxu0 %v1812
      %2764 = vmatmul.f32.gmra.mxu0 %v2737
      %v2765 = vpop.f32.mrf.mxu0
      %v2766 = vadd.f32 0.0, %v2765
      %2767 = vmatmul.f32.gmra.mxu0 %v2740
      %v2768 = vpop.f32.mrf.mxu0
      %v2769 = vadd.f32 0.0, %v2768
      %2770 = vmatmul.f32.gmra.mxu0 %v2743
      %v2771 = vpop.f32.mrf.mxu0
      %v2772 = vadd.f32 0.0, %v2771
      %2773 = vmatmul.f32.gmra.mxu0 %v2746
      %v2774 = vpop.f32.mrf.mxu0
      %v2775 = vadd.f32 0.0, %v2774
      %2776 = vdwg.mxu0
      %v2777 = vadd.f32 %v2465, %v2766
      %v2778 = vadd.f32 %v2468, %v2769
      %v2779 = vadd.f32 %v2471, %v2772
      %v2780 = vadd.f32 %v2474, %v2775
      %2781 = vrot.lane.b32.xlu0 %v1867, 104
      %v2782 = vpop.permute.xlu0 %2781
      %2783 = vrot.lane.b32.xlu0 %v1867, 72
      %v2784 = vpop.permute.xlu0 %2783
      %v2785 = vsel %vm412, %v2782, 0
      %v2787 = vsel %vm412, %v2784, 0
      %2789 = vmatpush.xpose.msra.mxu0 0.0
      %2790 = vmatpush.xpose.msra.mxu0 0.0
      %2791 = vmatpush.xpose.msra.mxu0 0.0
      %2792 = vmatpush.xpose.msra.mxu0 0.0
      %2793 = vmatpush.xpose.msra.mxu0 0.0
      %2794 = vmatpush.xpose.msra.mxu0 0.0
      %2795 = vmatpush.xpose.msra.mxu0 0.0
      %2796 = vmatpush.xpose.msra.mxu0 0.0
      %2797 = vmatpush.xpose.msra.mxu0 0.0
      %2798 = vmatpush.xpose.msra.mxu0 0.0
      %2799 = vmatpush.xpose.msra.mxu0 0.0
      %2800 = vmatpush.xpose.msra.mxu0 0.0
      %2801 = vmatpush.xpose.msra.mxu0 0.0
      %2802 = vmatpush.xpose.msra.mxu0 0.0
      %2803 = vmatpush.xpose.msra.mxu0 0.0
      %2804 = vmatpush.xpose.msra.mxu0 %v2787
      %2805 = vmatmul.f32.gmra.mxu0 %v2785
      %v2806 = vpop.f32.mrf.mxu0
      %v2807 = vadd.f32 0.0, %v2806
      %2808 = vdwg.mxu0
      %2809 = vrot.lane.b32.xlu0 %v1870, 104
      %v2810 = vpop.permute.xlu0 %2809
      %2811 = vrot.lane.b32.xlu0 %v1870, 72
      %v2812 = vpop.permute.xlu0 %2811
      %v2813 = vsel %vm412, %v2810, 0
      %v2815 = vsel %vm412, %v2812, 0
      %2817 = vmatpush.xpose.msra.mxu0 0.0
      %2818 = vmatpush.xpose.msra.mxu0 0.0
      %2819 = vmatpush.xpose.msra.mxu0 0.0
      %2820 = vmatpush.xpose.msra.mxu0 0.0
      %2821 = vmatpush.xpose.msra.mxu0 0.0
      %2822 = vmatpush.xpose.msra.mxu0 0.0
      %2823 = vmatpush.xpose.msra.mxu0 0.0
      %2824 = vmatpush.xpose.msra.mxu0 0.0
      %2825 = vmatpush.xpose.msra.mxu0 0.0
      %2826 = vmatpush.xpose.msra.mxu0 0.0
      %2827 = vmatpush.xpose.msra.mxu0 0.0
      %2828 = vmatpush.xpose.msra.mxu0 0.0
      %2829 = vmatpush.xpose.msra.mxu0 0.0
      %2830 = vmatpush.xpose.msra.mxu0 0.0
      %2831 = vmatpush.xpose.msra.mxu0 0.0
      %2832 = vmatpush.xpose.msra.mxu0 %v2815
      %2833 = vmatmul.f32.gmra.mxu0 %v2813
      %v2834 = vpop.f32.mrf.mxu0
      %v2835 = vadd.f32 0.0, %v2834
      %2836 = vdwg.mxu0
      %2837 = vrot.lane.b32.xlu0 %v1873, 104
      %v2838 = vpop.permute.xlu0 %2837
      %2839 = vrot.lane.b32.xlu0 %v1873, 72
      %v2840 = vpop.permute.xlu0 %2839
      %v2841 = vsel %vm412, %v2838, 0
      %v2843 = vsel %vm412, %v2840, 0
      %2845 = vmatpush.xpose.msra.mxu0 0.0
      %2846 = vmatpush.xpose.msra.mxu0 0.0
      %2847 = vmatpush.xpose.msra.mxu0 0.0
      %2848 = vmatpush.xpose.msra.mxu0 0.0
      %2849 = vmatpush.xpose.msra.mxu0 0.0
      %2850 = vmatpush.xpose.msra.mxu0 0.0
      %2851 = vmatpush.xpose.msra.mxu0 0.0
      %2852 = vmatpush.xpose.msra.mxu0 0.0
      %2853 = vmatpush.xpose.msra.mxu0 0.0
      %2854 = vmatpush.xpose.msra.mxu0 0.0
      %2855 = vmatpush.xpose.msra.mxu0 0.0
      %2856 = vmatpush.xpose.msra.mxu0 0.0
      %2857 = vmatpush.xpose.msra.mxu0 0.0
      %2858 = vmatpush.xpose.msra.mxu0 0.0
      %2859 = vmatpush.xpose.msra.mxu0 0.0
      %2860 = vmatpush.xpose.msra.mxu0 %v2843
      %2861 = vmatmul.f32.gmra.mxu0 %v2841
      %v2862 = vpop.f32.mrf.mxu0
      %v2863 = vadd.f32 0.0, %v2862
      %2864 = vdwg.mxu0
      %2865 = vrot.lane.b32.xlu0 %v1876, 104
      %v2866 = vpop.permute.xlu0 %2865
      %2867 = vrot.lane.b32.xlu0 %v1876, 72
      %v2868 = vpop.permute.xlu0 %2867
      %v2869 = vsel %vm412, %v2866, 0
      %v2871 = vsel %vm412, %v2868, 0
      %2873 = vmatpush.xpose.msra.mxu0 0.0
      %2874 = vmatpush.xpose.msra.mxu0 0.0
      %2875 = vmatpush.xpose.msra.mxu0 0.0
      %2876 = vmatpush.xpose.msra.mxu0 0.0
      %2877 = vmatpush.xpose.msra.mxu0 0.0
      %2878 = vmatpush.xpose.msra.mxu0 0.0
      %2879 = vmatpush.xpose.msra.mxu0 0.0
      %2880 = vmatpush.xpose.msra.mxu0 0.0
      %2881 = vmatpush.xpose.msra.mxu0 0.0
      %2882 = vmatpush.xpose.msra.mxu0 0.0
      %2883 = vmatpush.xpose.msra.mxu0 0.0
      %2884 = vmatpush.xpose.msra.mxu0 0.0
      %2885 = vmatpush.xpose.msra.mxu0 0.0
      %2886 = vmatpush.xpose.msra.mxu0 0.0
      %2887 = vmatpush.xpose.msra.mxu0 0.0
      %2888 = vmatpush.xpose.msra.mxu0 %v2871
      %2889 = vmatmul.f32.gmra.mxu0 %v2869
      %v2890 = vpop.f32.mrf.mxu0
      %v2891 = vadd.f32 0.0, %v2890
      %2892 = vdwg.mxu0
      %v2893 = vsel %vm412, %v2807, -inf
      %2894 = vmax.xlane.f32.xlu0 %v2893
      %v2895 = vpop.xlane.xlu0 %2894
      %v2896 = vsel %vm412, %v2835, -inf
      %2897 = vmax.xlane.f32.xlu0 %v2896
      %v2898 = vpop.xlane.xlu0 %2897
      %v2899 = vsel %vm412, %v2863, -inf
      %2900 = vmax.xlane.f32.xlu0 %v2899
      %v2901 = vpop.xlane.xlu0 %2900
      %v2902 = vsel %vm412, %v2891, -inf
      %2903 = vmax.xlane.f32.xlu0 %v2902
      %v2904 = vpop.xlane.xlu0 %2903
      %v2905 = vsub.f32 %v2807, %v2895
      %v2906 = vsub.f32 %v2835, %v2898
      %v2907 = vsub.f32 %v2863, %v2901
      %v2908 = vsub.f32 %v2891, %v2904
      %v2909 = vmul.f32 %v2905, 1.442695
      %v2910 = vpow.pop %v2909
      %v2911 = vmul.f32 %v2906, 1.442695
      %v2912 = vpow.pop %v2911
      %v2913 = vmul.f32 %v2907, 1.442695
      %v2914 = vpow.pop %v2913
      %v2915 = vmul.f32 %v2908, 1.442695
      %v2916 = vpow.pop %v2915
      %v2917 = vsel %vm412, %v2910, 0.0
      %2918 = vadd.xlane.f32.xlu0 %v2917
      %v2919 = vpop.xlane.xlu0 %2918
      %v2920 = vsel %vm412, %v2912, 0.0
      %2921 = vadd.xlane.f32.xlu0 %v2920
      %v2922 = vpop.xlane.xlu0 %2921
      %v2923 = vsel %vm412, %v2914, 0.0
      %2924 = vadd.xlane.f32.xlu0 %v2923
      %v2925 = vpop.xlane.xlu0 %2924
      %v2926 = vsel %vm412, %v2916, 0.0
      %2927 = vadd.xlane.f32.xlu0 %v2926
      %v2928 = vpop.xlane.xlu0 %2927
      %v2929 = vrcp.pop %v2919
      %v2930 = vrcp.pop %v2922
      %v2931 = vrcp.pop %v2925
      %v2932 = vrcp.pop %v2928
      %v2933 = vmul.f32 %v2910, %v2929
      %v2934 = vmul.f32 %v2912, %v2930
      %v2935 = vmul.f32 %v2914, %v2931
      %v2936 = vmul.f32 %v2916, %v2932
      %2937 = vrot.lane.b32.xlu0 %v1867, 40
      %v2938 = vpop.permute.xlu0 %2937
      %v2941 = vsel %vm412, %v2933, 0
      %2943 = vmatpush.msra.mxu0 0.0
      %2944 = vmatpush.msra.mxu0 0.0
      %2945 = vmatpush.msra.mxu0 0.0
      %2946 = vmatpush.msra.mxu0 0.0
      %2947 = vmatpush.msra.mxu0 0.0
      %2948 = vmatpush.msra.mxu0 0.0
      %2949 = vmatpush.msra.mxu0 0.0
      %2950 = vmatpush.msra.mxu0 0.0
      %2951 = vmatpush.msra.mxu0 0.0
      %2952 = vmatpush.msra.mxu0 0.0
      %2953 = vmatpush.msra.mxu0 0.0
      %2954 = vmatpush.msra.mxu0 0.0
      %2955 = vmatpush.msra.mxu0 0.0
      %2956 = vmatpush.msra.mxu0 0.0
      %2957 = vmatpush.msra.mxu0 0.0
      %2958 = vmatpush.msra.mxu0 %v2938
      %2959 = vmatmul.f32.gmra.mxu0 %v2941
      %v2960 = vpop.f32.mrf.mxu0
      %v2961 = vadd.f32 0.0, %v2960
      %2962 = vdwg.mxu0
      %2963 = vrot.lane.b32.xlu0 %v1870, 40
      %v2964 = vpop.permute.xlu0 %2963
      %v2967 = vsel %vm412, %v2934, 0
      %2969 = vmatpush.msra.mxu0 0.0
      %2970 = vmatpush.msra.mxu0 0.0
      %2971 = vmatpush.msra.mxu0 0.0
      %2972 = vmatpush.msra.mxu0 0.0
      %2973 = vmatpush.msra.mxu0 0.0
      %2974 = vmatpush.msra.mxu0 0.0
      %2975 = vmatpush.msra.mxu0 0.0
      %2976 = vmatpush.msra.mxu0 0.0
      %2977 = vmatpush.msra.mxu0 0.0
      %2978 = vmatpush.msra.mxu0 0.0
      %2979 = vmatpush.msra.mxu0 0.0
      %2980 = vmatpush.msra.mxu0 0.0
      %2981 = vmatpush.msra.mxu0 0.0
      %2982 = vmatpush.msra.mxu0 0.0
      %2983 = vmatpush.msra.mxu0 0.0
      %2984 = vmatpush.msra.mxu0 %v2964
      %2985 = vmatmul.f32.gmra.mxu0 %v2967
      %v2986 = vpop.f32.mrf.mxu0
      %v2987 = vadd.f32 0.0, %v2986
      %2988 = vdwg.mxu0
      %2989 = vrot.lane.b32.xlu0 %v1873, 40
      %v2990 = vpop.permute.xlu0 %2989
      %v2993 = vsel %vm412, %v2935, 0
      %2995 = vmatpush.msra.mxu0 0.0
      %2996 = vmatpush.msra.mxu0 0.0
      %2997 = vmatpush.msra.mxu0 0.0
      %2998 = vmatpush.msra.mxu0 0.0
      %2999 = vmatpush.msra.mxu0 0.0
      %3000 = vmatpush.msra.mxu0 0.0
      %3001 = vmatpush.msra.mxu0 0.0
      %3002 = vmatpush.msra.mxu0 0.0
      %3003 = vmatpush.msra.mxu0 0.0
      %3004 = vmatpush.msra.mxu0 0.0
      %3005 = vmatpush.msra.mxu0 0.0
      %3006 = vmatpush.msra.mxu0 0.0
      %3007 = vmatpush.msra.mxu0 0.0
      %3008 = vmatpush.msra.mxu0 0.0
      %3009 = vmatpush.msra.mxu0 0.0
      %3010 = vmatpush.msra.mxu0 %v2990
      %3011 = vmatmul.f32.gmra.mxu0 %v2993
      %v3012 = vpop.f32.mrf.mxu0
      %v3013 = vadd.f32 0.0, %v3012
      %3014 = vdwg.mxu0
      %3015 = vrot.lane.b32.xlu0 %v1876, 40
      %v3016 = vpop.permute.xlu0 %3015
      %v3019 = vsel %vm412, %v2936, 0
      %3021 = vmatpush.msra.mxu0 0.0
      %3022 = vmatpush.msra.mxu0 0.0
      %3023 = vmatpush.msra.mxu0 0.0
      %3024 = vmatpush.msra.mxu0 0.0
      %3025 = vmatpush.msra.mxu0 0.0
      %3026 = vmatpush.msra.mxu0 0.0
      %3027 = vmatpush.msra.mxu0 0.0
      %3028 = vmatpush.msra.mxu0 0.0
      %3029 = vmatpush.msra.mxu0 0.0
      %3030 = vmatpush.msra.mxu0 0.0
      %3031 = vmatpush.msra.mxu0 0.0
      %3032 = vmatpush.msra.mxu0 0.0
      %3033 = vmatpush.msra.mxu0 0.0
      %3034 = vmatpush.msra.mxu0 0.0
      %3035 = vmatpush.msra.mxu0 0.0
      %3036 = vmatpush.msra.mxu0 %v3016
      %3037 = vmatmul.f32.gmra.mxu0 %v3019
      %v3038 = vpop.f32.mrf.mxu0
      %v3039 = vadd.f32 0.0, %v3038
      %3040 = vdwg.mxu0
      %v3042 = vsel %vm412, %v2961, 0
      %v3045 = vsel %vm412, %v2987, 0
      %v3048 = vsel %vm412, %v3013, 0
      %v3051 = vsel %vm412, %v3039, 0
      %3053 = vmatpush.msra.mxu0 0.0
      %3054 = vmatpush.msra.mxu0 0.0
      %3055 = vmatpush.msra.mxu0 0.0
      %3056 = vmatpush.msra.mxu0 0.0
      %3057 = vmatpush.msra.mxu0 0.0
      %3058 = vmatpush.msra.mxu0 0.0
      %3059 = vmatpush.msra.mxu0 0.0
      %3060 = vmatpush.msra.mxu0 0.0
      %3061 = vmatpush.msra.mxu0 0.0
      %3062 = vmatpush.msra.mxu0 0.0
      %3063 = vmatpush.msra.mxu0 0.0
      %3064 = vmatpush.msra.mxu0 0.0
      %3065 = vmatpush.msra.mxu0 0.0
      %3066 = vmatpush.msra.mxu0 0.0
      %3067 = vmatpush.msra.mxu0 0.0
      %3068 = vmatpush.msra.mxu0 %v1813
      %3069 = vmatmul.f32.gmra.mxu0 %v3042
      %v3070 = vpop.f32.mrf.mxu0
      %v3071 = vadd.f32 0.0, %v3070
      %3072 = vmatmul.f32.gmra.mxu0 %v3045
      %v3073 = vpop.f32.mrf.mxu0
      %v3074 = vadd.f32 0.0, %v3073
      %3075 = vmatmul.f32.gmra.mxu0 %v3048
      %v3076 = vpop.f32.mrf.mxu0
      %v3077 = vadd.f32 0.0, %v3076
      %3078 = vmatmul.f32.gmra.mxu0 %v3051
      %v3079 = vpop.f32.mrf.mxu0
      %v3080 = vadd.f32 0.0, %v3079
      %3081 = vdwg.mxu0
      %v3082 = vadd.f32 %v2777, %v3071
      %v3083 = vadd.f32 %v2778, %v3074
      %v3084 = vadd.f32 %v2779, %v3077
      %v3085 = vadd.f32 %v2780, %v3080
      %v3086 = vadd.f32 %v1798, %v3082
      %v3087 = vadd.f32 %v1799, %v3083
      %v3088 = vadd.f32 %v1800, %v3084
      %v3089 = vadd.f32 %v1801, %v3085
      %v3091 = vperm.slane %v1815, 0
      %v3093 = vadd.f32 %v3086, %v3091
      %v3094 = vadd.f32 %v3087, %v3091
      %v3095 = vadd.f32 %v3088, %v3091
      %v3096 = vadd.f32 %v3089, %v3091
      %v3098 = vperm.slane %v1822, 0
      %v3101 = vsel %vm367, %v3093, 0
      %v3104 = vsel %vm367, %v3094, 0
      %v3107 = vsel %vm367, %v3095, 0
      %v3110 = vsel %vm367, %v3096, 0
      %3112 = vmatpush.msra.mxu0 0.0
      %3113 = vmatpush.msra.mxu0 0.0
      %3114 = vmatpush.msra.mxu0 0.0
      %3115 = vmatpush.msra.mxu0 0.0
      %3116 = vmatpush.msra.mxu0 0.0
      %3117 = vmatpush.msra.mxu0 0.0
      %3118 = vmatpush.msra.mxu0 0.0
      %3119 = vmatpush.msra.mxu0 0.0
      %3120 = vmatpush.msra.mxu0 0.0
      %3121 = vmatpush.msra.mxu0 0.0
      %3122 = vmatpush.msra.mxu0 0.0
      %3123 = vmatpush.msra.mxu0 0.0
      %3124 = vmatpush.msra.mxu0 %v1820
      %3125 = vmatpush.msra.mxu0 %v1819
      %3126 = vmatpush.msra.mxu0 %v1818
      %3127 = vmatpush.msra.mxu0 %v1817
      %3128 = vmatmul.f32.gmra.mxu0 %v3101
      %v3129 = vpop.f32.mrf.mxu0
      %v3130 = vadd.f32 %v3098, %v3129
      %3131 = vmatmul.f32.gmra.mxu0 %v3104
      %v3132 = vpop.f32.mrf.mxu0
      %v3133 = vadd.f32 %v3098, %v3132
      %3134 = vmatmul.f32.gmra.mxu0 %v3107
      %v3135 = vpop.f32.mrf.mxu0
      %v3136 = vadd.f32 %v3098, %v3135
      %3137 = vmatmul.f32.gmra.mxu0 %v3110
      %v3138 = vpop.f32.mrf.mxu0
      %v3139 = vadd.f32 %v3098, %v3138
      %3140 = vdwg.mxu0
      %v3141 = vxor.u32 %v3130, 2147483648
      %v3142 = vxor.u32 %v3133, 2147483648
      %v3143 = vxor.u32 %v3136, 2147483648
      %v3144 = vxor.u32 %v3139, 2147483648
      %v3145 = vmul.f32 %v3141, 1.442695
      %v3146 = vpow.pop %v3145
      %v3147 = vmul.f32 %v3142, 1.442695
      %v3148 = vpow.pop %v3147
      %v3149 = vmul.f32 %v3143, 1.442695
      %v3150 = vpow.pop %v3149
      %v3151 = vmul.f32 %v3144, 1.442695
      %v3152 = vpow.pop %v3151
      %v3153 = vadd.f32 %v3146, 1.0
      %v3154 = vadd.f32 %v3148, 1.0
      %v3155 = vadd.f32 %v3150, 1.0
      %v3156 = vadd.f32 %v3152, 1.0
      %v3157 = vrcp.pop %v3153
      %v3158 = vmul.f32 %v3153, %v3157
      %v3159 = vsub.f32 1.0, %v3158
      %v3160 = vmul.f32 %v3157, %v3159
      %v3161 = vadd.f32 %v3157, %v3160
      %vm3162 = vweird.f32 %v3153
      %vm3163 = vweird.f32 %v3157
      %vm3164 = vmor %vm3162, %vm3163
      %v3165 = vsel %vm3164, %v3157, %v3161
      %v3166 = vand.u32 2147483647, %v3153
      %vm3167 = vcmp.eq.f32.partialorder %v3166, 8.507059e+37
      %v3168 = vand.u32 %v3153, 2147483648
      %v3169 = vor.u32 1.1754944e-38, %v3168
      %v3170 = vsel %vm3167, %v3169, %v3165
      %v3171 = vmul.f32 1.0, %v3170
      %v3172 = vrcp.pop %v3154
      %v3173 = vmul.f32 %v3154, %v3172
      %v3174 = vsub.f32 1.0, %v3173
      %v3175 = vmul.f32 %v3172, %v3174
      %v3176 = vadd.f32 %v3172, %v3175
      %vm3177 = vweird.f32 %v3154
      %vm3178 = vweird.f32 %v3172
      %vm3179 = vmor %vm3177, %vm3178
      %v3180 = vsel %vm3179, %v3172, %v3176
      %v3181 = vand.u32 2147483647, %v3154
      %vm3182 = vcmp.eq.f32.partialorder %v3181, 8.507059e+37
      %v3183 = vand.u32 %v3154, 2147483648
      %v3184 = vor.u32 1.1754944e-38, %v3183
      %v3185 = vsel %vm3182, %v3184, %v3180
      %v3186 = vmul.f32 1.0, %v3185
      %v3187 = vrcp.pop %v3155
      %v3188 = vmul.f32 %v3155, %v3187
      %v3189 = vsub.f32 1.0, %v3188
      %v3190 = vmul.f32 %v3187, %v3189
      %v3191 = vadd.f32 %v3187, %v3190
      %vm3192 = vweird.f32 %v3155
      %vm3193 = vweird.f32 %v3187
      %vm3194 = vmor %vm3192, %vm3193
      %v3195 = vsel %vm3194, %v3187, %v3191
      %v3196 = vand.u32 2147483647, %v3155
      %vm3197 = vcmp.eq.f32.partialorder %v3196, 8.507059e+37
      %v3198 = vand.u32 %v3155, 2147483648
      %v3199 = vor.u32 1.1754944e-38, %v3198
      %v3200 = vsel %vm3197, %v3199, %v3195
      %v3201 = vmul.f32 1.0, %v3200
      %v3202 = vrcp.pop %v3156
      %v3203 = vmul.f32 %v3156, %v3202
      %v3204 = vsub.f32 1.0, %v3203
      %v3205 = vmul.f32 %v3202, %v3204
      %v3206 = vadd.f32 %v3202, %v3205
      %vm3207 = vweird.f32 %v3156
      %vm3208 = vweird.f32 %v3202
      %vm3209 = vmor %vm3207, %vm3208
      %v3210 = vsel %vm3209, %v3202, %v3206
      %v3211 = vand.u32 2147483647, %v3156
      %vm3212 = vcmp.eq.f32.partialorder %v3211, 8.507059e+37
      %v3213 = vand.u32 %v3156, 2147483648
      %v3214 = vor.u32 1.1754944e-38, %v3213
      %v3215 = vsel %vm3212, %v3214, %v3210
      %v3216 = vmul.f32 1.0, %v3215
      %v3217 = vmul.f32 %v3130, %v3171
      %v3218 = vmul.f32 %v3133, %v3186
      %v3219 = vmul.f32 %v3136, %v3201
      %v3220 = vmul.f32 %v3139, %v3216
      %v3222 = vperm.slane %v1833, 0
      %v3225 = vsel %vm1756, %v3217, 0
      %v3228 = vsel %vm1756, %v3218, 0
      %v3231 = vsel %vm1756, %v3219, 0
      %v3234 = vsel %vm1756, %v3220, 0
      %3236 = vmatpush.msra.mxu0 0.0
      %3237 = vmatpush.msra.mxu0 0.0
      %3238 = vmatpush.msra.mxu0 0.0
      %3239 = vmatpush.msra.mxu0 0.0
      %3240 = vmatpush.msra.mxu0 0.0
      %3241 = vmatpush.msra.mxu0 0.0
      %3242 = vmatpush.msra.mxu0 0.0
      %3243 = vmatpush.msra.mxu0 0.0
      %3244 = vmatpush.msra.mxu0 %v1831
      %3245 = vmatpush.msra.mxu0 %v1830
      %3246 = vmatpush.msra.mxu0 %v1829
      %3247 = vmatpush.msra.mxu0 %v1828
      %3248 = vmatpush.msra.mxu0 %v1827
      %3249 = vmatpush.msra.mxu0 %v1826
      %3250 = vmatpush.msra.mxu0 %v1825
      %3251 = vmatpush.msra.mxu0 %v1824
      %3252 = vmatmul.f32.gmra.mxu0 %v3225
      %v3253 = vpop.f32.mrf.mxu0
      %v3254 = vadd.f32 %v3222, %v3253
      %3255 = vmatmul.f32.gmra.mxu0 %v3228
      %v3256 = vpop.f32.mrf.mxu0
      %v3257 = vadd.f32 %v3222, %v3256
      %3258 = vmatmul.f32.gmra.mxu0 %v3231
      %v3259 = vpop.f32.mrf.mxu0
      %v3260 = vadd.f32 %v3222, %v3259
      %3261 = vmatmul.f32.gmra.mxu0 %v3234
      %v3262 = vpop.f32.mrf.mxu0
      %v3263 = vadd.f32 %v3222, %v3262
      %3264 = vdwg.mxu0
      %v3265 = vadd.f32 %v3093, %v3254
      %v3266 = vadd.f32 %v3094, %v3257
      %v3267 = vadd.f32 %v3095, %v3260
      %v3268 = vadd.f32 %v3096, %v3263
      %3269 = vst.msk [vmem:[%s334] sm:$0xff] %vm367, %v3265
      %3270 = vst.msk [vmem:[%s334 + $0x8] sm:$0xff] %vm367, %v3266
      %3271 = vst.msk [vmem:[%s334 + $0x10] sm:$0xff] %vm367, %v3267
      %3272 = vst.msk [vmem:[%s334 + $0x18] sm:$0xff] %vm367, %v3268
      %s3273 = smul.u32 4, %s20
      %p3274 = scmp.lt.s32.totalorder %s3273, 7
      %s3275 = scalar_select %p3274, %s3273, 7
      %s3276 = smul.addr %s3275, 8
      %s3277 = scalar_lea.vmem %s9, %s3276
      // Predicated region
      $region57: #{tpu_custom_call.1} parent=55 // pred_check
        %p3278 = pneg %p232
      $region58: #{tpu_custom_call.1} parent=55 // pred_check_branch
        %3280 = sbr.rel (%p3278) target = $region60
      $region59: #{tpu_custom_call.1} parent=55 // pred_region
        %s3281 = smul.u32 4, %s20
      $region60: #{tpu_custom_call.1} parent=55 // pred_fallthru
        _
    $region56: #{tpu_custom_call.1} parent=5 // pred_fallthru
      _
    %p3282 = scmp.le.s32.totalorder 2, %s15
    // Predicated region
    $region61: #{tpu_custom_call.1} parent=5 // pred_check
      %p3283 = pneg %p3282
    $region62: #{tpu_custom_call.1} parent=5 // pred_check_branch
      %3285 = sbr.rel (%p3283) target = $region64
    $region63: #{tpu_custom_call.1} parent=5 // pred_region
      %s3286 = ssub.s32 %s15, 2
      // Predicated region
      $region65: #{tpu_custom_call.1} parent=63 // pred_check
        %p3287 = pneg %p238
      $region66: #{tpu_custom_call.1} parent=63 // pred_check_branch
        %3289 = sbr.rel (%p3287) target = $region68
      $region67: #{tpu_custom_call.1} parent=63 // pred_region
        %s3290 = smul.u32 4, %s21
        %p3291 = scmp.lt.s32.totalorder %s3290, 7
        %s3292 = scalar_select %p3291, %s3290, 7
        %s3293 = smul.addr %s3292, 8
        %s3294 = scalar_lea.vmem %s9, %s3293
      $region68: #{tpu_custom_call.1} parent=63 // pred_fallthru
        _
    $region64: #{tpu_custom_call.1} parent=5 // pred_fallthru
      _
  $region6: #{tpu_custom_call.1} parent=0 // loop_footer
    %s19 = sadd.s32 1, %s15
  $region7: #{tpu_custom_call.1} parent=0 // loop_footer_branch
    %14 = sbr.rel target = $region3
  $region8: #{tpu_custom_call.1} parent=0 // loop_exit
    _

</llo_original>
